<compile_context>
chip_gen: v6e
topology: v6e:2x2x1
jax: 0.10.0
libtpu: 0.0.40
codegen_flags: <defaults>
</compile_context>

<pallas_src>
import numpy as np
import jax
import jax.numpy as jnp
from jax import lax
from jax.experimental import pallas as pl
from jax.experimental.pallas import tpu as pltpu

NUM_SENTENCE_DOC = 50
EPS = 1e-5


def _round_up(x, m):
    return ((x + m - 1) // m) * m


# ----------------------------- fused Pallas kernel -------------------------- #

def _disc_kernel(xp_ref, scale_ref, shift_ref, w1_ref, b1_ref, w2_ref, b2_ref,
                 l1a_ref, l1b_ref, lb1_ref, l2_ref, lb2_ref, w3_ref, lb3_ref,
                 sp_ref, o_ref):
    f32 = jnp.float32

    # --- BatchNorm2d(1): apply precomputed batch stats (scale/shift include the
    #     zero-padding mask so conv padding stays exactly zero). ---
    xn = xp_ref[...] * scale_ref[...] + shift_ref[...]            # (10, 56, B)
    b = xn.shape[-1]

    # --- Conv1(1->8, k=(3,2), pad 1) + ReLU + MaxPool((2,1), stride (2,2)) ---
    # xn rows are padded image rows; sublanes index (t, j) with padded col = 8*j + t.
    # One (224,168)@(168,B) matmul per (pool-row r, pooled row ho) produces all
    # 8 channels x 4 column-groups x 7 columns at once, rows ordered (m, ci, j).
    w1 = w1_ref[...]                                              # (224, 168)
    b1 = b1_ref[...]                                              # (224, 1)
    p1 = []                                                       # per ho: (224, B)
    for ho in range(4):
        y = None
        for r in range(2):                                        # 2 rows of each pool window
            h0 = 2 * ho + r
            rhs = jnp.concatenate([xn[h0], xn[h0 + 1], xn[h0 + 2]], axis=0)   # (168, B)
            yr = jnp.dot(w1, rhs, preferred_element_type=f32)                 # (224, B)
            y = yr if y is None else jnp.maximum(y, yr)
        p1.append(jnp.maximum(y + b1, 0.0))

    # --- Conv2(8->4, k=(3,2), stride 2, pad 1) + ReLU + MaxPool(2,2) ---
    # One (28,336)@(336,B) matmul per 2x2-pool quadrant (dh,dw); output rows are
    # already in PyTorch NCHW flatten order (c2*7 + ow).
    w2 = w2_ref[...]                                              # (2, 28, 336)
    b2 = b2_ref[...]                                              # (28, 1)
    zeros56 = jnp.zeros((56, b), f32)
    m_of_s = (3, 0, 1, 2)                                         # pooled1 column group per parity s
    acc = None
    for dh in range(2):
        for dw in range(2):
            blocks = []
            for kh in range(3):
                hp = 2 * dh + kh                                  # padded pooled1 row index
                for kw in range(2):
                    if hp == 0:                                   # top zero-pad row
                        blocks.append(zeros56)
                    else:
                        m = m_of_s[2 * dw + kw]
                        blocks.append(p1[hp - 1][m * 56:(m + 1) * 56, :])
            rhs2 = jnp.concatenate(blocks, axis=0)                # (336, B)
            yq = jnp.dot(w2[dw], rhs2, preferred_element_type=f32)  # (28, B)
            acc = yq if acc is None else jnp.maximum(acc, yq)
    pooled2 = jnp.maximum(acc + b2, 0.0)                          # (28, B) == flattened cnn feats

    # --- MLP: Linear(78,15)+ReLU -> Linear(15,20)+ReLU -> Linear(20,1) -> Sigmoid ---
    # Linear(78,15) is split into its conv-feature (28) and sentence-prob (50) halves,
    # avoiding an unaligned sublane concatenation.
    h = (jnp.dot(l1a_ref[...], pooled2, preferred_element_type=f32)
         + jnp.dot(l1b_ref[...], sp_ref[...], preferred_element_type=f32)
         + lb1_ref[...])
    h = jnp.maximum(h, 0.0)                                       # (15, B)
    h = jnp.maximum(jnp.dot(l2_ref[...], h, preferred_element_type=f32) + lb2_ref[...], 0.0)  # (20, B)
    z = jnp.sum(h * w3_ref[...], axis=0, keepdims=True) + lb3_ref[...]                        # (1, B)
    o_ref[...] = jax.nn.sigmoid(z)


# -------------------- constant block matrices (trace-time) ------------------ #

def _conv1_block_matrix(w1, dtype):
    # w1: (8, 3, 2) [ci, kh, kw]
    # W1big[(m, ci, j), (kh, t, j')] = w1[ci, kh, t - 2m] * (j == j') for t-2m in {0,1}
    sel = np.zeros((4, 8, 2), np.float32)                 # [m, t, kw]
    for m in range(4):
        for kw in range(2):
            sel[m, 2 * m + kw, kw] = 1.0
    eye7 = jnp.eye(7, dtype=dtype)
    big = jnp.einsum("mtw,chw,jJ->mcjhtJ", jnp.asarray(sel, dtype), w1, eye7)
    return big.reshape(224, 168)


def _conv2_block_matrices(w2, dtype):
    # w2: (4, 8, 3, 2) [c2, ci, kh, kw]
    # W2blk[dw][(c2, ow), (kh, kw, ci, j)] = w2[c2, ci, kh, kw] * D[dw, kw, ow, j]
    D = np.zeros((2, 2, 7, 7), np.float32)                # [dw, kw, ow, j]
    for dw in range(2):
        for kw in range(2):
            for ow in range(7):
                c = 4 * ow + 2 * dw + kw                  # padded pooled1 column in [0, 28)
                if 1 <= c <= 26:                          # real (non-pad) column
                    D[dw, kw, ow, (c - 1) // 4] = 1.0
    blk = jnp.einsum("achw,dwoj->daohwcj", w2, jnp.asarray(D, dtype))
    return blk.reshape(2, 28, 336)


# ------------------------------ forward pass -------------------------------- #

def discriminator_forward(params, x, sentence_prob, tile_n=256):
    f32 = jnp.float32
    N, C, H, W = x.shape                                  # (N, 1, 8, 50)
    assert C == 1 and H == 8 and W == NUM_SENTENCE_DOC
    x3 = x.reshape(N, H, W).astype(f32)

    # BatchNorm2d(1) training-mode batch stats, one pass (sum & sum of squares).
    cnt = float(N * H * W)
    s1 = jnp.sum(x3)
    s2 = jnp.sum(x3 * x3)
    mean = s1 / cnt
    var = s2 / cnt - mean * mean                          # biased variance
    inv = lax.rsqrt(var + EPS)

    # Rearrange input for the kernel: pad spatial (8,50)->(10,56), split cols as
    # (j=7, t=8) with padded col = 8*j + t, put batch on the lane dimension:
    #   xp[hrow, t*7 + j, n] = xpad[n, hrow, 8*j + t]
    xpad = jnp.pad(x3, ((0, 0), (1, 1), (1, 5)))          # (N, 10, 56)
    xp = jnp.transpose(xpad.reshape(N, 10, 7, 8), (1, 3, 2, 0)).reshape(10, 56, N)

    # Fold the batch-norm normalize into per-position scale/shift; the interior
    # mask keeps the conv zero padding exactly zero after the in-kernel apply.
    hr = np.arange(10)
    c1 = 8 * np.arange(7)[None, :] + np.arange(8)[:, None]        # (t, j) -> padded col
    inside = ((hr[:, None, None] >= 1) & (hr[:, None, None] <= 8)
              & (c1[None] >= 1) & (c1[None] <= 50)).reshape(10, 56, 1)
    mask = jnp.asarray(inside, f32)
    scale = inv * mask
    shift = (-mean * inv) * mask

    # Constant block matrices that turn conv1/conv2 (+ pooling layout) into 2-D matmuls.
    w1big = _conv1_block_matrix(params["w1"].reshape(8, 3, 2).astype(f32), f32)   # (224, 168)
    b1v = jnp.broadcast_to(params["b1"].astype(f32).reshape(1, 8, 1), (4, 8, 7)).reshape(224, 1)
    w2blk = _conv2_block_matrices(params["w2"].astype(f32), f32)                  # (2, 28, 336)
    b2v = jnp.broadcast_to(params["b2"].astype(f32).reshape(4, 1), (4, 7)).reshape(28, 1)

    l1 = params["lw1"].astype(f32)
    l1a, l1b = l1[:, :28], l1[:, 28:]
    lb1 = params["lb1"].astype(f32).reshape(15, 1)
    l2 = params["lw2"].astype(f32)
    lb2 = params["lb2"].astype(f32).reshape(20, 1)
    w3 = params["lw3"].astype(f32).reshape(20, 1)
    lb3 = params["lb3"].astype(f32).reshape(1, 1)

    spT = sentence_prob.astype(f32).T                     # (50, N)

    # Batch tiling: batch on the lane dim, lane-dense tiles, pipelined + parallel grid.
    tile_n = max(128, min(int(tile_n), _round_up(N, 128)))
    Np = _round_up(N, tile_n)
    xp = jnp.pad(xp, ((0, 0), (0, 0), (0, Np - N)))
    spT = jnp.pad(spT, ((0, 0), (0, Np - N)))
    grid = (Np // tile_n,)

    def _const_spec(shape):
        nd = len(shape)
        return pl.BlockSpec(shape, lambda i, nd=nd: (0,) * nd)

    in_specs = [
        pl.BlockSpec((10, 56, tile_n), lambda i: (0, 0, i)),   # xp (streamed per tile)
        _const_spec((10, 56, 1)),                              # scale
        _const_spec((10, 56, 1)),                              # shift
        _const_spec((224, 168)),                               # w1big
        _const_spec((224, 1)),                                 # b1v
        _const_spec((2, 28, 336)),                             # w2blk
        _const_spec((28, 1)),                                  # b2v
        _const_spec((15, 28)),                                 # l1a
        _const_spec((15, 50)),                                 # l1b
        _const_spec((15, 1)),                                  # lb1
        _const_spec((20, 15)),                                 # l2
        _const_spec((20, 1)),                                  # lb2
        _const_spec((20, 1)),                                  # w3
        _const_spec((1, 1)),                                   # lb3
        pl.BlockSpec((50, tile_n), lambda i: (0, i)),          # sentence_prob (streamed)
    ]

    out = pl.pallas_call(
        _disc_kernel,
        grid=grid,
        in_specs=in_specs,
        out_specs=pl.BlockSpec((1, tile_n), lambda i: (0, i)),
        out_shape=jax.ShapeDtypeStruct((1, Np), f32),
        compiler_params=pltpu.CompilerParams(dimension_semantics=("parallel",)),
    )(xp, scale, shift, w1big, b1v, w2blk, b2v,
      l1a, l1b, lb1, l2, lb2, w3, lb3, spT)

    return out[0, :N].reshape(N, 1)


# -------------------------- pure-JAX reference ------------------------------ #

def reference_forward(params, x, sentence_prob):
    mean = jnp.mean(x)
    var = jnp.mean((x - mean) ** 2)
    xn = (x - mean) / jnp.sqrt(var + EPS)
    y = lax.conv_general_dilated(xn, params["w1"], (1, 1), ((1, 1), (1, 1)),
                                 dimension_numbers=("NCHW", "OIHW", "NCHW"))
    y = jnp.maximum(y + params["b1"][None, :, None, None], 0.0)
    y = lax.reduce_window(y, -jnp.inf, lax.max, (1, 1, 2, 1), (1, 1, 2, 2), "VALID")
    y = lax.conv_general_dilated(y, params["w2"], (2, 2), ((1, 1), (1, 1)),
                                 dimension_numbers=("NCHW", "OIHW", "NCHW"))
    y = jnp.maximum(y + params["b2"][None, :, None, None], 0.0)
    y = lax.reduce_window(y, -jnp.inf, lax.max, (1, 1, 2, 2), (1, 1, 2, 2), "VALID")
    flat = y.reshape(y.shape[0], -1)
    feat = jnp.concatenate([flat, sentence_prob], axis=-1)
    h = jnp.maximum(feat @ params["lw1"].T + params["lb1"], 0.0)
    h = jnp.maximum(h @ params["lw2"].T + params["lb2"], 0.0)
    return jax.nn.sigmoid(h @ params["lw3"].T + params["lb3"])


# ------------------------------ parameters ---------------------------------- #

def init_params(key):
    ks = jax.random.split(key, 10)
    u = lambda k, shape, s: jax.random.uniform(k, shape, jnp.float32, -s, s)
    return {
        "w1": u(ks[0], (8, 1, 3, 2), 0.4), "b1": u(ks[1], (8,), 0.4),
        "w2": u(ks[2], (4, 8, 3, 2), 0.2), "b2": u(ks[3], (4,), 0.2),
        "lw1": u(ks[4], (15, 78), 0.1), "lb1": u(ks[5], (15,), 0.1),
        "lw2": u(ks[6], (20, 15), 0.2), "lb2": u(ks[7], (20,), 0.2),
        "lw3": u(ks[8], (1, 20), 0.2), "lb3": u(ks[9], (1,), 0.2),
    }


if __name__ == "__main__":
    key = jax.random.PRNGKey(0)
    kx, ks, kp = jax.random.split(key, 3)
    N = 2
    x = jax.random.normal(kx, (N, 1, 8, NUM_SENTENCE_DOC), jnp.float32)
    sentence_prob = jax.random.uniform(ks, (N, NUM_SENTENCE_DOC), jnp.float32)
    params = init_params(kp)

    out = jax.block_until_ready(discriminator_forward(params, x, sentence_prob))
    ref = jax.block_until_ready(reference_forward(params, x, sentence_prob))

    assert out.shape == (N, 1), out.shape
    assert jnp.allclose(out, ref, atol=3e-3, rtol=3e-3), (out, ref)
    print("KERNEL_OK")
</pallas_src>

<mosaic_0001>
module attributes {stable_mosaic.version = 11 : i64} {
  func.func @_disc_kernel(%arg0: i32, %arg1: memref<10x56x128xf32, #tpu.memory_space<vmem>>, %arg2: memref<10x56x1xf32, #tpu.memory_space<vmem>>, %arg3: memref<10x56x1xf32, #tpu.memory_space<vmem>>, %arg4: memref<224x168xf32, #tpu.memory_space<vmem>>, %arg5: memref<224x1xf32, #tpu.memory_space<vmem>>, %arg6: memref<2x28x336xf32, #tpu.memory_space<vmem>>, %arg7: memref<28x1xf32, #tpu.memory_space<vmem>>, %arg8: memref<15x28xf32, #tpu.memory_space<vmem>>, %arg9: memref<15x50xf32, #tpu.memory_space<vmem>>, %arg10: memref<15x1xf32, #tpu.memory_space<vmem>>, %arg11: memref<20x15xf32, #tpu.memory_space<vmem>>, %arg12: memref<20x1xf32, #tpu.memory_space<vmem>>, %arg13: memref<20x1xf32, #tpu.memory_space<vmem>>, %arg14: memref<1x1xf32, #tpu.memory_space<vmem>>, %arg15: memref<50x128xf32, #tpu.memory_space<vmem>>, %arg16: memref<1x128xf32, #tpu.memory_space<vmem>>) attributes {dimension_semantics = [#tpu.dimension_semantics<parallel>], iteration_bounds = array<i64: 1>, scalar_prefetch = 0 : i64, scratch_operands = 0 : i64, tpu.core_type = #tpu.core_type<tc>, window_params = [{transform_indices = @transform_0, window_bounds = array<i64: 10, 56, 128>}, {pipeline_mode = #tpu.pipeline_mode<synchronous>, transform_indices = @transform_1, window_bounds = array<i64: 10, 56, 1>}, {pipeline_mode = #tpu.pipeline_mode<synchronous>, transform_indices = @transform_2, window_bounds = array<i64: 10, 56, 1>}, {pipeline_mode = #tpu.pipeline_mode<synchronous>, transform_indices = @transform_3, window_bounds = array<i64: 224, 168>}, {pipeline_mode = #tpu.pipeline_mode<synchronous>, transform_indices = @transform_4, window_bounds = array<i64: 224, 1>}, {pipeline_mode = #tpu.pipeline_mode<synchronous>, transform_indices = @transform_5, window_bounds = array<i64: 2, 28, 336>}, {pipeline_mode = #tpu.pipeline_mode<synchronous>, transform_indices = @transform_6, window_bounds = array<i64: 28, 1>}, {pipeline_mode = #tpu.pipeline_mode<synchronous>, transform_indices = @transform_7, window_bounds = array<i64: 15, 28>}, {pipeline_mode = #tpu.pipeline_mode<synchronous>, transform_indices = @transform_8, window_bounds = array<i64: 15, 50>}, {pipeline_mode = #tpu.pipeline_mode<synchronous>, transform_indices = @transform_9, window_bounds = array<i64: 15, 1>}, {pipeline_mode = #tpu.pipeline_mode<synchronous>, transform_indices = @transform_10, window_bounds = array<i64: 20, 15>}, {pipeline_mode = #tpu.pipeline_mode<synchronous>, transform_indices = @transform_11, window_bounds = array<i64: 20, 1>}, {pipeline_mode = #tpu.pipeline_mode<synchronous>, transform_indices = @transform_12, window_bounds = array<i64: 20, 1>}, {pipeline_mode = #tpu.pipeline_mode<synchronous>, transform_indices = @transform_13, window_bounds = array<i64: 1, 1>}, {transform_indices = @transform_14, window_bounds = array<i64: 50, 128>}, {transform_indices = @transform_15, window_bounds = array<i64: 1, 128>}]} {
    %c0 = arith.constant 0 : index
    %c0_0 = arith.constant 0 : index
    %c0_1 = arith.constant 0 : index
    %0 = vector.load %arg1[%c0, %c0_0, %c0_1] : memref<10x56x128xf32, #tpu.memory_space<vmem>>, vector<10x56x128xf32>
    %c0_2 = arith.constant 0 : index
    %c0_3 = arith.constant 0 : index
    %c0_4 = arith.constant 0 : index
    %1 = vector.load %arg2[%c0_2, %c0_3, %c0_4] : memref<10x56x1xf32, #tpu.memory_space<vmem>>, vector<10x56x1xf32>
    %2 = vector.broadcast %1 : vector<10x56x1xf32> to vector<10x56x128xf32>
    %3 = arith.mulf %0, %2 : vector<10x56x128xf32>
    %c0_5 = arith.constant 0 : index
    %c0_6 = arith.constant 0 : index
    %c0_7 = arith.constant 0 : index
    %4 = vector.load %arg3[%c0_5, %c0_6, %c0_7] : memref<10x56x1xf32, #tpu.memory_space<vmem>>, vector<10x56x1xf32>
    %5 = vector.broadcast %4 : vector<10x56x1xf32> to vector<10x56x128xf32>
    %6 = arith.addf %3, %5 : vector<10x56x128xf32>
    %c0_8 = arith.constant 0 : index
    %c0_9 = arith.constant 0 : index
    %7 = vector.load %arg4[%c0_8, %c0_9] : memref<224x168xf32, #tpu.memory_space<vmem>>, vector<224x168xf32>
    %c0_10 = arith.constant 0 : index
    %c0_11 = arith.constant 0 : index
    %8 = vector.load %arg5[%c0_10, %c0_11] : memref<224x1xf32, #tpu.memory_space<vmem>>, vector<224x1xf32>
    %9 = vector.extract_strided_slice %6 {offsets = [0, 0, 0], sizes = [1, 56, 128], strides = [1, 1, 1]} : vector<10x56x128xf32> to vector<1x56x128xf32>
    %10 = vector.shape_cast %9 : vector<1x56x128xf32> to vector<56x128xf32>
    %11 = vector.extract_strided_slice %6 {offsets = [1, 0, 0], sizes = [1, 56, 128], strides = [1, 1, 1]} : vector<10x56x128xf32> to vector<1x56x128xf32>
    %12 = vector.shape_cast %11 : vector<1x56x128xf32> to vector<56x128xf32>
    %13 = vector.extract_strided_slice %6 {offsets = [2, 0, 0], sizes = [1, 56, 128], strides = [1, 1, 1]} : vector<10x56x128xf32> to vector<1x56x128xf32>
    %14 = vector.shape_cast %13 : vector<1x56x128xf32> to vector<56x128xf32>
    %15 = tpu.concatenate %10, %12, %14 in 0 : vector<56x128xf32>, vector<56x128xf32>, vector<56x128xf32> -> vector<168x128xf32>
    %cst = arith.constant dense<0.000000e+00> : vector<224x128xf32>
    %16 = tpu.matmul %7, %15, %cst {dimension_numbers = #tpu.dot_dimension_numbers<[1], [0], [0], [1], [0, 0, 1, 1], [], []>} : vector<224x168xf32>, vector<168x128xf32>, vector<224x128xf32> -> vector<224x128xf32>
    %17 = vector.extract_strided_slice %6 {offsets = [1, 0, 0], sizes = [1, 56, 128], strides = [1, 1, 1]} : vector<10x56x128xf32> to vector<1x56x128xf32>
    %18 = vector.shape_cast %17 : vector<1x56x128xf32> to vector<56x128xf32>
    %19 = vector.extract_strided_slice %6 {offsets = [2, 0, 0], sizes = [1, 56, 128], strides = [1, 1, 1]} : vector<10x56x128xf32> to vector<1x56x128xf32>
    %20 = vector.shape_cast %19 : vector<1x56x128xf32> to vector<56x128xf32>
    %21 = vector.extract_strided_slice %6 {offsets = [3, 0, 0], sizes = [1, 56, 128], strides = [1, 1, 1]} : vector<10x56x128xf32> to vector<1x56x128xf32>
    %22 = vector.shape_cast %21 : vector<1x56x128xf32> to vector<56x128xf32>
    %23 = tpu.concatenate %18, %20, %22 in 0 : vector<56x128xf32>, vector<56x128xf32>, vector<56x128xf32> -> vector<168x128xf32>
    %cst_12 = arith.constant dense<0.000000e+00> : vector<224x128xf32>
    %24 = tpu.matmul %7, %23, %cst_12 {dimension_numbers = #tpu.dot_dimension_numbers<[1], [0], [0], [1], [0, 0, 1, 1], [], []>} : vector<224x168xf32>, vector<168x128xf32>, vector<224x128xf32> -> vector<224x128xf32>
    %25 = arith.maximumf %16, %24 : vector<224x128xf32>
    %26 = vector.broadcast %8 : vector<224x1xf32> to vector<224x128xf32>
    %27 = arith.addf %25, %26 : vector<224x128xf32>
    %cst_13 = arith.constant 0.000000e+00 : f32
    %28 = vector.broadcast %cst_13 : f32 to vector<224x128xf32>
    %29 = arith.maximumf %27, %28 : vector<224x128xf32>
    %30 = vector.extract_strided_slice %6 {offsets = [2, 0, 0], sizes = [1, 56, 128], strides = [1, 1, 1]} : vector<10x56x128xf32> to vector<1x56x128xf32>
    %31 = vector.shape_cast %30 : vector<1x56x128xf32> to vector<56x128xf32>
    %32 = vector.extract_strided_slice %6 {offsets = [3, 0, 0], sizes = [1, 56, 128], strides = [1, 1, 1]} : vector<10x56x128xf32> to vector<1x56x128xf32>
    %33 = vector.shape_cast %32 : vector<1x56x128xf32> to vector<56x128xf32>
    %34 = vector.extract_strided_slice %6 {offsets = [4, 0, 0], sizes = [1, 56, 128], strides = [1, 1, 1]} : vector<10x56x128xf32> to vector<1x56x128xf32>
    %35 = vector.shape_cast %34 : vector<1x56x128xf32> to vector<56x128xf32>
    %36 = tpu.concatenate %31, %33, %35 in 0 : vector<56x128xf32>, vector<56x128xf32>, vector<56x128xf32> -> vector<168x128xf32>
    %cst_14 = arith.constant dense<0.000000e+00> : vector<224x128xf32>
    %37 = tpu.matmul %7, %36, %cst_14 {dimension_numbers = #tpu.dot_dimension_numbers<[1], [0], [0], [1], [0, 0, 1, 1], [], []>} : vector<224x168xf32>, vector<168x128xf32>, vector<224x128xf32> -> vector<224x128xf32>
    %38 = vector.extract_strided_slice %6 {offsets = [3, 0, 0], sizes = [1, 56, 128], strides = [1, 1, 1]} : vector<10x56x128xf32> to vector<1x56x128xf32>
    %39 = vector.shape_cast %38 : vector<1x56x128xf32> to vector<56x128xf32>
    %40 = vector.extract_strided_slice %6 {offsets = [4, 0, 0], sizes = [1, 56, 128], strides = [1, 1, 1]} : vector<10x56x128xf32> to vector<1x56x128xf32>
    %41 = vector.shape_cast %40 : vector<1x56x128xf32> to vector<56x128xf32>
    %42 = vector.extract_strided_slice %6 {offsets = [5, 0, 0], sizes = [1, 56, 128], strides = [1, 1, 1]} : vector<10x56x128xf32> to vector<1x56x128xf32>
    %43 = vector.shape_cast %42 : vector<1x56x128xf32> to vector<56x128xf32>
    %44 = tpu.concatenate %39, %41, %43 in 0 : vector<56x128xf32>, vector<56x128xf32>, vector<56x128xf32> -> vector<168x128xf32>
    %cst_15 = arith.constant dense<0.000000e+00> : vector<224x128xf32>
    %45 = tpu.matmul %7, %44, %cst_15 {dimension_numbers = #tpu.dot_dimension_numbers<[1], [0], [0], [1], [0, 0, 1, 1], [], []>} : vector<224x168xf32>, vector<168x128xf32>, vector<224x128xf32> -> vector<224x128xf32>
    %46 = arith.maximumf %37, %45 : vector<224x128xf32>
    %47 = vector.broadcast %8 : vector<224x1xf32> to vector<224x128xf32>
    %48 = arith.addf %46, %47 : vector<224x128xf32>
    %cst_16 = arith.constant 0.000000e+00 : f32
    %49 = vector.broadcast %cst_16 : f32 to vector<224x128xf32>
    %50 = arith.maximumf %48, %49 : vector<224x128xf32>
    %51 = vector.extract_strided_slice %6 {offsets = [4, 0, 0], sizes = [1, 56, 128], strides = [1, 1, 1]} : vector<10x56x128xf32> to vector<1x56x128xf32>
    %52 = vector.shape_cast %51 : vector<1x56x128xf32> to vector<56x128xf32>
    %53 = vector.extract_strided_slice %6 {offsets = [5, 0, 0], sizes = [1, 56, 128], strides = [1, 1, 1]} : vector<10x56x128xf32> to vector<1x56x128xf32>
    %54 = vector.shape_cast %53 : vector<1x56x128xf32> to vector<56x128xf32>
    %55 = vector.extract_strided_slice %6 {offsets = [6, 0, 0], sizes = [1, 56, 128], strides = [1, 1, 1]} : vector<10x56x128xf32> to vector<1x56x128xf32>
    %56 = vector.shape_cast %55 : vector<1x56x128xf32> to vector<56x128xf32>
    %57 = tpu.concatenate %52, %54, %56 in 0 : vector<56x128xf32>, vector<56x128xf32>, vector<56x128xf32> -> vector<168x128xf32>
    %cst_17 = arith.constant dense<0.000000e+00> : vector<224x128xf32>
    %58 = tpu.matmul %7, %57, %cst_17 {dimension_numbers = #tpu.dot_dimension_numbers<[1], [0], [0], [1], [0, 0, 1, 1], [], []>} : vector<224x168xf32>, vector<168x128xf32>, vector<224x128xf32> -> vector<224x128xf32>
    %59 = vector.extract_strided_slice %6 {offsets = [5, 0, 0], sizes = [1, 56, 128], strides = [1, 1, 1]} : vector<10x56x128xf32> to vector<1x56x128xf32>
    %60 = vector.shape_cast %59 : vector<1x56x128xf32> to vector<56x128xf32>
    %61 = vector.extract_strided_slice %6 {offsets = [6, 0, 0], sizes = [1, 56, 128], strides = [1, 1, 1]} : vector<10x56x128xf32> to vector<1x56x128xf32>
    %62 = vector.shape_cast %61 : vector<1x56x128xf32> to vector<56x128xf32>
    %63 = vector.extract_strided_slice %6 {offsets = [7, 0, 0], sizes = [1, 56, 128], strides = [1, 1, 1]} : vector<10x56x128xf32> to vector<1x56x128xf32>
    %64 = vector.shape_cast %63 : vector<1x56x128xf32> to vector<56x128xf32>
    %65 = tpu.concatenate %60, %62, %64 in 0 : vector<56x128xf32>, vector<56x128xf32>, vector<56x128xf32> -> vector<168x128xf32>
    %cst_18 = arith.constant dense<0.000000e+00> : vector<224x128xf32>
    %66 = tpu.matmul %7, %65, %cst_18 {dimension_numbers = #tpu.dot_dimension_numbers<[1], [0], [0], [1], [0, 0, 1, 1], [], []>} : vector<224x168xf32>, vector<168x128xf32>, vector<224x128xf32> -> vector<224x128xf32>
    %67 = arith.maximumf %58, %66 : vector<224x128xf32>
    %68 = vector.broadcast %8 : vector<224x1xf32> to vector<224x128xf32>
    %69 = arith.addf %67, %68 : vector<224x128xf32>
    %cst_19 = arith.constant 0.000000e+00 : f32
    %70 = vector.broadcast %cst_19 : f32 to vector<224x128xf32>
    %71 = arith.maximumf %69, %70 : vector<224x128xf32>
    %72 = vector.extract_strided_slice %6 {offsets = [6, 0, 0], sizes = [1, 56, 128], strides = [1, 1, 1]} : vector<10x56x128xf32> to vector<1x56x128xf32>
    %73 = vector.shape_cast %72 : vector<1x56x128xf32> to vector<56x128xf32>
    %74 = vector.extract_strided_slice %6 {offsets = [7, 0, 0], sizes = [1, 56, 128], strides = [1, 1, 1]} : vector<10x56x128xf32> to vector<1x56x128xf32>
    %75 = vector.shape_cast %74 : vector<1x56x128xf32> to vector<56x128xf32>
    %76 = vector.extract_strided_slice %6 {offsets = [8, 0, 0], sizes = [1, 56, 128], strides = [1, 1, 1]} : vector<10x56x128xf32> to vector<1x56x128xf32>
    %77 = vector.shape_cast %76 : vector<1x56x128xf32> to vector<56x128xf32>
    %78 = tpu.concatenate %73, %75, %77 in 0 : vector<56x128xf32>, vector<56x128xf32>, vector<56x128xf32> -> vector<168x128xf32>
    %cst_20 = arith.constant dense<0.000000e+00> : vector<224x128xf32>
    %79 = tpu.matmul %7, %78, %cst_20 {dimension_numbers = #tpu.dot_dimension_numbers<[1], [0], [0], [1], [0, 0, 1, 1], [], []>} : vector<224x168xf32>, vector<168x128xf32>, vector<224x128xf32> -> vector<224x128xf32>
    %80 = vector.extract_strided_slice %6 {offsets = [7, 0, 0], sizes = [1, 56, 128], strides = [1, 1, 1]} : vector<10x56x128xf32> to vector<1x56x128xf32>
    %81 = vector.shape_cast %80 : vector<1x56x128xf32> to vector<56x128xf32>
    %82 = vector.extract_strided_slice %6 {offsets = [8, 0, 0], sizes = [1, 56, 128], strides = [1, 1, 1]} : vector<10x56x128xf32> to vector<1x56x128xf32>
    %83 = vector.shape_cast %82 : vector<1x56x128xf32> to vector<56x128xf32>
    %84 = vector.extract_strided_slice %6 {offsets = [9, 0, 0], sizes = [1, 56, 128], strides = [1, 1, 1]} : vector<10x56x128xf32> to vector<1x56x128xf32>
    %85 = vector.shape_cast %84 : vector<1x56x128xf32> to vector<56x128xf32>
    %86 = tpu.concatenate %81, %83, %85 in 0 : vector<56x128xf32>, vector<56x128xf32>, vector<56x128xf32> -> vector<168x128xf32>
    %cst_21 = arith.constant dense<0.000000e+00> : vector<224x128xf32>
    %87 = tpu.matmul %7, %86, %cst_21 {dimension_numbers = #tpu.dot_dimension_numbers<[1], [0], [0], [1], [0, 0, 1, 1], [], []>} : vector<224x168xf32>, vector<168x128xf32>, vector<224x128xf32> -> vector<224x128xf32>
    %88 = arith.maximumf %79, %87 : vector<224x128xf32>
    %89 = vector.broadcast %8 : vector<224x1xf32> to vector<224x128xf32>
    %90 = arith.addf %88, %89 : vector<224x128xf32>
    %cst_22 = arith.constant 0.000000e+00 : f32
    %91 = vector.broadcast %cst_22 : f32 to vector<224x128xf32>
    %92 = arith.maximumf %90, %91 : vector<224x128xf32>
    %c0_23 = arith.constant 0 : index
    %c0_24 = arith.constant 0 : index
    %c0_25 = arith.constant 0 : index
    %93 = vector.load %arg6[%c0_23, %c0_24, %c0_25] : memref<2x28x336xf32, #tpu.memory_space<vmem>>, vector<2x28x336xf32>
    %c0_26 = arith.constant 0 : index
    %c0_27 = arith.constant 0 : index
    %94 = vector.load %arg7[%c0_26, %c0_27] : memref<28x1xf32, #tpu.memory_space<vmem>>, vector<28x1xf32>
    %cst_28 = arith.constant 0.000000e+00 : f32
    %95 = vector.broadcast %cst_28 : f32 to vector<56x128xf32>
    %96 = vector.extract_strided_slice %29 {offsets = [168, 0], sizes = [56, 128], strides = [1, 1]} : vector<224x128xf32> to vector<56x128xf32>
    %97 = vector.extract_strided_slice %29 {offsets = [0, 0], sizes = [56, 128], strides = [1, 1]} : vector<224x128xf32> to vector<56x128xf32>
    %98 = vector.extract_strided_slice %50 {offsets = [168, 0], sizes = [56, 128], strides = [1, 1]} : vector<224x128xf32> to vector<56x128xf32>
    %99 = vector.extract_strided_slice %50 {offsets = [0, 0], sizes = [56, 128], strides = [1, 1]} : vector<224x128xf32> to vector<56x128xf32>
    %100 = tpu.concatenate %95, %95, %96, %97, %98, %99 in 0 : vector<56x128xf32>, vector<56x128xf32>, vector<56x128xf32>, vector<56x128xf32>, vector<56x128xf32>, vector<56x128xf32> -> vector<336x128xf32>
    %101 = vector.extract_strided_slice %93 {offsets = [0, 0, 0], sizes = [1, 28, 336], strides = [1, 1, 1]} : vector<2x28x336xf32> to vector<1x28x336xf32>
    %102 = vector.shape_cast %101 : vector<1x28x336xf32> to vector<28x336xf32>
    %cst_29 = arith.constant dense<0.000000e+00> : vector<28x128xf32>
    %103 = tpu.matmul %102, %100, %cst_29 {dimension_numbers = #tpu.dot_dimension_numbers<[1], [0], [0], [1], [0, 0, 1, 1], [], []>} : vector<28x336xf32>, vector<336x128xf32>, vector<28x128xf32> -> vector<28x128xf32>
    %104 = vector.extract_strided_slice %29 {offsets = [56, 0], sizes = [56, 128], strides = [1, 1]} : vector<224x128xf32> to vector<56x128xf32>
    %105 = vector.extract_strided_slice %29 {offsets = [112, 0], sizes = [56, 128], strides = [1, 1]} : vector<224x128xf32> to vector<56x128xf32>
    %106 = vector.extract_strided_slice %50 {offsets = [56, 0], sizes = [56, 128], strides = [1, 1]} : vector<224x128xf32> to vector<56x128xf32>
    %107 = vector.extract_strided_slice %50 {offsets = [112, 0], sizes = [56, 128], strides = [1, 1]} : vector<224x128xf32> to vector<56x128xf32>
    %108 = tpu.concatenate %95, %95, %104, %105, %106, %107 in 0 : vector<56x128xf32>, vector<56x128xf32>, vector<56x128xf32>, vector<56x128xf32>, vector<56x128xf32>, vector<56x128xf32> -> vector<336x128xf32>
    %109 = vector.extract_strided_slice %93 {offsets = [1, 0, 0], sizes = [1, 28, 336], strides = [1, 1, 1]} : vector<2x28x336xf32> to vector<1x28x336xf32>
    %110 = vector.shape_cast %109 : vector<1x28x336xf32> to vector<28x336xf32>
    %cst_30 = arith.constant dense<0.000000e+00> : vector<28x128xf32>
    %111 = tpu.matmul %110, %108, %cst_30 {dimension_numbers = #tpu.dot_dimension_numbers<[1], [0], [0], [1], [0, 0, 1, 1], [], []>} : vector<28x336xf32>, vector<336x128xf32>, vector<28x128xf32> -> vector<28x128xf32>
    %112 = arith.maximumf %103, %111 : vector<28x128xf32>
    %113 = vector.extract_strided_slice %50 {offsets = [168, 0], sizes = [56, 128], strides = [1, 1]} : vector<224x128xf32> to vector<56x128xf32>
    %114 = vector.extract_strided_slice %50 {offsets = [0, 0], sizes = [56, 128], strides = [1, 1]} : vector<224x128xf32> to vector<56x128xf32>
    %115 = vector.extract_strided_slice %71 {offsets = [168, 0], sizes = [56, 128], strides = [1, 1]} : vector<224x128xf32> to vector<56x128xf32>
    %116 = vector.extract_strided_slice %71 {offsets = [0, 0], sizes = [56, 128], strides = [1, 1]} : vector<224x128xf32> to vector<56x128xf32>
    %117 = vector.extract_strided_slice %92 {offsets = [168, 0], sizes = [56, 128], strides = [1, 1]} : vector<224x128xf32> to vector<56x128xf32>
    %118 = vector.extract_strided_slice %92 {offsets = [0, 0], sizes = [56, 128], strides = [1, 1]} : vector<224x128xf32> to vector<56x128xf32>
    %119 = tpu.concatenate %113, %114, %115, %116, %117, %118 in 0 : vector<56x128xf32>, vector<56x128xf32>, vector<56x128xf32>, vector<56x128xf32>, vector<56x128xf32>, vector<56x128xf32> -> vector<336x128xf32>
    %120 = vector.extract_strided_slice %93 {offsets = [0, 0, 0], sizes = [1, 28, 336], strides = [1, 1, 1]} : vector<2x28x336xf32> to vector<1x28x336xf32>
    %121 = vector.shape_cast %120 : vector<1x28x336xf32> to vector<28x336xf32>
    %cst_31 = arith.constant dense<0.000000e+00> : vector<28x128xf32>
    %122 = tpu.matmul %121, %119, %cst_31 {dimension_numbers = #tpu.dot_dimension_numbers<[1], [0], [0], [1], [0, 0, 1, 1], [], []>} : vector<28x336xf32>, vector<336x128xf32>, vector<28x128xf32> -> vector<28x128xf32>
    %123 = arith.maximumf %112, %122 : vector<28x128xf32>
    %124 = vector.extract_strided_slice %50 {offsets = [56, 0], sizes = [56, 128], strides = [1, 1]} : vector<224x128xf32> to vector<56x128xf32>
    %125 = vector.extract_strided_slice %50 {offsets = [112, 0], sizes = [56, 128], strides = [1, 1]} : vector<224x128xf32> to vector<56x128xf32>
    %126 = vector.extract_strided_slice %71 {offsets = [56, 0], sizes = [56, 128], strides = [1, 1]} : vector<224x128xf32> to vector<56x128xf32>
    %127 = vector.extract_strided_slice %71 {offsets = [112, 0], sizes = [56, 128], strides = [1, 1]} : vector<224x128xf32> to vector<56x128xf32>
    %128 = vector.extract_strided_slice %92 {offsets = [56, 0], sizes = [56, 128], strides = [1, 1]} : vector<224x128xf32> to vector<56x128xf32>
    %129 = vector.extract_strided_slice %92 {offsets = [112, 0], sizes = [56, 128], strides = [1, 1]} : vector<224x128xf32> to vector<56x128xf32>
    %130 = tpu.concatenate %124, %125, %126, %127, %128, %129 in 0 : vector<56x128xf32>, vector<56x128xf32>, vector<56x128xf32>, vector<56x128xf32>, vector<56x128xf32>, vector<56x128xf32> -> vector<336x128xf32>
    %131 = vector.extract_strided_slice %93 {offsets = [1, 0, 0], sizes = [1, 28, 336], strides = [1, 1, 1]} : vector<2x28x336xf32> to vector<1x28x336xf32>
    %132 = vector.shape_cast %131 : vector<1x28x336xf32> to vector<28x336xf32>
    %cst_32 = arith.constant dense<0.000000e+00> : vector<28x128xf32>
    %133 = tpu.matmul %132, %130, %cst_32 {dimension_numbers = #tpu.dot_dimension_numbers<[1], [0], [0], [1], [0, 0, 1, 1], [], []>} : vector<28x336xf32>, vector<336x128xf32>, vector<28x128xf32> -> vector<28x128xf32>
    %134 = arith.maximumf %123, %133 : vector<28x128xf32>
    %135 = vector.broadcast %94 : vector<28x1xf32> to vector<28x128xf32>
    %136 = arith.addf %134, %135 : vector<28x128xf32>
    %cst_33 = arith.constant 0.000000e+00 : f32
    %137 = vector.broadcast %cst_33 : f32 to vector<28x128xf32>
    %138 = arith.maximumf %136, %137 : vector<28x128xf32>
    %c0_34 = arith.constant 0 : index
    %c0_35 = arith.constant 0 : index
    %139 = vector.load %arg8[%c0_34, %c0_35] : memref<15x28xf32, #tpu.memory_space<vmem>>, vector<15x28xf32>
    %cst_36 = arith.constant dense<0.000000e+00> : vector<15x128xf32>
    %140 = tpu.matmul %139, %138, %cst_36 {dimension_numbers = #tpu.dot_dimension_numbers<[1], [0], [0], [1], [0, 0, 1, 1], [], []>} : vector<15x28xf32>, vector<28x128xf32>, vector<15x128xf32> -> vector<15x128xf32>
    %c0_37 = arith.constant 0 : index
    %c0_38 = arith.constant 0 : index
    %141 = vector.load %arg9[%c0_37, %c0_38] : memref<15x50xf32, #tpu.memory_space<vmem>>, vector<15x50xf32>
    %c0_39 = arith.constant 0 : index
    %c0_40 = arith.constant 0 : index
    %142 = vector.load %arg15[%c0_39, %c0_40] : memref<50x128xf32, #tpu.memory_space<vmem>>, vector<50x128xf32>
    %cst_41 = arith.constant dense<0.000000e+00> : vector<15x128xf32>
    %143 = tpu.matmul %141, %142, %cst_41 {dimension_numbers = #tpu.dot_dimension_numbers<[1], [0], [0], [1], [0, 0, 1, 1], [], []>} : vector<15x50xf32>, vector<50x128xf32>, vector<15x128xf32> -> vector<15x128xf32>
    %144 = arith.addf %140, %143 : vector<15x128xf32>
    %c0_42 = arith.constant 0 : index
    %c0_43 = arith.constant 0 : index
    %145 = vector.load %arg10[%c0_42, %c0_43] : memref<15x1xf32, #tpu.memory_space<vmem>>, vector<15x1xf32>
    %146 = vector.broadcast %145 : vector<15x1xf32> to vector<15x128xf32>
    %147 = arith.addf %144, %146 : vector<15x128xf32>
    %cst_44 = arith.constant 0.000000e+00 : f32
    %148 = vector.broadcast %cst_44 : f32 to vector<15x128xf32>
    %149 = arith.maximumf %147, %148 : vector<15x128xf32>
    %c0_45 = arith.constant 0 : index
    %c0_46 = arith.constant 0 : index
    %150 = vector.load %arg11[%c0_45, %c0_46] : memref<20x15xf32, #tpu.memory_space<vmem>>, vector<20x15xf32>
    %cst_47 = arith.constant dense<0.000000e+00> : vector<20x128xf32>
    %151 = tpu.matmul %150, %149, %cst_47 {dimension_numbers = #tpu.dot_dimension_numbers<[1], [0], [0], [1], [0, 0, 1, 1], [], []>} : vector<20x15xf32>, vector<15x128xf32>, vector<20x128xf32> -> vector<20x128xf32>
    %c0_48 = arith.constant 0 : index
    %c0_49 = arith.constant 0 : index
    %152 = vector.load %arg12[%c0_48, %c0_49] : memref<20x1xf32, #tpu.memory_space<vmem>>, vector<20x1xf32>
    %153 = vector.broadcast %152 : vector<20x1xf32> to vector<20x128xf32>
    %154 = arith.addf %151, %153 : vector<20x128xf32>
    %cst_50 = arith.constant 0.000000e+00 : f32
    %155 = vector.broadcast %cst_50 : f32 to vector<20x128xf32>
    %156 = arith.maximumf %154, %155 : vector<20x128xf32>
    %c0_51 = arith.constant 0 : index
    %c0_52 = arith.constant 0 : index
    %157 = vector.load %arg13[%c0_51, %c0_52] : memref<20x1xf32, #tpu.memory_space<vmem>>, vector<20x1xf32>
    %158 = vector.broadcast %157 : vector<20x1xf32> to vector<20x128xf32>
    %159 = arith.mulf %156, %158 : vector<20x128xf32>
    %cst_53 = arith.constant dense<0.000000e+00> : vector<128xf32>
    %160 = vector.multi_reduction <add>, %159, %cst_53 [0] : vector<20x128xf32> to vector<128xf32>
    %161 = vector.shape_cast %160 : vector<128xf32> to vector<1x128xf32>
    %c0_54 = arith.constant 0 : index
    %c0_55 = arith.constant 0 : index
    %162 = vector.load %arg14[%c0_54, %c0_55] : memref<1x1xf32, #tpu.memory_space<vmem>>, vector<1x1xf32>
    %163 = vector.broadcast %162 : vector<1x1xf32> to vector<1x128xf32>
    %164 = arith.addf %161, %163 : vector<1x128xf32>
    %165 = arith.negf %164 : vector<1x128xf32>
    %166 = math.exp %165 : vector<1x128xf32>
    %cst_56 = arith.constant 1.000000e+00 : f32
    %167 = vector.broadcast %cst_56 : f32 to vector<1x128xf32>
    %168 = arith.addf %167, %166 : vector<1x128xf32>
    %169 = arith.divf %167, %168 : vector<1x128xf32>
    %c0_57 = arith.constant 0 : index
    %c0_58 = arith.constant 0 : index
    %170 = vector.load %arg16[%c0_57, %c0_58] : memref<1x128xf32, #tpu.memory_space<vmem>>, vector<1x128xf32>
    tpu.vector_store %arg16[%c0_57, %c0_58], %169 {strides = array<i32>} : memref<1x128xf32, #tpu.memory_space<vmem>>, vector<1x128xf32>,
    return
  }
  func.func @transform_0(%arg0: i32) -> (i32, i32, i32) {
    %c0_i32 = arith.constant 0 : i32
    %c0_i32_0 = arith.constant 0 : i32
    %c0_i32_1 = arith.constant 0 : i32
    return %c0_i32, %c0_i32_0, %arg0 : i32, i32, i32
  }
  func.func @transform_1(%arg0: i32) -> (i32, i32, i32) {
    %c0_i32 = arith.constant 0 : i32
    %c0_i32_0 = arith.constant 0 : i32
    %c0_i32_1 = arith.constant 0 : i32
    %c0_i32_2 = arith.constant 0 : i32
    return %c0_i32, %c0_i32_0, %c0_i32_1 : i32, i32, i32
  }
  func.func @transform_2(%arg0: i32) -> (i32, i32, i32) {
    %c0_i32 = arith.constant 0 : i32
    %c0_i32_0 = arith.constant 0 : i32
    %c0_i32_1 = arith.constant 0 : i32
    %c0_i32_2 = arith.constant 0 : i32
    return %c0_i32, %c0_i32_0, %c0_i32_1 : i32, i32, i32
  }
  func.func @transform_3(%arg0: i32) -> (i32, i32) {
    %c0_i32 = arith.constant 0 : i32
    %c0_i32_0 = arith.constant 0 : i32
    %c0_i32_1 = arith.constant 0 : i32
    return %c0_i32, %c0_i32_0 : i32, i32
  }
  func.func @transform_4(%arg0: i32) -> (i32, i32) {
    %c0_i32 = arith.constant 0 : i32
    %c0_i32_0 = arith.constant 0 : i32
    %c0_i32_1 = arith.constant 0 : i32
    return %c0_i32, %c0_i32_0 : i32, i32
  }
  func.func @transform_5(%arg0: i32) -> (i32, i32, i32) {
    %c0_i32 = arith.constant 0 : i32
    %c0_i32_0 = arith.constant 0 : i32
    %c0_i32_1 = arith.constant 0 : i32
    %c0_i32_2 = arith.constant 0 : i32
    return %c0_i32, %c0_i32_0, %c0_i32_1 : i32, i32, i32
  }
  func.func @transform_6(%arg0: i32) -> (i32, i32) {
    %c0_i32 = arith.constant 0 : i32
    %c0_i32_0 = arith.constant 0 : i32
    %c0_i32_1 = arith.constant 0 : i32
    return %c0_i32, %c0_i32_0 : i32, i32
  }
  func.func @transform_7(%arg0: i32) -> (i32, i32) {
    %c0_i32 = arith.constant 0 : i32
    %c0_i32_0 = arith.constant 0 : i32
    %c0_i32_1 = arith.constant 0 : i32
    return %c0_i32, %c0_i32_0 : i32, i32
  }
  func.func @transform_8(%arg0: i32) -> (i32, i32) {
    %c0_i32 = arith.constant 0 : i32
    %c0_i32_0 = arith.constant 0 : i32
    %c0_i32_1 = arith.constant 0 : i32
    return %c0_i32, %c0_i32_0 : i32, i32
  }
  func.func @transform_9(%arg0: i32) -> (i32, i32) {
    %c0_i32 = arith.constant 0 : i32
    %c0_i32_0 = arith.constant 0 : i32
    %c0_i32_1 = arith.constant 0 : i32
    return %c0_i32, %c0_i32_0 : i32, i32
  }
  func.func @transform_10(%arg0: i32) -> (i32, i32) {
    %c0_i32 = arith.constant 0 : i32
    %c0_i32_0 = arith.constant 0 : i32
    %c0_i32_1 = arith.constant 0 : i32
    return %c0_i32, %c0_i32_0 : i32, i32
  }
  func.func @transform_11(%arg0: i32) -> (i32, i32) {
    %c0_i32 = arith.constant 0 : i32
    %c0_i32_0 = arith.constant 0 : i32
    %c0_i32_1 = arith.constant 0 : i32
    return %c0_i32, %c0_i32_0 : i32, i32
  }
  func.func @transform_12(%arg0: i32) -> (i32, i32) {
    %c0_i32 = arith.constant 0 : i32
    %c0_i32_0 = arith.constant 0 : i32
    %c0_i32_1 = arith.constant 0 : i32
    return %c0_i32, %c0_i32_0 : i32, i32
  }
  func.func @transform_13(%arg0: i32) -> (i32, i32) {
    %c0_i32 = arith.constant 0 : i32
    %c0_i32_0 = arith.constant 0 : i32
    %c0_i32_1 = arith.constant 0 : i32
    return %c0_i32, %c0_i32_0 : i32, i32
  }
  func.func @transform_14(%arg0: i32) -> (i32, i32) {
    %c0_i32 = arith.constant 0 : i32
    %c0_i32_0 = arith.constant 0 : i32
    return %c0_i32, %arg0 : i32, i32
  }
  func.func @transform_15(%arg0: i32) -> (i32, i32) {
    %c0_i32 = arith.constant 0 : i32
    %c0_i32_0 = arith.constant 0 : i32
    return %c0_i32, %arg0 : i32, i32
  }
}

</mosaic_0001>

<llo_original>
// kernel: tpu_custom_call.1
$region0: #{tpu_custom_call.1}
  #allocation0 [shape = 'u32[]', space=smem, size = 0x4, offset = 0x4, fixed_abs, tag = 'smem constant byte address 0x4 - core index']
  #allocation1 [shape = 'u32[144,128]{1,0:T(1,128)}', space=vmem, size = 0x12000, scoped, tag = 'internal scratch']
  #allocation2 [shape = 'f32[1,1]{1,0:T(1,128)S(1)}', space=vmem, size = 0x200, scoped, tag = 'scoped memory for tpu_custom_call.1']
  %s0 = inlined_call_operand.vmem [shape: f32[10,56,128], index: 0, kind: input, shape index: {}]
  %s1 = inlined_call_operand.vmem [shape: f32[10,56,1], index: 1, kind: input, shape index: {}]
  %s2 = inlined_call_operand.vmem [shape: f32[10,56,1], index: 2, kind: input, shape index: {}]
  %s3 = inlined_call_operand.vmem [shape: f32[224,168], index: 3, kind: input, shape index: {}]
  %s4 = inlined_call_operand.vmem [shape: f32[224,1], index: 4, kind: input, shape index: {}]
  %s5 = inlined_call_operand.vmem [shape: f32[2,28,336], index: 5, kind: input, shape index: {}]
  %s6 = inlined_call_operand.vmem [shape: f32[28,1], index: 6, kind: input, shape index: {}]
  %s7 = inlined_call_operand.vmem [shape: f32[15,28], index: 7, kind: input, shape index: {}]
  %s8 = inlined_call_operand.vmem [shape: f32[15,50], index: 8, kind: input, shape index: {}]
  %s9 = inlined_call_operand.vmem [shape: f32[15,1], index: 9, kind: input, shape index: {}]
  %s10 = inlined_call_operand.vmem [shape: f32[20,15], index: 10, kind: input, shape index: {}]
  %s11 = inlined_call_operand.vmem [shape: f32[20,1], index: 11, kind: input, shape index: {}]
  %s12 = inlined_call_operand.vmem [shape: f32[20,1], index: 12, kind: input, shape index: {}]
  %s13 = inlined_call_operand.<no memory space> [shape: f32[1,1], index: 13, kind: input, shape index: {}]
  %s14 = inlined_call_operand.vmem [shape: f32[50,128], index: 14, kind: input, shape index: {}]
  %s15 = inlined_call_operand.hbm [shape: f32[1,128], index: 15, kind: output, shape index: {}]
  %s16 = sld [smem:[#allocation0]]
  $region70: #{tpu_custom_call.1} parent=0
    _
  %s18 = ssub.s32 1, %s16
  %s19 = scalar_select 0, %s18, %s16
  %v20 = vstv %s13
  %21 = vst [vmem:[#allocation2] sm:$0x1] %v20
  $region1: #{tpu_custom_call.1} parent=0
    #allocation3 [shape = 'u8[512]{0}', space=vmem, size = 0x400, scoped, tag = 'output window, operand 0, single buffered']
    #allocation4 [shape = 's32[1]{0}', space=sflag, size = 0x4, scoped, tag = 'scoped memory for tpu_custom_call.1']
    %22 = vsyncpa [#allocation4], 0
    // Predicated region
    $region2: #{tpu_custom_call.1} parent=1 // pred_check
      _
    $region3: #{tpu_custom_call.1} parent=1 // pred_check_branch
      %24 = sbr.rel (0) target = $region5
    $region4: #{tpu_custom_call.1} parent=1 // pred_region
      _
    $region5: #{tpu_custom_call.1} parent=1 // pred_fallthru
      _
    // Predicated region
    $region6: #{tpu_custom_call.1} parent=1 // pred_check
      _
    $region7: #{tpu_custom_call.1} parent=1 // pred_check_branch
      %26 = sbr.rel (0) target = $region9
    $region8: #{tpu_custom_call.1} parent=1 // pred_region
      _
    $region9: #{tpu_custom_call.1} parent=1 // pred_fallthru
      _
    // Predicated region
    $region10: #{tpu_custom_call.1} parent=1 // pred_check
      _
    $region11: #{tpu_custom_call.1} parent=1 // pred_check_branch
      %28 = sbr.rel (0) target = $region13
    $region12: #{tpu_custom_call.1} parent=1 // pred_region
      _
    $region13: #{tpu_custom_call.1} parent=1 // pred_fallthru
      _
    // Predicated region
    $region14: #{tpu_custom_call.1} parent=1 // pred_check
      _
    $region15: #{tpu_custom_call.1} parent=1 // pred_check_branch
      %30 = sbr.rel (0) target = $region17
    $region16: #{tpu_custom_call.1} parent=1 // pred_region
      _
    $region17: #{tpu_custom_call.1} parent=1 // pred_fallthru
      _
    // Predicated region
    $region18: #{tpu_custom_call.1} parent=1 // pred_check
      _
    $region19: #{tpu_custom_call.1} parent=1 // pred_check_branch
      %32 = sbr.rel (0) target = $region21
    $region20: #{tpu_custom_call.1} parent=1 // pred_region
      _
    $region21: #{tpu_custom_call.1} parent=1 // pred_fallthru
      _
    // Predicated region
    $region22: #{tpu_custom_call.1} parent=1 // pred_check
      _
    $region23: #{tpu_custom_call.1} parent=1 // pred_check_branch
      %34 = sbr.rel (0) target = $region25
    $region24: #{tpu_custom_call.1} parent=1 // pred_region
      _
    $region25: #{tpu_custom_call.1} parent=1 // pred_fallthru
      _
    // Predicated region
    $region26: #{tpu_custom_call.1} parent=1 // pred_check
      _
    $region27: #{tpu_custom_call.1} parent=1 // pred_check_branch
      %36 = sbr.rel (0) target = $region29
    $region28: #{tpu_custom_call.1} parent=1 // pred_region
      _
    $region29: #{tpu_custom_call.1} parent=1 // pred_fallthru
      _
    // Predicated region
    $region30: #{tpu_custom_call.1} parent=1 // pred_check
      _
    $region31: #{tpu_custom_call.1} parent=1 // pred_check_branch
      %38 = sbr.rel (0) target = $region33
    $region32: #{tpu_custom_call.1} parent=1 // pred_region
      _
    $region33: #{tpu_custom_call.1} parent=1 // pred_fallthru
      _
    // Predicated region
    $region34: #{tpu_custom_call.1} parent=1 // pred_check
      _
    $region35: #{tpu_custom_call.1} parent=1 // pred_check_branch
      %40 = sbr.rel (0) target = $region37
    $region36: #{tpu_custom_call.1} parent=1 // pred_region
      _
    $region37: #{tpu_custom_call.1} parent=1 // pred_fallthru
      _
    // Predicated region
    $region38: #{tpu_custom_call.1} parent=1 // pred_check
      _
    $region39: #{tpu_custom_call.1} parent=1 // pred_check_branch
      %42 = sbr.rel (0) target = $region41
    $region40: #{tpu_custom_call.1} parent=1 // pred_region
      _
    $region41: #{tpu_custom_call.1} parent=1 // pred_fallthru
      _
    // Predicated region
    $region42: #{tpu_custom_call.1} parent=1 // pred_check
      _
    $region43: #{tpu_custom_call.1} parent=1 // pred_check_branch
      %44 = sbr.rel (0) target = $region45
    $region44: #{tpu_custom_call.1} parent=1 // pred_region
      _
    $region45: #{tpu_custom_call.1} parent=1 // pred_fallthru
      _
    // Predicated region
    $region46: #{tpu_custom_call.1} parent=1 // pred_check
      _
    $region47: #{tpu_custom_call.1} parent=1 // pred_check_branch
      %46 = sbr.rel (0) target = $region49
    $region48: #{tpu_custom_call.1} parent=1 // pred_region
      _
    $region49: #{tpu_custom_call.1} parent=1 // pred_fallthru
      _
    // Predicated region
    $region50: #{tpu_custom_call.1} parent=1 // pred_check
      _
    $region51: #{tpu_custom_call.1} parent=1 // pred_check_branch
      %48 = sbr.rel (0) target = $region53
    $region52: #{tpu_custom_call.1} parent=1 // pred_region
      _
    $region53: #{tpu_custom_call.1} parent=1 // pred_fallthru
      _
    // Predicated region
    $region54: #{tpu_custom_call.1} parent=1 // pred_check
      _
    $region55: #{tpu_custom_call.1} parent=1 // pred_check_branch
      %50 = sbr.rel (0) target = $region57
    $region56: #{tpu_custom_call.1} parent=1 // pred_region
      _
    $region57: #{tpu_custom_call.1} parent=1 // pred_fallthru
      _
    // Predicated region
    $region58: #{tpu_custom_call.1} parent=1 // pred_check
      _
    $region59: #{tpu_custom_call.1} parent=1 // pred_check_branch
      %52 = sbr.rel (0) target = $region61
    $region60: #{tpu_custom_call.1} parent=1 // pred_region
      _
    $region61: #{tpu_custom_call.1} parent=1 // pred_fallthru
      _
    %v53 = vld [vmem:[%s0] sm:$0xff]
    %v54 = vld [vmem:[%s0 + $0x8] sm:$0xff]
    %v55 = vld [vmem:[%s0 + $0x10] sm:$0xff]
    %v56 = vld [vmem:[%s0 + $0x18] sm:$0xff]
    %v57 = vld [vmem:[%s0 + $0x20] sm:$0xff]
    %v58 = vld [vmem:[%s0 + $0x28] sm:$0xff]
    %v59 = vld [vmem:[%s0 + $0x30] sm:$0xff]
    %v60 = vld [vmem:[%s0 + $0x38] sm:$0xff]
    %v61 = vld [vmem:[%s0 + $0x40] sm:$0xff]
    %v62 = vld [vmem:[%s0 + $0x48] sm:$0xff]
    %v63 = vld [vmem:[%s0 + $0x50] sm:$0xff]
    %v64 = vld [vmem:[%s0 + $0x58] sm:$0xff]
    %v65 = vld [vmem:[%s0 + $0x60] sm:$0xff]
    %v66 = vld [vmem:[%s0 + $0x68] sm:$0xff]
    %v67 = vld [vmem:[%s0 + $0x70] sm:$0xff]
    %v68 = vld [vmem:[%s0 + $0x78] sm:$0xff]
    %v69 = vld [vmem:[%s0 + $0x80] sm:$0xff]
    %v70 = vld [vmem:[%s0 + $0x88] sm:$0xff]
    %v71 = vld [vmem:[%s0 + $0x90] sm:$0xff]
    %v72 = vld [vmem:[%s0 + $0x98] sm:$0xff]
    %v73 = vld [vmem:[%s0 + $0xa0] sm:$0xff]
    %v74 = vld [vmem:[%s0 + $0xa8] sm:$0xff]
    %v75 = vld [vmem:[%s0 + $0xb0] sm:$0xff]
    %v76 = vld [vmem:[%s0 + $0xb8] sm:$0xff]
    %v77 = vld [vmem:[%s0 + $0xc0] sm:$0xff]
    %v78 = vld [vmem:[%s0 + $0xc8] sm:$0xff]
    %v79 = vld [vmem:[%s0 + $0xd0] sm:$0xff]
    %v80 = vld [vmem:[%s0 + $0xd8] sm:$0xff]
    %v81 = vld [vmem:[%s0 + $0xe0] sm:$0xff]
    %v82 = vld [vmem:[%s0 + $0xe8] sm:$0xff]
    %v83 = vld [vmem:[%s0 + $0xf0] sm:$0xff]
    %v84 = vld [vmem:[%s0 + $0xf8] sm:$0xff]
    %v85 = vld [vmem:[%s0 + $0x100] sm:$0xff]
    %v86 = vld [vmem:[%s0 + $0x108] sm:$0xff]
    %v87 = vld [vmem:[%s0 + $0x110] sm:$0xff]
    %v88 = vld [vmem:[%s0 + $0x118] sm:$0xff]
    %v89 = vld [vmem:[%s0 + $0x120] sm:$0xff]
    %v90 = vld [vmem:[%s0 + $0x128] sm:$0xff]
    %v91 = vld [vmem:[%s0 + $0x130] sm:$0xff]
    %v92 = vld [vmem:[%s0 + $0x138] sm:$0xff]
    %v93 = vld [vmem:[%s0 + $0x140] sm:$0xff]
    %v94 = vld [vmem:[%s0 + $0x148] sm:$0xff]
    %v95 = vld [vmem:[%s0 + $0x150] sm:$0xff]
    %v96 = vld [vmem:[%s0 + $0x158] sm:$0xff]
    %v97 = vld [vmem:[%s0 + $0x160] sm:$0xff]
    %v98 = vld [vmem:[%s0 + $0x168] sm:$0xff]
    %v99 = vld [vmem:[%s0 + $0x170] sm:$0xff]
    %v100 = vld [vmem:[%s0 + $0x178] sm:$0xff]
    %v101 = vld [vmem:[%s0 + $0x180] sm:$0xff]
    %v102 = vld [vmem:[%s0 + $0x188] sm:$0xff]
    %v103 = vld [vmem:[%s0 + $0x190] sm:$0xff]
    %v104 = vld [vmem:[%s0 + $0x198] sm:$0xff]
    %v105 = vld [vmem:[%s0 + $0x1a0] sm:$0xff]
    %v106 = vld [vmem:[%s0 + $0x1a8] sm:$0xff]
    %v107 = vld [vmem:[%s0 + $0x1b0] sm:$0xff]
    %v108 = vld [vmem:[%s0 + $0x1b8] sm:$0xff]
    %v109 = vld [vmem:[%s0 + $0x1c0] sm:$0xff]
    %v110 = vld [vmem:[%s0 + $0x1c8] sm:$0xff]
    %v111 = vld [vmem:[%s0 + $0x1d0] sm:$0xff]
    %v112 = vld [vmem:[%s0 + $0x1d8] sm:$0xff]
    %v113 = vld [vmem:[%s0 + $0x1e0] sm:$0xff]
    %v114 = vld [vmem:[%s0 + $0x1e8] sm:$0xff]
    %v115 = vld [vmem:[%s0 + $0x1f0] sm:$0xff]
    %v116 = vld [vmem:[%s0 + $0x1f8] sm:$0xff]
    %v117 = vld [vmem:[%s0 + $0x200] sm:$0xff]
    %v118 = vld [vmem:[%s0 + $0x208] sm:$0xff]
    %v119 = vld [vmem:[%s0 + $0x210] sm:$0xff]
    %v120 = vld [vmem:[%s0 + $0x218] sm:$0xff]
    %v121 = vld [vmem:[%s0 + $0x220] sm:$0xff]
    %v122 = vld [vmem:[%s0 + $0x228] sm:$0xff]
    %v123 = vld [vmem:[%s1] sm:$0xff]
    %v124 = vld [vmem:[%s1 + $0x8] sm:$0xff]
    %v125 = vld [vmem:[%s1 + $0x10] sm:$0xff]
    %v126 = vld [vmem:[%s1 + $0x18] sm:$0xff]
    %v127 = vld [vmem:[%s1 + $0x20] sm:$0xff]
    %v128 = vld [vmem:[%s1 + $0x28] sm:$0xff]
    %v129 = vld [vmem:[%s1 + $0x30] sm:$0xff]
    %v130 = vld [vmem:[%s1 + $0x38] sm:$0xff]
    %v131 = vld [vmem:[%s1 + $0x40] sm:$0xff]
    %v132 = vld [vmem:[%s1 + $0x48] sm:$0xff]
    %v133 = vld [vmem:[%s1 + $0x50] sm:$0xff]
    %v134 = vld [vmem:[%s1 + $0x58] sm:$0xff]
    %v135 = vld [vmem:[%s1 + $0x60] sm:$0xff]
    %v136 = vld [vmem:[%s1 + $0x68] sm:$0xff]
    %v137 = vld [vmem:[%s1 + $0x70] sm:$0xff]
    %v138 = vld [vmem:[%s1 + $0x78] sm:$0xff]
    %v139 = vld [vmem:[%s1 + $0x80] sm:$0xff]
    %v140 = vld [vmem:[%s1 + $0x88] sm:$0xff]
    %v141 = vld [vmem:[%s1 + $0x90] sm:$0xff]
    %v142 = vld [vmem:[%s1 + $0x98] sm:$0xff]
    %v143 = vld [vmem:[%s1 + $0xa0] sm:$0xff]
    %v144 = vld [vmem:[%s1 + $0xa8] sm:$0xff]
    %v145 = vld [vmem:[%s1 + $0xb0] sm:$0xff]
    %v146 = vld [vmem:[%s1 + $0xb8] sm:$0xff]
    %v147 = vld [vmem:[%s1 + $0xc0] sm:$0xff]
    %v148 = vld [vmem:[%s1 + $0xc8] sm:$0xff]
    %v149 = vld [vmem:[%s1 + $0xd0] sm:$0xff]
    %v150 = vld [vmem:[%s1 + $0xd8] sm:$0xff]
    %v151 = vld [vmem:[%s1 + $0xe0] sm:$0xff]
    %v152 = vld [vmem:[%s1 + $0xe8] sm:$0xff]
    %v153 = vld [vmem:[%s1 + $0xf0] sm:$0xff]
    %v154 = vld [vmem:[%s1 + $0xf8] sm:$0xff]
    %v155 = vld [vmem:[%s1 + $0x100] sm:$0xff]
    %v156 = vld [vmem:[%s1 + $0x108] sm:$0xff]
    %v157 = vld [vmem:[%s1 + $0x110] sm:$0xff]
    %v158 = vld [vmem:[%s1 + $0x118] sm:$0xff]
    %v159 = vld [vmem:[%s1 + $0x120] sm:$0xff]
    %v160 = vld [vmem:[%s1 + $0x128] sm:$0xff]
    %v161 = vld [vmem:[%s1 + $0x130] sm:$0xff]
    %v162 = vld [vmem:[%s1 + $0x138] sm:$0xff]
    %v163 = vld [vmem:[%s1 + $0x140] sm:$0xff]
    %v164 = vld [vmem:[%s1 + $0x148] sm:$0xff]
    %v165 = vld [vmem:[%s1 + $0x150] sm:$0xff]
    %v166 = vld [vmem:[%s1 + $0x158] sm:$0xff]
    %v167 = vld [vmem:[%s1 + $0x160] sm:$0xff]
    %v168 = vld [vmem:[%s1 + $0x168] sm:$0xff]
    %v169 = vld [vmem:[%s1 + $0x170] sm:$0xff]
    %v170 = vld [vmem:[%s1 + $0x178] sm:$0xff]
    %v171 = vld [vmem:[%s1 + $0x180] sm:$0xff]
    %v172 = vld [vmem:[%s1 + $0x188] sm:$0xff]
    %v173 = vld [vmem:[%s1 + $0x190] sm:$0xff]
    %v174 = vld [vmem:[%s1 + $0x198] sm:$0xff]
    %v175 = vld [vmem:[%s1 + $0x1a0] sm:$0xff]
    %v176 = vld [vmem:[%s1 + $0x1a8] sm:$0xff]
    %v177 = vld [vmem:[%s1 + $0x1b0] sm:$0xff]
    %v178 = vld [vmem:[%s1 + $0x1b8] sm:$0xff]
    %v179 = vld [vmem:[%s1 + $0x1c0] sm:$0xff]
    %v180 = vld [vmem:[%s1 + $0x1c8] sm:$0xff]
    %v181 = vld [vmem:[%s1 + $0x1d0] sm:$0xff]
    %v182 = vld [vmem:[%s1 + $0x1d8] sm:$0xff]
    %v183 = vld [vmem:[%s1 + $0x1e0] sm:$0xff]
    %v184 = vld [vmem:[%s1 + $0x1e8] sm:$0xff]
    %v185 = vld [vmem:[%s1 + $0x1f0] sm:$0xff]
    %v186 = vld [vmem:[%s1 + $0x1f8] sm:$0xff]
    %v187 = vld [vmem:[%s1 + $0x200] sm:$0xff]
    %v188 = vld [vmem:[%s1 + $0x208] sm:$0xff]
    %v189 = vld [vmem:[%s1 + $0x210] sm:$0xff]
    %v190 = vld [vmem:[%s1 + $0x218] sm:$0xff]
    %v191 = vld [vmem:[%s1 + $0x220] sm:$0xff]
    %v192 = vld [vmem:[%s1 + $0x228] sm:$0xff]
    %194 = vset.pattern.permute.xlu0 0
    %195 = vperm.xlu0 %194, %v123
    %v196 = vpop.permute.xlu0 %195
    %199 = vset.pattern.permute.xlu0 0
    %200 = vperm.xlu0 %199, %v124
    %v201 = vpop.permute.xlu0 %200
    %204 = vset.pattern.permute.xlu0 0
    %205 = vperm.xlu0 %204, %v125
    %v206 = vpop.permute.xlu0 %205
    %209 = vset.pattern.permute.xlu0 0
    %210 = vperm.xlu0 %209, %v126
    %v211 = vpop.permute.xlu0 %210
    %214 = vset.pattern.permute.xlu0 0
    %215 = vperm.xlu0 %214, %v127
    %v216 = vpop.permute.xlu0 %215
    %219 = vset.pattern.permute.xlu0 0
    %220 = vperm.xlu0 %219, %v128
    %v221 = vpop.permute.xlu0 %220
    %224 = vset.pattern.permute.xlu0 0
    %225 = vperm.xlu0 %224, %v129
    %v226 = vpop.permute.xlu0 %225
    %229 = vset.pattern.permute.xlu0 0
    %230 = vperm.xlu0 %229, %v130
    %v231 = vpop.permute.xlu0 %230
    %234 = vset.pattern.permute.xlu0 0
    %235 = vperm.xlu0 %234, %v131
    %v236 = vpop.permute.xlu0 %235
    %239 = vset.pattern.permute.xlu0 0
    %240 = vperm.xlu0 %239, %v132
    %v241 = vpop.permute.xlu0 %240
    %244 = vset.pattern.permute.xlu0 0
    %245 = vperm.xlu0 %244, %v133
    %v246 = vpop.permute.xlu0 %245
    %249 = vset.pattern.permute.xlu0 0
    %250 = vperm.xlu0 %249, %v134
    %v251 = vpop.permute.xlu0 %250
    %254 = vset.pattern.permute.xlu0 0
    %255 = vperm.xlu0 %254, %v135
    %v256 = vpop.permute.xlu0 %255
    %259 = vset.pattern.permute.xlu0 0
    %260 = vperm.xlu0 %259, %v136
    %v261 = vpop.permute.xlu0 %260
    %264 = vset.pattern.permute.xlu0 0
    %265 = vperm.xlu0 %264, %v137
    %v266 = vpop.permute.xlu0 %265
    %269 = vset.pattern.permute.xlu0 0
    %270 = vperm.xlu0 %269, %v138
    %v271 = vpop.permute.xlu0 %270
    %274 = vset.pattern.permute.xlu0 0
    %275 = vperm.xlu0 %274, %v139
    %v276 = vpop.permute.xlu0 %275
    %279 = vset.pattern.permute.xlu0 0
    %280 = vperm.xlu0 %279, %v140
    %v281 = vpop.permute.xlu0 %280
    %284 = vset.pattern.permute.xlu0 0
    %285 = vperm.xlu0 %284, %v141
    %v286 = vpop.permute.xlu0 %285
    %289 = vset.pattern.permute.xlu0 0
    %290 = vperm.xlu0 %289, %v142
    %v291 = vpop.permute.xlu0 %290
    %294 = vset.pattern.permute.xlu0 0
    %295 = vperm.xlu0 %294, %v143
    %v296 = vpop.permute.xlu0 %295
    %299 = vset.pattern.permute.xlu0 0
    %300 = vperm.xlu0 %299, %v144
    %v301 = vpop.permute.xlu0 %300
    %304 = vset.pattern.permute.xlu0 0
    %305 = vperm.xlu0 %304, %v145
    %v306 = vpop.permute.xlu0 %305
    %309 = vset.pattern.permute.xlu0 0
    %310 = vperm.xlu0 %309, %v146
    %v311 = vpop.permute.xlu0 %310
    %314 = vset.pattern.permute.xlu0 0
    %315 = vperm.xlu0 %314, %v147
    %v316 = vpop.permute.xlu0 %315
    %319 = vset.pattern.permute.xlu0 0
    %320 = vperm.xlu0 %319, %v148
    %v321 = vpop.permute.xlu0 %320
    %324 = vset.pattern.permute.xlu0 0
    %325 = vperm.xlu0 %324, %v149
    %v326 = vpop.permute.xlu0 %325
    %329 = vset.pattern.permute.xlu0 0
    %330 = vperm.xlu0 %329, %v150
    %v331 = vpop.permute.xlu0 %330
    %334 = vset.pattern.permute.xlu0 0
    %335 = vperm.xlu0 %334, %v151
    %v336 = vpop.permute.xlu0 %335
    %339 = vset.pattern.permute.xlu0 0
    %340 = vperm.xlu0 %339, %v152
    %v341 = vpop.permute.xlu0 %340
    %344 = vset.pattern.permute.xlu0 0
    %345 = vperm.xlu0 %344, %v153
    %v346 = vpop.permute.xlu0 %345
    %349 = vset.pattern.permute.xlu0 0
    %350 = vperm.xlu0 %349, %v154
    %v351 = vpop.permute.xlu0 %350
    %354 = vset.pattern.permute.xlu0 0
    %355 = vperm.xlu0 %354, %v155
    %v356 = vpop.permute.xlu0 %355
    %359 = vset.pattern.permute.xlu0 0
    %360 = vperm.xlu0 %359, %v156
    %v361 = vpop.permute.xlu0 %360
    %364 = vset.pattern.permute.xlu0 0
    %365 = vperm.xlu0 %364, %v157
    %v366 = vpop.permute.xlu0 %365
    %369 = vset.pattern.permute.xlu0 0
    %370 = vperm.xlu0 %369, %v158
    %v371 = vpop.permute.xlu0 %370
    %374 = vset.pattern.permute.xlu0 0
    %375 = vperm.xlu0 %374, %v159
    %v376 = vpop.permute.xlu0 %375
    %379 = vset.pattern.permute.xlu0 0
    %380 = vperm.xlu0 %379, %v160
    %v381 = vpop.permute.xlu0 %380
    %384 = vset.pattern.permute.xlu0 0
    %385 = vperm.xlu0 %384, %v161
    %v386 = vpop.permute.xlu0 %385
    %389 = vset.pattern.permute.xlu0 0
    %390 = vperm.xlu0 %389, %v162
    %v391 = vpop.permute.xlu0 %390
    %394 = vset.pattern.permute.xlu0 0
    %395 = vperm.xlu0 %394, %v163
    %v396 = vpop.permute.xlu0 %395
    %399 = vset.pattern.permute.xlu0 0
    %400 = vperm.xlu0 %399, %v164
    %v401 = vpop.permute.xlu0 %400
    %404 = vset.pattern.permute.xlu0 0
    %405 = vperm.xlu0 %404, %v165
    %v406 = vpop.permute.xlu0 %405
    %409 = vset.pattern.permute.xlu0 0
    %410 = vperm.xlu0 %409, %v166
    %v411 = vpop.permute.xlu0 %410
    %414 = vset.pattern.permute.xlu0 0
    %415 = vperm.xlu0 %414, %v167
    %v416 = vpop.permute.xlu0 %415
    %419 = vset.pattern.permute.xlu0 0
    %420 = vperm.xlu0 %419, %v168
    %v421 = vpop.permute.xlu0 %420
    %424 = vset.pattern.permute.xlu0 0
    %425 = vperm.xlu0 %424, %v169
    %v426 = vpop.permute.xlu0 %425
    %429 = vset.pattern.permute.xlu0 0
    %430 = vperm.xlu0 %429, %v170
    %v431 = vpop.permute.xlu0 %430
    %434 = vset.pattern.permute.xlu0 0
    %435 = vperm.xlu0 %434, %v171
    %v436 = vpop.permute.xlu0 %435
    %439 = vset.pattern.permute.xlu0 0
    %440 = vperm.xlu0 %439, %v172
    %v441 = vpop.permute.xlu0 %440
    %444 = vset.pattern.permute.xlu0 0
    %445 = vperm.xlu0 %444, %v173
    %v446 = vpop.permute.xlu0 %445
    %449 = vset.pattern.permute.xlu0 0
    %450 = vperm.xlu0 %449, %v174
    %v451 = vpop.permute.xlu0 %450
    %454 = vset.pattern.permute.xlu0 0
    %455 = vperm.xlu0 %454, %v175
    %v456 = vpop.permute.xlu0 %455
    %459 = vset.pattern.permute.xlu0 0
    %460 = vperm.xlu0 %459, %v176
    %v461 = vpop.permute.xlu0 %460
    %464 = vset.pattern.permute.xlu0 0
    %465 = vperm.xlu0 %464, %v177
    %v466 = vpop.permute.xlu0 %465
    %469 = vset.pattern.permute.xlu0 0
    %470 = vperm.xlu0 %469, %v178
    %v471 = vpop.permute.xlu0 %470
    %474 = vset.pattern.permute.xlu0 0
    %475 = vperm.xlu0 %474, %v179
    %v476 = vpop.permute.xlu0 %475
    %479 = vset.pattern.permute.xlu0 0
    %480 = vperm.xlu0 %479, %v180
    %v481 = vpop.permute.xlu0 %480
    %484 = vset.pattern.permute.xlu0 0
    %485 = vperm.xlu0 %484, %v181
    %v486 = vpop.permute.xlu0 %485
    %489 = vset.pattern.permute.xlu0 0
    %490 = vperm.xlu0 %489, %v182
    %v491 = vpop.permute.xlu0 %490
    %494 = vset.pattern.permute.xlu0 0
    %495 = vperm.xlu0 %494, %v183
    %v496 = vpop.permute.xlu0 %495
    %499 = vset.pattern.permute.xlu0 0
    %500 = vperm.xlu0 %499, %v184
    %v501 = vpop.permute.xlu0 %500
    %504 = vset.pattern.permute.xlu0 0
    %505 = vperm.xlu0 %504, %v185
    %v506 = vpop.permute.xlu0 %505
    %509 = vset.pattern.permute.xlu0 0
    %510 = vperm.xlu0 %509, %v186
    %v511 = vpop.permute.xlu0 %510
    %514 = vset.pattern.permute.xlu0 0
    %515 = vperm.xlu0 %514, %v187
    %v516 = vpop.permute.xlu0 %515
    %519 = vset.pattern.permute.xlu0 0
    %520 = vperm.xlu0 %519, %v188
    %v521 = vpop.permute.xlu0 %520
    %524 = vset.pattern.permute.xlu0 0
    %525 = vperm.xlu0 %524, %v189
    %v526 = vpop.permute.xlu0 %525
    %529 = vset.pattern.permute.xlu0 0
    %530 = vperm.xlu0 %529, %v190
    %v531 = vpop.permute.xlu0 %530
    %534 = vset.pattern.permute.xlu0 0
    %535 = vperm.xlu0 %534, %v191
    %v536 = vpop.permute.xlu0 %535
    %539 = vset.pattern.permute.xlu0 0
    %540 = vperm.xlu0 %539, %v192
    %v541 = vpop.permute.xlu0 %540
    %v543 = vmul.f32 %v53, %v196
    %v544 = vmul.f32 %v54, %v201
    %v545 = vmul.f32 %v55, %v206
    %v546 = vmul.f32 %v56, %v211
    %v547 = vmul.f32 %v57, %v216
    %v548 = vmul.f32 %v58, %v221
    %v549 = vmul.f32 %v59, %v226
    %v550 = vmul.f32 %v60, %v231
    %v551 = vmul.f32 %v61, %v236
    %v552 = vmul.f32 %v62, %v241
    %v553 = vmul.f32 %v63, %v246
    %v554 = vmul.f32 %v64, %v251
    %v555 = vmul.f32 %v65, %v256
    %v556 = vmul.f32 %v66, %v261
    %v557 = vmul.f32 %v67, %v266
    %v558 = vmul.f32 %v68, %v271
    %v559 = vmul.f32 %v69, %v276
    %v560 = vmul.f32 %v70, %v281
    %v561 = vmul.f32 %v71, %v286
    %v562 = vmul.f32 %v72, %v291
    %v563 = vmul.f32 %v73, %v296
    %v564 = vmul.f32 %v74, %v301
    %v565 = vmul.f32 %v75, %v306
    %v566 = vmul.f32 %v76, %v311
    %v567 = vmul.f32 %v77, %v316
    %v568 = vmul.f32 %v78, %v321
    %v569 = vmul.f32 %v79, %v326
    %v570 = vmul.f32 %v80, %v331
    %v571 = vmul.f32 %v81, %v336
    %v572 = vmul.f32 %v82, %v341
    %v573 = vmul.f32 %v83, %v346
    %v574 = vmul.f32 %v84, %v351
    %v575 = vmul.f32 %v85, %v356
    %v576 = vmul.f32 %v86, %v361
    %v577 = vmul.f32 %v87, %v366
    %v578 = vmul.f32 %v88, %v371
    %v579 = vmul.f32 %v89, %v376
    %v580 = vmul.f32 %v90, %v381
    %v581 = vmul.f32 %v91, %v386
    %v582 = vmul.f32 %v92, %v391
    %v583 = vmul.f32 %v93, %v396
    %v584 = vmul.f32 %v94, %v401
    %v585 = vmul.f32 %v95, %v406
    %v586 = vmul.f32 %v96, %v411
    %v587 = vmul.f32 %v97, %v416
    %v588 = vmul.f32 %v98, %v421
    %v589 = vmul.f32 %v99, %v426
    %v590 = vmul.f32 %v100, %v431
    %v591 = vmul.f32 %v101, %v436
    %v592 = vmul.f32 %v102, %v441
    %v593 = vmul.f32 %v103, %v446
    %v594 = vmul.f32 %v104, %v451
    %v595 = vmul.f32 %v105, %v456
    %v596 = vmul.f32 %v106, %v461
    %v597 = vmul.f32 %v107, %v466
    %v598 = vmul.f32 %v108, %v471
    %v599 = vmul.f32 %v109, %v476
    %v600 = vmul.f32 %v110, %v481
    %v601 = vmul.f32 %v111, %v486
    %v602 = vmul.f32 %v112, %v491
    %v603 = vmul.f32 %v113, %v496
    %v604 = vmul.f32 %v114, %v501
    %v605 = vmul.f32 %v115, %v506
    %v606 = vmul.f32 %v116, %v511
    %v607 = vmul.f32 %v117, %v516
    %v608 = vmul.f32 %v118, %v521
    %v609 = vmul.f32 %v119, %v526
    %v610 = vmul.f32 %v120, %v531
    %v611 = vmul.f32 %v121, %v536
    %v612 = vmul.f32 %v122, %v541
    %v613 = vld [vmem:[%s2] sm:$0xff]
    %v614 = vld [vmem:[%s2 + $0x8] sm:$0xff]
    %v615 = vld [vmem:[%s2 + $0x10] sm:$0xff]
    %v616 = vld [vmem:[%s2 + $0x18] sm:$0xff]
    %v617 = vld [vmem:[%s2 + $0x20] sm:$0xff]
    %v618 = vld [vmem:[%s2 + $0x28] sm:$0xff]
    %v619 = vld [vmem:[%s2 + $0x30] sm:$0xff]
    %v620 = vld [vmem:[%s2 + $0x38] sm:$0xff]
    %v621 = vld [vmem:[%s2 + $0x40] sm:$0xff]
    %v622 = vld [vmem:[%s2 + $0x48] sm:$0xff]
    %v623 = vld [vmem:[%s2 + $0x50] sm:$0xff]
    %v624 = vld [vmem:[%s2 + $0x58] sm:$0xff]
    %v625 = vld [vmem:[%s2 + $0x60] sm:$0xff]
    %v626 = vld [vmem:[%s2 + $0x68] sm:$0xff]
    %v627 = vld [vmem:[%s2 + $0x70] sm:$0xff]
    %v628 = vld [vmem:[%s2 + $0x78] sm:$0xff]
    %v629 = vld [vmem:[%s2 + $0x80] sm:$0xff]
    %v630 = vld [vmem:[%s2 + $0x88] sm:$0xff]
    %v631 = vld [vmem:[%s2 + $0x90] sm:$0xff]
    %v632 = vld [vmem:[%s2 + $0x98] sm:$0xff]
    %v633 = vld [vmem:[%s2 + $0xa0] sm:$0xff]
    %v634 = vld [vmem:[%s2 + $0xa8] sm:$0xff]
    %v635 = vld [vmem:[%s2 + $0xb0] sm:$0xff]
    %v636 = vld [vmem:[%s2 + $0xb8] sm:$0xff]
    %v637 = vld [vmem:[%s2 + $0xc0] sm:$0xff]
    %v638 = vld [vmem:[%s2 + $0xc8] sm:$0xff]
    %v639 = vld [vmem:[%s2 + $0xd0] sm:$0xff]
    %v640 = vld [vmem:[%s2 + $0xd8] sm:$0xff]
    %v641 = vld [vmem:[%s2 + $0xe0] sm:$0xff]
    %v642 = vld [vmem:[%s2 + $0xe8] sm:$0xff]
    %v643 = vld [vmem:[%s2 + $0xf0] sm:$0xff]
    %v644 = vld [vmem:[%s2 + $0xf8] sm:$0xff]
    %v645 = vld [vmem:[%s2 + $0x100] sm:$0xff]
    %v646 = vld [vmem:[%s2 + $0x108] sm:$0xff]
    %v647 = vld [vmem:[%s2 + $0x110] sm:$0xff]
    %v648 = vld [vmem:[%s2 + $0x118] sm:$0xff]
    %v649 = vld [vmem:[%s2 + $0x120] sm:$0xff]
    %v650 = vld [vmem:[%s2 + $0x128] sm:$0xff]
    %v651 = vld [vmem:[%s2 + $0x130] sm:$0xff]
    %v652 = vld [vmem:[%s2 + $0x138] sm:$0xff]
    %v653 = vld [vmem:[%s2 + $0x140] sm:$0xff]
    %v654 = vld [vmem:[%s2 + $0x148] sm:$0xff]
    %v655 = vld [vmem:[%s2 + $0x150] sm:$0xff]
    %v656 = vld [vmem:[%s2 + $0x158] sm:$0xff]
    %v657 = vld [vmem:[%s2 + $0x160] sm:$0xff]
    %v658 = vld [vmem:[%s2 + $0x168] sm:$0xff]
    %v659 = vld [vmem:[%s2 + $0x170] sm:$0xff]
    %v660 = vld [vmem:[%s2 + $0x178] sm:$0xff]
    %v661 = vld [vmem:[%s2 + $0x180] sm:$0xff]
    %v662 = vld [vmem:[%s2 + $0x188] sm:$0xff]
    %v663 = vld [vmem:[%s2 + $0x190] sm:$0xff]
    %v664 = vld [vmem:[%s2 + $0x198] sm:$0xff]
    %v665 = vld [vmem:[%s2 + $0x1a0] sm:$0xff]
    %v666 = vld [vmem:[%s2 + $0x1a8] sm:$0xff]
    %v667 = vld [vmem:[%s2 + $0x1b0] sm:$0xff]
    %v668 = vld [vmem:[%s2 + $0x1b8] sm:$0xff]
    %v669 = vld [vmem:[%s2 + $0x1c0] sm:$0xff]
    %v670 = vld [vmem:[%s2 + $0x1c8] sm:$0xff]
    %v671 = vld [vmem:[%s2 + $0x1d0] sm:$0xff]
    %v672 = vld [vmem:[%s2 + $0x1d8] sm:$0xff]
    %v673 = vld [vmem:[%s2 + $0x1e0] sm:$0xff]
    %v674 = vld [vmem:[%s2 + $0x1e8] sm:$0xff]
    %v675 = vld [vmem:[%s2 + $0x1f0] sm:$0xff]
    %v676 = vld [vmem:[%s2 + $0x1f8] sm:$0xff]
    %v677 = vld [vmem:[%s2 + $0x200] sm:$0xff]
    %v678 = vld [vmem:[%s2 + $0x208] sm:$0xff]
    %v679 = vld [vmem:[%s2 + $0x210] sm:$0xff]
    %v680 = vld [vmem:[%s2 + $0x218] sm:$0xff]
    %v681 = vld [vmem:[%s2 + $0x220] sm:$0xff]
    %v682 = vld [vmem:[%s2 + $0x228] sm:$0xff]
    %684 = vset.pattern.permute.xlu0 0
    %685 = vperm.xlu0 %684, %v613
    %v686 = vpop.permute.xlu0 %685
    %689 = vset.pattern.permute.xlu0 0
    %690 = vperm.xlu0 %689, %v614
    %v691 = vpop.permute.xlu0 %690
    %694 = vset.pattern.permute.xlu0 0
    %695 = vperm.xlu0 %694, %v615
    %v696 = vpop.permute.xlu0 %695
    %699 = vset.pattern.permute.xlu0 0
    %700 = vperm.xlu0 %699, %v616
    %v701 = vpop.permute.xlu0 %700
    %704 = vset.pattern.permute.xlu0 0
    %705 = vperm.xlu0 %704, %v617
    %v706 = vpop.permute.xlu0 %705
    %709 = vset.pattern.permute.xlu0 0
    %710 = vperm.xlu0 %709, %v618
    %v711 = vpop.permute.xlu0 %710
    %714 = vset.pattern.permute.xlu0 0
    %715 = vperm.xlu0 %714, %v619
    %v716 = vpop.permute.xlu0 %715
    %719 = vset.pattern.permute.xlu0 0
    %720 = vperm.xlu0 %719, %v620
    %v721 = vpop.permute.xlu0 %720
    %724 = vset.pattern.permute.xlu0 0
    %725 = vperm.xlu0 %724, %v621
    %v726 = vpop.permute.xlu0 %725
    %729 = vset.pattern.permute.xlu0 0
    %730 = vperm.xlu0 %729, %v622
    %v731 = vpop.permute.xlu0 %730
    %734 = vset.pattern.permute.xlu0 0
    %735 = vperm.xlu0 %734, %v623
    %v736 = vpop.permute.xlu0 %735
    %739 = vset.pattern.permute.xlu0 0
    %740 = vperm.xlu0 %739, %v624
    %v741 = vpop.permute.xlu0 %740
    %744 = vset.pattern.permute.xlu0 0
    %745 = vperm.xlu0 %744, %v625
    %v746 = vpop.permute.xlu0 %745
    %749 = vset.pattern.permute.xlu0 0
    %750 = vperm.xlu0 %749, %v626
    %v751 = vpop.permute.xlu0 %750
    %754 = vset.pattern.permute.xlu0 0
    %755 = vperm.xlu0 %754, %v627
    %v756 = vpop.permute.xlu0 %755
    %759 = vset.pattern.permute.xlu0 0
    %760 = vperm.xlu0 %759, %v628
    %v761 = vpop.permute.xlu0 %760
    %764 = vset.pattern.permute.xlu0 0
    %765 = vperm.xlu0 %764, %v629
    %v766 = vpop.permute.xlu0 %765
    %769 = vset.pattern.permute.xlu0 0
    %770 = vperm.xlu0 %769, %v630
    %v771 = vpop.permute.xlu0 %770
    %774 = vset.pattern.permute.xlu0 0
    %775 = vperm.xlu0 %774, %v631
    %v776 = vpop.permute.xlu0 %775
    %779 = vset.pattern.permute.xlu0 0
    %780 = vperm.xlu0 %779, %v632
    %v781 = vpop.permute.xlu0 %780
    %784 = vset.pattern.permute.xlu0 0
    %785 = vperm.xlu0 %784, %v633
    %v786 = vpop.permute.xlu0 %785
    %789 = vset.pattern.permute.xlu0 0
    %790 = vperm.xlu0 %789, %v634
    %v791 = vpop.permute.xlu0 %790
    %794 = vset.pattern.permute.xlu0 0
    %795 = vperm.xlu0 %794, %v635
    %v796 = vpop.permute.xlu0 %795
    %799 = vset.pattern.permute.xlu0 0
    %800 = vperm.xlu0 %799, %v636
    %v801 = vpop.permute.xlu0 %800
    %804 = vset.pattern.permute.xlu0 0
    %805 = vperm.xlu0 %804, %v637
    %v806 = vpop.permute.xlu0 %805
    %809 = vset.pattern.permute.xlu0 0
    %810 = vperm.xlu0 %809, %v638
    %v811 = vpop.permute.xlu0 %810
    %814 = vset.pattern.permute.xlu0 0
    %815 = vperm.xlu0 %814, %v639
    %v816 = vpop.permute.xlu0 %815
    %819 = vset.pattern.permute.xlu0 0
    %820 = vperm.xlu0 %819, %v640
    %v821 = vpop.permute.xlu0 %820
    %824 = vset.pattern.permute.xlu0 0
    %825 = vperm.xlu0 %824, %v641
    %v826 = vpop.permute.xlu0 %825
    %829 = vset.pattern.permute.xlu0 0
    %830 = vperm.xlu0 %829, %v642
    %v831 = vpop.permute.xlu0 %830
    %834 = vset.pattern.permute.xlu0 0
    %835 = vperm.xlu0 %834, %v643
    %v836 = vpop.permute.xlu0 %835
    %839 = vset.pattern.permute.xlu0 0
    %840 = vperm.xlu0 %839, %v644
    %v841 = vpop.permute.xlu0 %840
    %844 = vset.pattern.permute.xlu0 0
    %845 = vperm.xlu0 %844, %v645
    %v846 = vpop.permute.xlu0 %845
    %849 = vset.pattern.permute.xlu0 0
    %850 = vperm.xlu0 %849, %v646
    %v851 = vpop.permute.xlu0 %850
    %854 = vset.pattern.permute.xlu0 0
    %855 = vperm.xlu0 %854, %v647
    %v856 = vpop.permute.xlu0 %855
    %859 = vset.pattern.permute.xlu0 0
    %860 = vperm.xlu0 %859, %v648
    %v861 = vpop.permute.xlu0 %860
    %864 = vset.pattern.permute.xlu0 0
    %865 = vperm.xlu0 %864, %v649
    %v866 = vpop.permute.xlu0 %865
    %869 = vset.pattern.permute.xlu0 0
    %870 = vperm.xlu0 %869, %v650
    %v871 = vpop.permute.xlu0 %870
    %874 = vset.pattern.permute.xlu0 0
    %875 = vperm.xlu0 %874, %v651
    %v876 = vpop.permute.xlu0 %875
    %879 = vset.pattern.permute.xlu0 0
    %880 = vperm.xlu0 %879, %v652
    %v881 = vpop.permute.xlu0 %880
    %884 = vset.pattern.permute.xlu0 0
    %885 = vperm.xlu0 %884, %v653
    %v886 = vpop.permute.xlu0 %885
    %889 = vset.pattern.permute.xlu0 0
    %890 = vperm.xlu0 %889, %v654
    %v891 = vpop.permute.xlu0 %890
    %894 = vset.pattern.permute.xlu0 0
    %895 = vperm.xlu0 %894, %v655
    %v896 = vpop.permute.xlu0 %895
    %899 = vset.pattern.permute.xlu0 0
    %900 = vperm.xlu0 %899, %v656
    %v901 = vpop.permute.xlu0 %900
    %904 = vset.pattern.permute.xlu0 0
    %905 = vperm.xlu0 %904, %v657
    %v906 = vpop.permute.xlu0 %905
    %909 = vset.pattern.permute.xlu0 0
    %910 = vperm.xlu0 %909, %v658
    %v911 = vpop.permute.xlu0 %910
    %914 = vset.pattern.permute.xlu0 0
    %915 = vperm.xlu0 %914, %v659
    %v916 = vpop.permute.xlu0 %915
    %919 = vset.pattern.permute.xlu0 0
    %920 = vperm.xlu0 %919, %v660
    %v921 = vpop.permute.xlu0 %920
    %924 = vset.pattern.permute.xlu0 0
    %925 = vperm.xlu0 %924, %v661
    %v926 = vpop.permute.xlu0 %925
    %929 = vset.pattern.permute.xlu0 0
    %930 = vperm.xlu0 %929, %v662
    %v931 = vpop.permute.xlu0 %930
    %934 = vset.pattern.permute.xlu0 0
    %935 = vperm.xlu0 %934, %v663
    %v936 = vpop.permute.xlu0 %935
    %939 = vset.pattern.permute.xlu0 0
    %940 = vperm.xlu0 %939, %v664
    %v941 = vpop.permute.xlu0 %940
    %944 = vset.pattern.permute.xlu0 0
    %945 = vperm.xlu0 %944, %v665
    %v946 = vpop.permute.xlu0 %945
    %949 = vset.pattern.permute.xlu0 0
    %950 = vperm.xlu0 %949, %v666
    %v951 = vpop.permute.xlu0 %950
    %954 = vset.pattern.permute.xlu0 0
    %955 = vperm.xlu0 %954, %v667
    %v956 = vpop.permute.xlu0 %955
    %959 = vset.pattern.permute.xlu0 0
    %960 = vperm.xlu0 %959, %v668
    %v961 = vpop.permute.xlu0 %960
    %964 = vset.pattern.permute.xlu0 0
    %965 = vperm.xlu0 %964, %v669
    %v966 = vpop.permute.xlu0 %965
    %969 = vset.pattern.permute.xlu0 0
    %970 = vperm.xlu0 %969, %v670
    %v971 = vpop.permute.xlu0 %970
    %974 = vset.pattern.permute.xlu0 0
    %975 = vperm.xlu0 %974, %v671
    %v976 = vpop.permute.xlu0 %975
    %979 = vset.pattern.permute.xlu0 0
    %980 = vperm.xlu0 %979, %v672
    %v981 = vpop.permute.xlu0 %980
    %984 = vset.pattern.permute.xlu0 0
    %985 = vperm.xlu0 %984, %v673
    %v986 = vpop.permute.xlu0 %985
    %989 = vset.pattern.permute.xlu0 0
    %990 = vperm.xlu0 %989, %v674
    %v991 = vpop.permute.xlu0 %990
    %994 = vset.pattern.permute.xlu0 0
    %995 = vperm.xlu0 %994, %v675
    %v996 = vpop.permute.xlu0 %995
    %999 = vset.pattern.permute.xlu0 0
    %1000 = vperm.xlu0 %999, %v676
    %v1001 = vpop.permute.xlu0 %1000
    %1004 = vset.pattern.permute.xlu0 0
    %1005 = vperm.xlu0 %1004, %v677
    %v1006 = vpop.permute.xlu0 %1005
    %1009 = vset.pattern.permute.xlu0 0
    %1010 = vperm.xlu0 %1009, %v678
    %v1011 = vpop.permute.xlu0 %1010
    %1014 = vset.pattern.permute.xlu0 0
    %1015 = vperm.xlu0 %1014, %v679
    %v1016 = vpop.permute.xlu0 %1015
    %1019 = vset.pattern.permute.xlu0 0
    %1020 = vperm.xlu0 %1019, %v680
    %v1021 = vpop.permute.xlu0 %1020
    %1024 = vset.pattern.permute.xlu0 0
    %1025 = vperm.xlu0 %1024, %v681
    %v1026 = vpop.permute.xlu0 %1025
    %1029 = vset.pattern.permute.xlu0 0
    %1030 = vperm.xlu0 %1029, %v682
    %v1031 = vpop.permute.xlu0 %1030
    %v1033 = vadd.f32 %v543, %v686
    %v1034 = vadd.f32 %v544, %v691
    %v1035 = vadd.f32 %v545, %v696
    %v1036 = vadd.f32 %v546, %v701
    %v1037 = vadd.f32 %v547, %v706
    %v1038 = vadd.f32 %v548, %v711
    %v1039 = vadd.f32 %v549, %v716
    %v1040 = vadd.f32 %v550, %v721
    %v1041 = vadd.f32 %v551, %v726
    %v1042 = vadd.f32 %v552, %v731
    %v1043 = vadd.f32 %v553, %v736
    %v1044 = vadd.f32 %v554, %v741
    %v1045 = vadd.f32 %v555, %v746
    %v1046 = vadd.f32 %v556, %v751
    %v1047 = vadd.f32 %v557, %v756
    %v1048 = vadd.f32 %v558, %v761
    %v1049 = vadd.f32 %v559, %v766
    %v1050 = vadd.f32 %v560, %v771
    %v1051 = vadd.f32 %v561, %v776
    %v1052 = vadd.f32 %v562, %v781
    %v1053 = vadd.f32 %v563, %v786
    %v1054 = vadd.f32 %v564, %v791
    %v1055 = vadd.f32 %v565, %v796
    %v1056 = vadd.f32 %v566, %v801
    %v1057 = vadd.f32 %v567, %v806
    %v1058 = vadd.f32 %v568, %v811
    %v1059 = vadd.f32 %v569, %v816
    %v1060 = vadd.f32 %v570, %v821
    %v1061 = vadd.f32 %v571, %v826
    %v1062 = vadd.f32 %v572, %v831
    %v1063 = vadd.f32 %v573, %v836
    %v1064 = vadd.f32 %v574, %v841
    %v1065 = vadd.f32 %v575, %v846
    %v1066 = vadd.f32 %v576, %v851
    %v1067 = vadd.f32 %v577, %v856
    %v1068 = vadd.f32 %v578, %v861
    %v1069 = vadd.f32 %v579, %v866
    %v1070 = vadd.f32 %v580, %v871
    %v1071 = vadd.f32 %v581, %v876
    %v1072 = vadd.f32 %v582, %v881
    %v1073 = vadd.f32 %v583, %v886
    %v1074 = vadd.f32 %v584, %v891
    %v1075 = vadd.f32 %v585, %v896
    %v1076 = vadd.f32 %v586, %v901
    %v1077 = vadd.f32 %v587, %v906
    %v1078 = vadd.f32 %v588, %v911
    %v1079 = vadd.f32 %v589, %v916
    %v1080 = vadd.f32 %v590, %v921
    %v1081 = vadd.f32 %v591, %v926
    %v1082 = vadd.f32 %v592, %v931
    %v1083 = vadd.f32 %v593, %v936
    %v1084 = vadd.f32 %v594, %v941
    %v1085 = vadd.f32 %v595, %v946
    %v1086 = vadd.f32 %v596, %v951
    %v1087 = vadd.f32 %v597, %v956
    %v1088 = vadd.f32 %v598, %v961
    %v1089 = vadd.f32 %v599, %v966
    %v1090 = vadd.f32 %v600, %v971
    %v1091 = vadd.f32 %v601, %v976
    %v1092 = vadd.f32 %v602, %v981
    %v1093 = vadd.f32 %v603, %v986
    %v1094 = vadd.f32 %v604, %v991
    %v1095 = vadd.f32 %v605, %v996
    %v1096 = vadd.f32 %v606, %v1001
    %v1097 = vadd.f32 %v607, %v1006
    %v1098 = vadd.f32 %v608, %v1011
    %v1099 = vadd.f32 %v609, %v1016
    %v1100 = vadd.f32 %v610, %v1021
    %v1101 = vadd.f32 %v611, %v1026
    %v1102 = vadd.f32 %v612, %v1031
    %v1103 = vld [vmem:[%s3] sm:$0xff]
    %v1104 = vld [vmem:[%s3 + $0x8] sm:$0xff]
    %v1105 = vld [vmem:[%s3 + $0x10] sm:$0xff]
    %v1106 = vld [vmem:[%s3 + $0x18] sm:$0xff]
    %v1107 = vld [vmem:[%s3 + $0x20] sm:$0xff]
    %v1108 = vld [vmem:[%s3 + $0x28] sm:$0xff]
    %v1109 = vld [vmem:[%s3 + $0x30] sm:$0xff]
    %v1110 = vld [vmem:[%s3 + $0x38] sm:$0xff]
    %v1111 = vld [vmem:[%s3 + $0x40] sm:$0xff]
    %v1112 = vld [vmem:[%s3 + $0x48] sm:$0xff]
    %v1113 = vld [vmem:[%s3 + $0x50] sm:$0xff]
    %v1114 = vld [vmem:[%s3 + $0x58] sm:$0xff]
    %v1115 = vld [vmem:[%s3 + $0x60] sm:$0xff]
    %v1116 = vld [vmem:[%s3 + $0x68] sm:$0xff]
    %v1117 = vld [vmem:[%s3 + $0x70] sm:$0xff]
    %v1118 = vld [vmem:[%s3 + $0x78] sm:$0xff]
    %v1119 = vld [vmem:[%s3 + $0x80] sm:$0xff]
    %v1120 = vld [vmem:[%s3 + $0x88] sm:$0xff]
    %v1121 = vld [vmem:[%s3 + $0x90] sm:$0xff]
    %v1122 = vld [vmem:[%s3 + $0x98] sm:$0xff]
    %v1123 = vld [vmem:[%s3 + $0xa0] sm:$0xff]
    %v1124 = vld [vmem:[%s3 + $0xa8] sm:$0xff]
    %v1125 = vld [vmem:[%s3 + $0xb0] sm:$0xff]
    %v1126 = vld [vmem:[%s3 + $0xb8] sm:$0xff]
    %v1127 = vld [vmem:[%s3 + $0xc0] sm:$0xff]
    %v1128 = vld [vmem:[%s3 + $0xc8] sm:$0xff]
    %v1129 = vld [vmem:[%s3 + $0xd0] sm:$0xff]
    %v1130 = vld [vmem:[%s3 + $0xd8] sm:$0xff]
    %v1131 = vld [vmem:[%s3 + $0xe0] sm:$0xff]
    %v1132 = vld [vmem:[%s3 + $0xe8] sm:$0xff]
    %v1133 = vld [vmem:[%s3 + $0xf0] sm:$0xff]
    %v1134 = vld [vmem:[%s3 + $0xf8] sm:$0xff]
    %v1135 = vld [vmem:[%s3 + $0x100] sm:$0xff]
    %v1136 = vld [vmem:[%s3 + $0x108] sm:$0xff]
    %v1137 = vld [vmem:[%s3 + $0x110] sm:$0xff]
    %v1138 = vld [vmem:[%s3 + $0x118] sm:$0xff]
    %v1139 = vld [vmem:[%s3 + $0x120] sm:$0xff]
    %v1140 = vld [vmem:[%s3 + $0x128] sm:$0xff]
    %v1141 = vld [vmem:[%s3 + $0x130] sm:$0xff]
    %v1142 = vld [vmem:[%s3 + $0x138] sm:$0xff]
    %v1143 = vld [vmem:[%s3 + $0x140] sm:$0xff]
    %v1144 = vld [vmem:[%s3 + $0x148] sm:$0xff]
    %v1145 = vld [vmem:[%s3 + $0x150] sm:$0xff]
    %v1146 = vld [vmem:[%s3 + $0x158] sm:$0xff]
    %v1147 = vld [vmem:[%s3 + $0x160] sm:$0xff]
    %v1148 = vld [vmem:[%s3 + $0x168] sm:$0xff]
    %v1149 = vld [vmem:[%s3 + $0x170] sm:$0xff]
    %v1150 = vld [vmem:[%s3 + $0x178] sm:$0xff]
    %v1151 = vld [vmem:[%s3 + $0x180] sm:$0xff]
    %v1152 = vld [vmem:[%s3 + $0x188] sm:$0xff]
    %v1153 = vld [vmem:[%s3 + $0x190] sm:$0xff]
    %v1154 = vld [vmem:[%s3 + $0x198] sm:$0xff]
    %v1155 = vld [vmem:[%s3 + $0x1a0] sm:$0xff]
    %v1156 = vld [vmem:[%s3 + $0x1a8] sm:$0xff]
    %v1157 = vld [vmem:[%s3 + $0x1b0] sm:$0xff]
    %v1158 = vld [vmem:[%s3 + $0x1b8] sm:$0xff]
    %v1159 = vld [vmem:[%s4] sm:$0xff]
    %v1160 = vld [vmem:[%s4 + $0x8] sm:$0xff]
    %v1161 = vld [vmem:[%s4 + $0x10] sm:$0xff]
    %v1162 = vld [vmem:[%s4 + $0x18] sm:$0xff]
    %v1163 = vld [vmem:[%s4 + $0x20] sm:$0xff]
    %v1164 = vld [vmem:[%s4 + $0x28] sm:$0xff]
    %v1165 = vld [vmem:[%s4 + $0x30] sm:$0xff]
    %v1166 = vld [vmem:[%s4 + $0x38] sm:$0xff]
    %v1167 = vld [vmem:[%s4 + $0x40] sm:$0xff]
    %v1168 = vld [vmem:[%s4 + $0x48] sm:$0xff]
    %v1169 = vld [vmem:[%s4 + $0x50] sm:$0xff]
    %v1170 = vld [vmem:[%s4 + $0x58] sm:$0xff]
    %v1171 = vld [vmem:[%s4 + $0x60] sm:$0xff]
    %v1172 = vld [vmem:[%s4 + $0x68] sm:$0xff]
    %v1173 = vld [vmem:[%s4 + $0x70] sm:$0xff]
    %v1174 = vld [vmem:[%s4 + $0x78] sm:$0xff]
    %v1175 = vld [vmem:[%s4 + $0x80] sm:$0xff]
    %v1176 = vld [vmem:[%s4 + $0x88] sm:$0xff]
    %v1177 = vld [vmem:[%s4 + $0x90] sm:$0xff]
    %v1178 = vld [vmem:[%s4 + $0x98] sm:$0xff]
    %v1179 = vld [vmem:[%s4 + $0xa0] sm:$0xff]
    %v1180 = vld [vmem:[%s4 + $0xa8] sm:$0xff]
    %v1181 = vld [vmem:[%s4 + $0xb0] sm:$0xff]
    %v1182 = vld [vmem:[%s4 + $0xb8] sm:$0xff]
    %v1183 = vld [vmem:[%s4 + $0xc0] sm:$0xff]
    %v1184 = vld [vmem:[%s4 + $0xc8] sm:$0xff]
    %v1185 = vld [vmem:[%s4 + $0xd0] sm:$0xff]
    %v1186 = vld [vmem:[%s4 + $0xd8] sm:$0xff]
    %vm1187 = vcmask 326656
    %v1189 = vsel %vm1187, %v1104, 0
    %v1192 = vsel %vm1187, %v1106, 0
    %v1195 = vsel %vm1187, %v1108, 0
    %v1198 = vsel %vm1187, %v1110, 0
    %v1201 = vsel %vm1187, %v1112, 0
    %v1204 = vsel %vm1187, %v1114, 0
    %v1207 = vsel %vm1187, %v1116, 0
    %v1210 = vsel %vm1187, %v1118, 0
    %v1213 = vsel %vm1187, %v1120, 0
    %v1216 = vsel %vm1187, %v1122, 0
    %v1219 = vsel %vm1187, %v1124, 0
    %v1222 = vsel %vm1187, %v1126, 0
    %v1225 = vsel %vm1187, %v1128, 0
    %v1228 = vsel %vm1187, %v1130, 0
    %v1231 = vsel %vm1187, %v1132, 0
    %v1234 = vsel %vm1187, %v1134, 0
    %v1237 = vsel %vm1187, %v1136, 0
    %v1240 = vsel %vm1187, %v1138, 0
    %v1243 = vsel %vm1187, %v1140, 0
    %v1246 = vsel %vm1187, %v1142, 0
    %v1249 = vsel %vm1187, %v1144, 0
    %v1252 = vsel %vm1187, %v1146, 0
    %v1255 = vsel %vm1187, %v1148, 0
    %v1258 = vsel %vm1187, %v1150, 0
    %v1261 = vsel %vm1187, %v1152, 0
    %v1264 = vsel %vm1187, %v1154, 0
    %v1267 = vsel %vm1187, %v1156, 0
    %v1270 = vsel %vm1187, %v1158, 0
    %1272 = vmatprep.subr.mxu0 0.0
    %1273 = vmatpush1.msra.mxu0 %v1048
    %1274 = vmatprep.subr.mxu0 0.0
    %1275 = vmatpush1.msra.mxu0 %v1047
    %1276 = vmatprep.subr.mxu0 0.0
    %1277 = vmatpush1.msra.mxu0 %v1046
    %1278 = vmatprep.subr.mxu0 0.0
    %1279 = vmatpush1.msra.mxu0 %v1045
    %1280 = vmatprep.subr.mxu0 0.0
    %1281 = vmatpush1.msra.mxu0 %v1044
    %1282 = vmatprep.subr.mxu0 0.0
    %1283 = vmatpush1.msra.mxu0 %v1043
    %1284 = vmatprep.subr.mxu0 0.0
    %1285 = vmatpush1.msra.mxu0 %v1042
    %1286 = vmatprep.subr.mxu0 0.0
    %1287 = vmatpush1.msra.mxu0 %v1041
    %1288 = vmatprep.subr.mxu0 0.0
    %1289 = vmatpush1.msra.mxu0 %v1040
    %1290 = vmatprep.subr.mxu0 0.0
    %1291 = vmatpush1.msra.mxu0 %v1039
    %1292 = vmatprep.subr.mxu0 0.0
    %1293 = vmatpush1.msra.mxu0 %v1038
    %1294 = vmatprep.subr.mxu0 0.0
    %1295 = vmatpush1.msra.mxu0 %v1037
    %1296 = vmatprep.subr.mxu0 0.0
    %1297 = vmatpush1.msra.mxu0 %v1036
    %1298 = vmatprep.subr.mxu0 0.0
    %1299 = vmatpush1.msra.mxu0 %v1035
    %1300 = vmatprep.subr.mxu0 0.0
    %1301 = vmatpush1.msra.mxu0 %v1034
    %1302 = vmatprep.subr.mxu0 0.0
    %1303 = vmatpush1.msra.mxu0 %v1033
    %1304 = vmatprep.subr.mxu0 0.0
    %1305 = vmatpush2.msra.mxu0 0.0
    %1306 = vmatprep.subr.mxu0 0.0
    %1307 = vmatpush2.msra.mxu0 0.0
    %1308 = vmatprep.subr.mxu0 0.0
    %1309 = vmatpush2.msra.mxu0 0.0
    %1310 = vmatprep.subr.mxu0 0.0
    %1311 = vmatpush2.msra.mxu0 0.0
    %1312 = vmatprep.subr.mxu0 0.0
    %1313 = vmatpush2.msra.mxu0 0.0
    %1314 = vmatprep.subr.mxu0 0.0
    %1315 = vmatpush2.msra.mxu0 0.0
    %1316 = vmatprep.subr.mxu0 0.0
    %1317 = vmatpush2.msra.mxu0 0.0
    %1318 = vmatprep.subr.mxu0 0.0
    %1319 = vmatpush2.msra.mxu0 0.0
    %1320 = vmatprep.subr.mxu0 0.0
    %1321 = vmatpush2.msra.mxu0 0.0
    %1322 = vmatprep.subr.mxu0 0.0
    %1323 = vmatpush2.msra.mxu0 0.0
    %1324 = vmatprep.subr.mxu0 0.0
    %1325 = vmatpush2.msra.mxu0 0.0
    %1326 = vmatprep.subr.mxu0 0.0
    %1327 = vmatpush2.msra.mxu0 %v1053
    %1328 = vmatprep.subr.mxu0 0.0
    %1329 = vmatpush2.msra.mxu0 %v1052
    %1330 = vmatprep.subr.mxu0 0.0
    %1331 = vmatpush2.msra.mxu0 %v1051
    %1332 = vmatprep.subr.mxu0 0.0
    %1333 = vmatpush2.msra.mxu0 %v1050
    %1334 = vmatprep.subr.mxu0 0.0
    %1335 = vmatpush2.msra.mxu0 %v1049
    %1336 = vmatprep.mubr.f32.mxu0 %v1189
    %1337 = vmatmul.mubr.f32.gmra.mxu0 %v1103
    %v1338 = vpop.f32.mrf.mxu0
    %v1339 = vadd.f32 0.0, %v1338
    %v1340 = vpop.f32.mrf.mxu0
    %1341 = vmatprep.mubr.f32.mxu0 %v1192
    %1342 = vmatmul.mubr.f32.gmra.mxu0 %v1105
    %v1343 = vpop.f32.mrf.mxu0
    %v1344 = vadd.f32 0.0, %v1343
    %v1345 = vpop.f32.mrf.mxu0
    %1346 = vmatprep.mubr.f32.mxu0 %v1195
    %1347 = vmatmul.mubr.f32.gmra.mxu0 %v1107
    %v1348 = vpop.f32.mrf.mxu0
    %v1349 = vadd.f32 0.0, %v1348
    %v1350 = vpop.f32.mrf.mxu0
    %1351 = vmatprep.mubr.f32.mxu0 %v1198
    %1352 = vmatmul.mubr.f32.gmra.mxu0 %v1109
    %v1353 = vpop.f32.mrf.mxu0
    %v1354 = vadd.f32 0.0, %v1353
    %v1355 = vpop.f32.mrf.mxu0
    %1356 = vmatprep.mubr.f32.mxu0 %v1201
    %1357 = vmatmul.mubr.f32.gmra.mxu0 %v1111
    %v1358 = vpop.f32.mrf.mxu0
    %v1359 = vadd.f32 0.0, %v1358
    %v1360 = vpop.f32.mrf.mxu0
    %1361 = vmatprep.mubr.f32.mxu0 %v1204
    %1362 = vmatmul.mubr.f32.gmra.mxu0 %v1113
    %v1363 = vpop.f32.mrf.mxu0
    %v1364 = vadd.f32 0.0, %v1363
    %v1365 = vpop.f32.mrf.mxu0
    %1366 = vmatprep.mubr.f32.mxu0 %v1207
    %1367 = vmatmul.mubr.f32.gmra.mxu0 %v1115
    %v1368 = vpop.f32.mrf.mxu0
    %v1369 = vadd.f32 0.0, %v1368
    %v1370 = vpop.f32.mrf.mxu0
    %1371 = vmatprep.mubr.f32.mxu0 %v1210
    %1372 = vmatmul.mubr.f32.gmra.mxu0 %v1117
    %v1373 = vpop.f32.mrf.mxu0
    %v1374 = vadd.f32 0.0, %v1373
    %v1375 = vpop.f32.mrf.mxu0
    %1376 = vmatprep.mubr.f32.mxu0 %v1213
    %1377 = vmatmul.mubr.f32.gmra.mxu0 %v1119
    %v1378 = vpop.f32.mrf.mxu0
    %v1379 = vadd.f32 0.0, %v1378
    %v1380 = vpop.f32.mrf.mxu0
    %1381 = vmatprep.mubr.f32.mxu0 %v1216
    %1382 = vmatmul.mubr.f32.gmra.mxu0 %v1121
    %v1383 = vpop.f32.mrf.mxu0
    %v1384 = vadd.f32 0.0, %v1383
    %v1385 = vpop.f32.mrf.mxu0
    %1386 = vmatprep.mubr.f32.mxu0 %v1219
    %1387 = vmatmul.mubr.f32.gmra.mxu0 %v1123
    %v1388 = vpop.f32.mrf.mxu0
    %v1389 = vadd.f32 0.0, %v1388
    %v1390 = vpop.f32.mrf.mxu0
    %1391 = vmatprep.mubr.f32.mxu0 %v1222
    %1392 = vmatmul.mubr.f32.gmra.mxu0 %v1125
    %v1393 = vpop.f32.mrf.mxu0
    %v1394 = vadd.f32 0.0, %v1393
    %v1395 = vpop.f32.mrf.mxu0
    %1396 = vmatprep.mubr.f32.mxu0 %v1225
    %1397 = vmatmul.mubr.f32.gmra.mxu0 %v1127
    %v1398 = vpop.f32.mrf.mxu0
    %v1399 = vadd.f32 0.0, %v1398
    %v1400 = vpop.f32.mrf.mxu0
    %1401 = vmatprep.mubr.f32.mxu0 %v1228
    %1402 = vmatmul.mubr.f32.gmra.mxu0 %v1129
    %v1403 = vpop.f32.mrf.mxu0
    %v1404 = vadd.f32 0.0, %v1403
    %v1405 = vpop.f32.mrf.mxu0
    %1406 = vmatprep.mubr.f32.mxu0 %v1231
    %1407 = vmatmul.mubr.f32.gmra.mxu0 %v1131
    %v1408 = vpop.f32.mrf.mxu0
    %v1409 = vadd.f32 0.0, %v1408
    %v1410 = vpop.f32.mrf.mxu0
    %1411 = vmatprep.mubr.f32.mxu0 %v1234
    %1412 = vmatmul.mubr.f32.gmra.mxu0 %v1133
    %v1413 = vpop.f32.mrf.mxu0
    %v1414 = vadd.f32 0.0, %v1413
    %v1415 = vpop.f32.mrf.mxu0
    %1416 = vmatprep.mubr.f32.mxu0 %v1237
    %1417 = vmatmul.mubr.f32.gmra.mxu0 %v1135
    %v1418 = vpop.f32.mrf.mxu0
    %v1419 = vadd.f32 0.0, %v1418
    %v1420 = vpop.f32.mrf.mxu0
    %1421 = vmatprep.mubr.f32.mxu0 %v1240
    %1422 = vmatmul.mubr.f32.gmra.mxu0 %v1137
    %v1423 = vpop.f32.mrf.mxu0
    %v1424 = vadd.f32 0.0, %v1423
    %v1425 = vpop.f32.mrf.mxu0
    %1426 = vmatprep.mubr.f32.mxu0 %v1243
    %1427 = vmatmul.mubr.f32.gmra.mxu0 %v1139
    %v1428 = vpop.f32.mrf.mxu0
    %v1429 = vadd.f32 0.0, %v1428
    %v1430 = vpop.f32.mrf.mxu0
    %1431 = vmatprep.mubr.f32.mxu0 %v1246
    %1432 = vmatmul.mubr.f32.gmra.mxu0 %v1141
    %v1433 = vpop.f32.mrf.mxu0
    %v1434 = vadd.f32 0.0, %v1433
    %v1435 = vpop.f32.mrf.mxu0
    %1436 = vmatprep.mubr.f32.mxu0 %v1249
    %1437 = vmatmul.mubr.f32.gmra.mxu0 %v1143
    %v1438 = vpop.f32.mrf.mxu0
    %v1439 = vadd.f32 0.0, %v1438
    %v1440 = vpop.f32.mrf.mxu0
    %1441 = vmatprep.mubr.f32.mxu0 %v1252
    %1442 = vmatmul.mubr.f32.gmra.mxu0 %v1145
    %v1443 = vpop.f32.mrf.mxu0
    %v1444 = vadd.f32 0.0, %v1443
    %v1445 = vpop.f32.mrf.mxu0
    %1446 = vmatprep.mubr.f32.mxu0 %v1255
    %1447 = vmatmul.mubr.f32.gmra.mxu0 %v1147
    %v1448 = vpop.f32.mrf.mxu0
    %v1449 = vadd.f32 0.0, %v1448
    %v1450 = vpop.f32.mrf.mxu0
    %1451 = vmatprep.mubr.f32.mxu0 %v1258
    %1452 = vmatmul.mubr.f32.gmra.mxu0 %v1149
    %v1453 = vpop.f32.mrf.mxu0
    %v1454 = vadd.f32 0.0, %v1453
    %v1455 = vpop.f32.mrf.mxu0
    %1456 = vmatprep.mubr.f32.mxu0 %v1261
    %1457 = vmatmul.mubr.f32.gmra.mxu0 %v1151
    %v1458 = vpop.f32.mrf.mxu0
    %v1459 = vadd.f32 0.0, %v1458
    %v1460 = vpop.f32.mrf.mxu0
    %1461 = vmatprep.mubr.f32.mxu0 %v1264
    %1462 = vmatmul.mubr.f32.gmra.mxu0 %v1153
    %v1463 = vpop.f32.mrf.mxu0
    %v1464 = vadd.f32 0.0, %v1463
    %v1465 = vpop.f32.mrf.mxu0
    %1466 = vmatprep.mubr.f32.mxu0 %v1267
    %1467 = vmatmul.mubr.f32.gmra.mxu0 %v1155
    %v1468 = vpop.f32.mrf.mxu0
    %v1469 = vadd.f32 0.0, %v1468
    %v1470 = vpop.f32.mrf.mxu0
    %1471 = vmatprep.mubr.f32.mxu0 %v1270
    %1472 = vmatmul.mubr.f32.gmra.mxu0 %v1157
    %v1473 = vpop.f32.mrf.mxu0
    %v1474 = vadd.f32 0.0, %v1473
    %v1475 = vpop.f32.mrf.mxu0
    %1476 = vdwg.mxu0
    %1477 = vmatprep.subr.mxu0 0.0
    %1478 = vmatpush1.msra.mxu0 %v1055
    %1479 = vmatprep.subr.mxu0 0.0
    %1480 = vmatpush1.msra.mxu0 %v1054
    %1481 = vmatprep.subr.mxu0 0.0
    %1482 = vmatpush1.msra.mxu0 %v1053
    %1483 = vmatprep.subr.mxu0 0.0
    %1484 = vmatpush1.msra.mxu0 %v1052
    %1485 = vmatprep.subr.mxu0 0.0
    %1486 = vmatpush1.msra.mxu0 %v1051
    %1487 = vmatprep.subr.mxu0 0.0
    %1488 = vmatpush1.msra.mxu0 %v1050
    %1489 = vmatprep.subr.mxu0 0.0
    %1490 = vmatpush1.msra.mxu0 %v1049
    %1491 = vmatprep.subr.mxu0 0.0
    %1492 = vmatpush1.msra.mxu0 %v1048
    %1493 = vmatprep.subr.mxu0 0.0
    %1494 = vmatpush1.msra.mxu0 %v1047
    %1495 = vmatprep.subr.mxu0 0.0
    %1496 = vmatpush1.msra.mxu0 %v1046
    %1497 = vmatprep.subr.mxu0 0.0
    %1498 = vmatpush1.msra.mxu0 %v1045
    %1499 = vmatprep.subr.mxu0 0.0
    %1500 = vmatpush1.msra.mxu0 %v1044
    %1501 = vmatprep.subr.mxu0 0.0
    %1502 = vmatpush1.msra.mxu0 %v1043
    %1503 = vmatprep.subr.mxu0 0.0
    %1504 = vmatpush1.msra.mxu0 %v1042
    %1505 = vmatprep.subr.mxu0 0.0
    %1506 = vmatpush1.msra.mxu0 %v1041
    %1507 = vmatprep.subr.mxu0 0.0
    %1508 = vmatpush1.msra.mxu0 %v1040
    %1509 = vmatprep.subr.mxu0 0.0
    %1510 = vmatpush2.msra.mxu0 0.0
    %1511 = vmatprep.subr.mxu0 0.0
    %1512 = vmatpush2.msra.mxu0 0.0
    %1513 = vmatprep.subr.mxu0 0.0
    %1514 = vmatpush2.msra.mxu0 0.0
    %1515 = vmatprep.subr.mxu0 0.0
    %1516 = vmatpush2.msra.mxu0 0.0
    %1517 = vmatprep.subr.mxu0 0.0
    %1518 = vmatpush2.msra.mxu0 0.0
    %1519 = vmatprep.subr.mxu0 0.0
    %1520 = vmatpush2.msra.mxu0 0.0
    %1521 = vmatprep.subr.mxu0 0.0
    %1522 = vmatpush2.msra.mxu0 0.0
    %1523 = vmatprep.subr.mxu0 0.0
    %1524 = vmatpush2.msra.mxu0 0.0
    %1525 = vmatprep.subr.mxu0 0.0
    %1526 = vmatpush2.msra.mxu0 0.0
    %1527 = vmatprep.subr.mxu0 0.0
    %1528 = vmatpush2.msra.mxu0 0.0
    %1529 = vmatprep.subr.mxu0 0.0
    %1530 = vmatpush2.msra.mxu0 0.0
    %1531 = vmatprep.subr.mxu0 0.0
    %1532 = vmatpush2.msra.mxu0 %v1060
    %1533 = vmatprep.subr.mxu0 0.0
    %1534 = vmatpush2.msra.mxu0 %v1059
    %1535 = vmatprep.subr.mxu0 0.0
    %1536 = vmatpush2.msra.mxu0 %v1058
    %1537 = vmatprep.subr.mxu0 0.0
    %1538 = vmatpush2.msra.mxu0 %v1057
    %1539 = vmatprep.subr.mxu0 0.0
    %1540 = vmatpush2.msra.mxu0 %v1056
    %1541 = vmatprep.mubr.f32.mxu0 %v1189
    %1542 = vmatmul.mubr.f32.gmra.mxu0 %v1103
    %v1543 = vpop.f32.mrf.mxu0
    %v1544 = vadd.f32 0.0, %v1543
    %v1545 = vpop.f32.mrf.mxu0
    %1546 = vmatprep.mubr.f32.mxu0 %v1192
    %1547 = vmatmul.mubr.f32.gmra.mxu0 %v1105
    %v1548 = vpop.f32.mrf.mxu0
    %v1549 = vadd.f32 0.0, %v1548
    %v1550 = vpop.f32.mrf.mxu0
    %1551 = vmatprep.mubr.f32.mxu0 %v1195
    %1552 = vmatmul.mubr.f32.gmra.mxu0 %v1107
    %v1553 = vpop.f32.mrf.mxu0
    %v1554 = vadd.f32 0.0, %v1553
    %v1555 = vpop.f32.mrf.mxu0
    %1556 = vmatprep.mubr.f32.mxu0 %v1198
    %1557 = vmatmul.mubr.f32.gmra.mxu0 %v1109
    %v1558 = vpop.f32.mrf.mxu0
    %v1559 = vadd.f32 0.0, %v1558
    %v1560 = vpop.f32.mrf.mxu0
    %1561 = vmatprep.mubr.f32.mxu0 %v1201
    %1562 = vmatmul.mubr.f32.gmra.mxu0 %v1111
    %v1563 = vpop.f32.mrf.mxu0
    %v1564 = vadd.f32 0.0, %v1563
    %v1565 = vpop.f32.mrf.mxu0
    %1566 = vmatprep.mubr.f32.mxu0 %v1204
    %1567 = vmatmul.mubr.f32.gmra.mxu0 %v1113
    %v1568 = vpop.f32.mrf.mxu0
    %v1569 = vadd.f32 0.0, %v1568
    %v1570 = vpop.f32.mrf.mxu0
    %1571 = vmatprep.mubr.f32.mxu0 %v1207
    %1572 = vmatmul.mubr.f32.gmra.mxu0 %v1115
    %v1573 = vpop.f32.mrf.mxu0
    %v1574 = vadd.f32 0.0, %v1573
    %v1575 = vpop.f32.mrf.mxu0
    %1576 = vmatprep.mubr.f32.mxu0 %v1210
    %1577 = vmatmul.mubr.f32.gmra.mxu0 %v1117
    %v1578 = vpop.f32.mrf.mxu0
    %v1579 = vadd.f32 0.0, %v1578
    %v1580 = vpop.f32.mrf.mxu0
    %1581 = vmatprep.mubr.f32.mxu0 %v1213
    %1582 = vmatmul.mubr.f32.gmra.mxu0 %v1119
    %v1583 = vpop.f32.mrf.mxu0
    %v1584 = vadd.f32 0.0, %v1583
    %v1585 = vpop.f32.mrf.mxu0
    %1586 = vmatprep.mubr.f32.mxu0 %v1216
    %1587 = vmatmul.mubr.f32.gmra.mxu0 %v1121
    %v1588 = vpop.f32.mrf.mxu0
    %v1589 = vadd.f32 0.0, %v1588
    %v1590 = vpop.f32.mrf.mxu0
    %1591 = vmatprep.mubr.f32.mxu0 %v1219
    %1592 = vmatmul.mubr.f32.gmra.mxu0 %v1123
    %v1593 = vpop.f32.mrf.mxu0
    %v1594 = vadd.f32 0.0, %v1593
    %v1595 = vpop.f32.mrf.mxu0
    %1596 = vmatprep.mubr.f32.mxu0 %v1222
    %1597 = vmatmul.mubr.f32.gmra.mxu0 %v1125
    %v1598 = vpop.f32.mrf.mxu0
    %v1599 = vadd.f32 0.0, %v1598
    %v1600 = vpop.f32.mrf.mxu0
    %1601 = vmatprep.mubr.f32.mxu0 %v1225
    %1602 = vmatmul.mubr.f32.gmra.mxu0 %v1127
    %v1603 = vpop.f32.mrf.mxu0
    %v1604 = vadd.f32 0.0, %v1603
    %v1605 = vpop.f32.mrf.mxu0
    %1606 = vmatprep.mubr.f32.mxu0 %v1228
    %1607 = vmatmul.mubr.f32.gmra.mxu0 %v1129
    %v1608 = vpop.f32.mrf.mxu0
    %v1609 = vadd.f32 0.0, %v1608
    %v1610 = vpop.f32.mrf.mxu0
    %1611 = vmatprep.mubr.f32.mxu0 %v1231
    %1612 = vmatmul.mubr.f32.gmra.mxu0 %v1131
    %v1613 = vpop.f32.mrf.mxu0
    %v1614 = vadd.f32 0.0, %v1613
    %v1615 = vpop.f32.mrf.mxu0
    %1616 = vmatprep.mubr.f32.mxu0 %v1234
    %1617 = vmatmul.mubr.f32.gmra.mxu0 %v1133
    %v1618 = vpop.f32.mrf.mxu0
    %v1619 = vadd.f32 0.0, %v1618
    %v1620 = vpop.f32.mrf.mxu0
    %1621 = vmatprep.mubr.f32.mxu0 %v1237
    %1622 = vmatmul.mubr.f32.gmra.mxu0 %v1135
    %v1623 = vpop.f32.mrf.mxu0
    %v1624 = vadd.f32 0.0, %v1623
    %v1625 = vpop.f32.mrf.mxu0
    %1626 = vmatprep.mubr.f32.mxu0 %v1240
    %1627 = vmatmul.mubr.f32.gmra.mxu0 %v1137
    %v1628 = vpop.f32.mrf.mxu0
    %v1629 = vadd.f32 0.0, %v1628
    %v1630 = vpop.f32.mrf.mxu0
    %1631 = vmatprep.mubr.f32.mxu0 %v1243
    %1632 = vmatmul.mubr.f32.gmra.mxu0 %v1139
    %v1633 = vpop.f32.mrf.mxu0
    %v1634 = vadd.f32 0.0, %v1633
    %v1635 = vpop.f32.mrf.mxu0
    %1636 = vmatprep.mubr.f32.mxu0 %v1246
    %1637 = vmatmul.mubr.f32.gmra.mxu0 %v1141
    %v1638 = vpop.f32.mrf.mxu0
    %v1639 = vadd.f32 0.0, %v1638
    %v1640 = vpop.f32.mrf.mxu0
    %1641 = vmatprep.mubr.f32.mxu0 %v1249
    %1642 = vmatmul.mubr.f32.gmra.mxu0 %v1143
    %v1643 = vpop.f32.mrf.mxu0
    %v1644 = vadd.f32 0.0, %v1643
    %v1645 = vpop.f32.mrf.mxu0
    %1646 = vmatprep.mubr.f32.mxu0 %v1252
    %1647 = vmatmul.mubr.f32.gmra.mxu0 %v1145
    %v1648 = vpop.f32.mrf.mxu0
    %v1649 = vadd.f32 0.0, %v1648
    %v1650 = vpop.f32.mrf.mxu0
    %1651 = vmatprep.mubr.f32.mxu0 %v1255
    %1652 = vmatmul.mubr.f32.gmra.mxu0 %v1147
    %v1653 = vpop.f32.mrf.mxu0
    %v1654 = vadd.f32 0.0, %v1653
    %v1655 = vpop.f32.mrf.mxu0
    %1656 = vmatprep.mubr.f32.mxu0 %v1258
    %1657 = vmatmul.mubr.f32.gmra.mxu0 %v1149
    %v1658 = vpop.f32.mrf.mxu0
    %v1659 = vadd.f32 0.0, %v1658
    %v1660 = vpop.f32.mrf.mxu0
    %1661 = vmatprep.mubr.f32.mxu0 %v1261
    %1662 = vmatmul.mubr.f32.gmra.mxu0 %v1151
    %v1663 = vpop.f32.mrf.mxu0
    %v1664 = vadd.f32 0.0, %v1663
    %v1665 = vpop.f32.mrf.mxu0
    %1666 = vmatprep.mubr.f32.mxu0 %v1264
    %1667 = vmatmul.mubr.f32.gmra.mxu0 %v1153
    %v1668 = vpop.f32.mrf.mxu0
    %v1669 = vadd.f32 0.0, %v1668
    %v1670 = vpop.f32.mrf.mxu0
    %1671 = vmatprep.mubr.f32.mxu0 %v1267
    %1672 = vmatmul.mubr.f32.gmra.mxu0 %v1155
    %v1673 = vpop.f32.mrf.mxu0
    %v1674 = vadd.f32 0.0, %v1673
    %v1675 = vpop.f32.mrf.mxu0
    %1676 = vmatprep.mubr.f32.mxu0 %v1270
    %1677 = vmatmul.mubr.f32.gmra.mxu0 %v1157
    %v1678 = vpop.f32.mrf.mxu0
    %v1679 = vadd.f32 0.0, %v1678
    %v1680 = vpop.f32.mrf.mxu0
    %1681 = vdwg.mxu0
    %v1682 = vmax.f32 %v1339, %v1544
    %v1683 = vmax.f32 %v1344, %v1549
    %v1684 = vmax.f32 %v1349, %v1554
    %v1685 = vmax.f32 %v1354, %v1559
    %v1686 = vmax.f32 %v1359, %v1564
    %v1687 = vmax.f32 %v1364, %v1569
    %v1688 = vmax.f32 %v1369, %v1574
    %v1689 = vmax.f32 %v1374, %v1579
    %v1690 = vmax.f32 %v1379, %v1584
    %v1691 = vmax.f32 %v1384, %v1589
    %v1692 = vmax.f32 %v1389, %v1594
    %v1693 = vmax.f32 %v1394, %v1599
    %v1694 = vmax.f32 %v1399, %v1604
    %v1695 = vmax.f32 %v1404, %v1609
    %v1696 = vmax.f32 %v1409, %v1614
    %v1697 = vmax.f32 %v1414, %v1619
    %v1698 = vmax.f32 %v1419, %v1624
    %v1699 = vmax.f32 %v1424, %v1629
    %v1700 = vmax.f32 %v1429, %v1634
    %v1701 = vmax.f32 %v1434, %v1639
    %v1702 = vmax.f32 %v1439, %v1644
    %v1703 = vmax.f32 %v1444, %v1649
    %v1704 = vmax.f32 %v1449, %v1654
    %v1705 = vmax.f32 %v1454, %v1659
    %v1706 = vmax.f32 %v1459, %v1664
    %v1707 = vmax.f32 %v1464, %v1669
    %v1708 = vmax.f32 %v1469, %v1674
    %v1709 = vmax.f32 %v1474, %v1679
    %1711 = vset.pattern.permute.xlu0 0
    %1712 = vperm.xlu0 %1711, %v1159
    %v1713 = vpop.permute.xlu0 %1712
    %1716 = vset.pattern.permute.xlu0 0
    %1717 = vperm.xlu0 %1716, %v1160
    %v1718 = vpop.permute.xlu0 %1717
    %1721 = vset.pattern.permute.xlu0 0
    %1722 = vperm.xlu0 %1721, %v1161
    %v1723 = vpop.permute.xlu0 %1722
    %1726 = vset.pattern.permute.xlu0 0
    %1727 = vperm.xlu0 %1726, %v1162
    %v1728 = vpop.permute.xlu0 %1727
    %1731 = vset.pattern.permute.xlu0 0
    %1732 = vperm.xlu0 %1731, %v1163
    %v1733 = vpop.permute.xlu0 %1732
    %1736 = vset.pattern.permute.xlu0 0
    %1737 = vperm.xlu0 %1736, %v1164
    %v1738 = vpop.permute.xlu0 %1737
    %1741 = vset.pattern.permute.xlu0 0
    %1742 = vperm.xlu0 %1741, %v1165
    %v1743 = vpop.permute.xlu0 %1742
    %1746 = vset.pattern.permute.xlu0 0
    %1747 = vperm.xlu0 %1746, %v1166
    %v1748 = vpop.permute.xlu0 %1747
    %1751 = vset.pattern.permute.xlu0 0
    %1752 = vperm.xlu0 %1751, %v1167
    %v1753 = vpop.permute.xlu0 %1752
    %1756 = vset.pattern.permute.xlu0 0
    %1757 = vperm.xlu0 %1756, %v1168
    %v1758 = vpop.permute.xlu0 %1757
    %1761 = vset.pattern.permute.xlu0 0
    %1762 = vperm.xlu0 %1761, %v1169
    %v1763 = vpop.permute.xlu0 %1762
    %1766 = vset.pattern.permute.xlu0 0
    %1767 = vperm.xlu0 %1766, %v1170
    %v1768 = vpop.permute.xlu0 %1767
    %1771 = vset.pattern.permute.xlu0 0
    %1772 = vperm.xlu0 %1771, %v1171
    %v1773 = vpop.permute.xlu0 %1772
    %1776 = vset.pattern.permute.xlu0 0
    %1777 = vperm.xlu0 %1776, %v1172
    %v1778 = vpop.permute.xlu0 %1777
    %1781 = vset.pattern.permute.xlu0 0
    %1782 = vperm.xlu0 %1781, %v1173
    %v1783 = vpop.permute.xlu0 %1782
    %1786 = vset.pattern.permute.xlu0 0
    %1787 = vperm.xlu0 %1786, %v1174
    %v1788 = vpop.permute.xlu0 %1787
    %1791 = vset.pattern.permute.xlu0 0
    %1792 = vperm.xlu0 %1791, %v1175
    %v1793 = vpop.permute.xlu0 %1792
    %1796 = vset.pattern.permute.xlu0 0
    %1797 = vperm.xlu0 %1796, %v1176
    %v1798 = vpop.permute.xlu0 %1797
    %1801 = vset.pattern.permute.xlu0 0
    %1802 = vperm.xlu0 %1801, %v1177
    %v1803 = vpop.permute.xlu0 %1802
    %1806 = vset.pattern.permute.xlu0 0
    %1807 = vperm.xlu0 %1806, %v1178
    %v1808 = vpop.permute.xlu0 %1807
    %1811 = vset.pattern.permute.xlu0 0
    %1812 = vperm.xlu0 %1811, %v1179
    %v1813 = vpop.permute.xlu0 %1812
    %1816 = vset.pattern.permute.xlu0 0
    %1817 = vperm.xlu0 %1816, %v1180
    %v1818 = vpop.permute.xlu0 %1817
    %1821 = vset.pattern.permute.xlu0 0
    %1822 = vperm.xlu0 %1821, %v1181
    %v1823 = vpop.permute.xlu0 %1822
    %1826 = vset.pattern.permute.xlu0 0
    %1827 = vperm.xlu0 %1826, %v1182
    %v1828 = vpop.permute.xlu0 %1827
    %1831 = vset.pattern.permute.xlu0 0
    %1832 = vperm.xlu0 %1831, %v1183
    %v1833 = vpop.permute.xlu0 %1832
    %1836 = vset.pattern.permute.xlu0 0
    %1837 = vperm.xlu0 %1836, %v1184
    %v1838 = vpop.permute.xlu0 %1837
    %1841 = vset.pattern.permute.xlu0 0
    %1842 = vperm.xlu0 %1841, %v1185
    %v1843 = vpop.permute.xlu0 %1842
    %1846 = vset.pattern.permute.xlu0 0
    %1847 = vperm.xlu0 %1846, %v1186
    %v1848 = vpop.permute.xlu0 %1847
    %v1850 = vadd.f32 %v1682, %v1713
    %v1851 = vadd.f32 %v1683, %v1718
    %v1852 = vadd.f32 %v1684, %v1723
    %v1853 = vadd.f32 %v1685, %v1728
    %v1854 = vadd.f32 %v1686, %v1733
    %v1855 = vadd.f32 %v1687, %v1738
    %v1856 = vadd.f32 %v1688, %v1743
    %v1857 = vadd.f32 %v1689, %v1748
    %v1858 = vadd.f32 %v1690, %v1753
    %v1859 = vadd.f32 %v1691, %v1758
    %v1860 = vadd.f32 %v1692, %v1763
    %v1861 = vadd.f32 %v1693, %v1768
    %v1862 = vadd.f32 %v1694, %v1773
    %v1863 = vadd.f32 %v1695, %v1778
    %v1864 = vadd.f32 %v1696, %v1783
    %v1865 = vadd.f32 %v1697, %v1788
    %v1866 = vadd.f32 %v1698, %v1793
    %v1867 = vadd.f32 %v1699, %v1798
    %v1868 = vadd.f32 %v1700, %v1803
    %v1869 = vadd.f32 %v1701, %v1808
    %v1870 = vadd.f32 %v1702, %v1813
    %v1871 = vadd.f32 %v1703, %v1818
    %v1872 = vadd.f32 %v1704, %v1823
    %v1873 = vadd.f32 %v1705, %v1828
    %v1874 = vadd.f32 %v1706, %v1833
    %v1875 = vadd.f32 %v1707, %v1838
    %v1876 = vadd.f32 %v1708, %v1843
    %v1877 = vadd.f32 %v1709, %v1848
    %v1878 = vmax.f32 %v1850, 0.0
    %v1879 = vmax.f32 %v1851, 0.0
    %v1880 = vmax.f32 %v1852, 0.0
    %v1881 = vmax.f32 %v1853, 0.0
    %v1882 = vmax.f32 %v1854, 0.0
    %v1883 = vmax.f32 %v1855, 0.0
    %v1884 = vmax.f32 %v1856, 0.0
    %v1885 = vmax.f32 %v1857, 0.0
    %v1886 = vmax.f32 %v1858, 0.0
    %v1887 = vmax.f32 %v1859, 0.0
    %v1888 = vmax.f32 %v1860, 0.0
    %v1889 = vmax.f32 %v1861, 0.0
    %v1890 = vmax.f32 %v1862, 0.0
    %v1891 = vmax.f32 %v1863, 0.0
    %v1892 = vmax.f32 %v1864, 0.0
    %v1893 = vmax.f32 %v1865, 0.0
    %v1894 = vmax.f32 %v1866, 0.0
    %v1895 = vmax.f32 %v1867, 0.0
    %v1896 = vmax.f32 %v1868, 0.0
    %v1897 = vmax.f32 %v1869, 0.0
    %v1898 = vmax.f32 %v1870, 0.0
    %v1899 = vmax.f32 %v1871, 0.0
    %v1900 = vmax.f32 %v1872, 0.0
    %v1901 = vmax.f32 %v1873, 0.0
    %v1902 = vmax.f32 %v1874, 0.0
    %v1903 = vmax.f32 %v1875, 0.0
    %v1904 = vmax.f32 %v1876, 0.0
    %v1905 = vmax.f32 %v1877, 0.0
    %1906 = vmatprep.subr.mxu0 0.0
    %1907 = vmatpush1.msra.mxu0 %v1062
    %1908 = vmatprep.subr.mxu0 0.0
    %1909 = vmatpush1.msra.mxu0 %v1061
    %1910 = vmatprep.subr.mxu0 0.0
    %1911 = vmatpush1.msra.mxu0 %v1060
    %1912 = vmatprep.subr.mxu0 0.0
    %1913 = vmatpush1.msra.mxu0 %v1059
    %1914 = vmatprep.subr.mxu0 0.0
    %1915 = vmatpush1.msra.mxu0 %v1058
    %1916 = vmatprep.subr.mxu0 0.0
    %1917 = vmatpush1.msra.mxu0 %v1057
    %1918 = vmatprep.subr.mxu0 0.0
    %1919 = vmatpush1.msra.mxu0 %v1056
    %1920 = vmatprep.subr.mxu0 0.0
    %1921 = vmatpush1.msra.mxu0 %v1055
    %1922 = vmatprep.subr.mxu0 0.0
    %1923 = vmatpush1.msra.mxu0 %v1054
    %1924 = vmatprep.subr.mxu0 0.0
    %1925 = vmatpush1.msra.mxu0 %v1053
    %1926 = vmatprep.subr.mxu0 0.0
    %1927 = vmatpush1.msra.mxu0 %v1052
    %1928 = vmatprep.subr.mxu0 0.0
    %1929 = vmatpush1.msra.mxu0 %v1051
    %1930 = vmatprep.subr.mxu0 0.0
    %1931 = vmatpush1.msra.mxu0 %v1050
    %1932 = vmatprep.subr.mxu0 0.0
    %1933 = vmatpush1.msra.mxu0 %v1049
    %1934 = vmatprep.subr.mxu0 0.0
    %1935 = vmatpush1.msra.mxu0 %v1048
    %1936 = vmatprep.subr.mxu0 0.0
    %1937 = vmatpush1.msra.mxu0 %v1047
    %1938 = vmatprep.subr.mxu0 0.0
    %1939 = vmatpush2.msra.mxu0 0.0
    %1940 = vmatprep.subr.mxu0 0.0
    %1941 = vmatpush2.msra.mxu0 0.0
    %1942 = vmatprep.subr.mxu0 0.0
    %1943 = vmatpush2.msra.mxu0 0.0
    %1944 = vmatprep.subr.mxu0 0.0
    %1945 = vmatpush2.msra.mxu0 0.0
    %1946 = vmatprep.subr.mxu0 0.0
    %1947 = vmatpush2.msra.mxu0 0.0
    %1948 = vmatprep.subr.mxu0 0.0
    %1949 = vmatpush2.msra.mxu0 0.0
    %1950 = vmatprep.subr.mxu0 0.0
    %1951 = vmatpush2.msra.mxu0 0.0
    %1952 = vmatprep.subr.mxu0 0.0
    %1953 = vmatpush2.msra.mxu0 0.0
    %1954 = vmatprep.subr.mxu0 0.0
    %1955 = vmatpush2.msra.mxu0 0.0
    %1956 = vmatprep.subr.mxu0 0.0
    %1957 = vmatpush2.msra.mxu0 0.0
    %1958 = vmatprep.subr.mxu0 0.0
    %1959 = vmatpush2.msra.mxu0 0.0
    %1960 = vmatprep.subr.mxu0 0.0
    %1961 = vmatpush2.msra.mxu0 %v1067
    %1962 = vmatprep.subr.mxu0 0.0
    %1963 = vmatpush2.msra.mxu0 %v1066
    %1964 = vmatprep.subr.mxu0 0.0
    %1965 = vmatpush2.msra.mxu0 %v1065
    %1966 = vmatprep.subr.mxu0 0.0
    %1967 = vmatpush2.msra.mxu0 %v1064
    %1968 = vmatprep.subr.mxu0 0.0
    %1969 = vmatpush2.msra.mxu0 %v1063
    %1970 = vmatprep.mubr.f32.mxu0 %v1189
    %1971 = vmatmul.mubr.f32.gmra.mxu0 %v1103
    %v1972 = vpop.f32.mrf.mxu0
    %v1973 = vadd.f32 0.0, %v1972
    %v1974 = vpop.f32.mrf.mxu0
    %1975 = vmatprep.mubr.f32.mxu0 %v1192
    %1976 = vmatmul.mubr.f32.gmra.mxu0 %v1105
    %v1977 = vpop.f32.mrf.mxu0
    %v1978 = vadd.f32 0.0, %v1977
    %v1979 = vpop.f32.mrf.mxu0
    %1980 = vmatprep.mubr.f32.mxu0 %v1195
    %1981 = vmatmul.mubr.f32.gmra.mxu0 %v1107
    %v1982 = vpop.f32.mrf.mxu0
    %v1983 = vadd.f32 0.0, %v1982
    %v1984 = vpop.f32.mrf.mxu0
    %1985 = vmatprep.mubr.f32.mxu0 %v1198
    %1986 = vmatmul.mubr.f32.gmra.mxu0 %v1109
    %v1987 = vpop.f32.mrf.mxu0
    %v1988 = vadd.f32 0.0, %v1987
    %v1989 = vpop.f32.mrf.mxu0
    %1990 = vmatprep.mubr.f32.mxu0 %v1201
    %1991 = vmatmul.mubr.f32.gmra.mxu0 %v1111
    %v1992 = vpop.f32.mrf.mxu0
    %v1993 = vadd.f32 0.0, %v1992
    %v1994 = vpop.f32.mrf.mxu0
    %1995 = vmatprep.mubr.f32.mxu0 %v1204
    %1996 = vmatmul.mubr.f32.gmra.mxu0 %v1113
    %v1997 = vpop.f32.mrf.mxu0
    %v1998 = vadd.f32 0.0, %v1997
    %v1999 = vpop.f32.mrf.mxu0
    %2000 = vmatprep.mubr.f32.mxu0 %v1207
    %2001 = vmatmul.mubr.f32.gmra.mxu0 %v1115
    %v2002 = vpop.f32.mrf.mxu0
    %v2003 = vadd.f32 0.0, %v2002
    %v2004 = vpop.f32.mrf.mxu0
    %2005 = vmatprep.mubr.f32.mxu0 %v1210
    %2006 = vmatmul.mubr.f32.gmra.mxu0 %v1117
    %v2007 = vpop.f32.mrf.mxu0
    %v2008 = vadd.f32 0.0, %v2007
    %v2009 = vpop.f32.mrf.mxu0
    %2010 = vmatprep.mubr.f32.mxu0 %v1213
    %2011 = vmatmul.mubr.f32.gmra.mxu0 %v1119
    %v2012 = vpop.f32.mrf.mxu0
    %v2013 = vadd.f32 0.0, %v2012
    %v2014 = vpop.f32.mrf.mxu0
    %2015 = vmatprep.mubr.f32.mxu0 %v1216
    %2016 = vmatmul.mubr.f32.gmra.mxu0 %v1121
    %v2017 = vpop.f32.mrf.mxu0
    %v2018 = vadd.f32 0.0, %v2017
    %v2019 = vpop.f32.mrf.mxu0
    %2020 = vmatprep.mubr.f32.mxu0 %v1219
    %2021 = vmatmul.mubr.f32.gmra.mxu0 %v1123
    %v2022 = vpop.f32.mrf.mxu0
    %v2023 = vadd.f32 0.0, %v2022
    %v2024 = vpop.f32.mrf.mxu0
    %2025 = vmatprep.mubr.f32.mxu0 %v1222
    %2026 = vmatmul.mubr.f32.gmra.mxu0 %v1125
    %v2027 = vpop.f32.mrf.mxu0
    %v2028 = vadd.f32 0.0, %v2027
    %v2029 = vpop.f32.mrf.mxu0
    %2030 = vmatprep.mubr.f32.mxu0 %v1225
    %2031 = vmatmul.mubr.f32.gmra.mxu0 %v1127
    %v2032 = vpop.f32.mrf.mxu0
    %v2033 = vadd.f32 0.0, %v2032
    %v2034 = vpop.f32.mrf.mxu0
    %2035 = vmatprep.mubr.f32.mxu0 %v1228
    %2036 = vmatmul.mubr.f32.gmra.mxu0 %v1129
    %v2037 = vpop.f32.mrf.mxu0
    %v2038 = vadd.f32 0.0, %v2037
    %v2039 = vpop.f32.mrf.mxu0
    %2040 = vmatprep.mubr.f32.mxu0 %v1231
    %2041 = vmatmul.mubr.f32.gmra.mxu0 %v1131
    %v2042 = vpop.f32.mrf.mxu0
    %v2043 = vadd.f32 0.0, %v2042
    %v2044 = vpop.f32.mrf.mxu0
    %2045 = vmatprep.mubr.f32.mxu0 %v1234
    %2046 = vmatmul.mubr.f32.gmra.mxu0 %v1133
    %v2047 = vpop.f32.mrf.mxu0
    %v2048 = vadd.f32 0.0, %v2047
    %v2049 = vpop.f32.mrf.mxu0
    %2050 = vmatprep.mubr.f32.mxu0 %v1237
    %2051 = vmatmul.mubr.f32.gmra.mxu0 %v1135
    %v2052 = vpop.f32.mrf.mxu0
    %v2053 = vadd.f32 0.0, %v2052
    %v2054 = vpop.f32.mrf.mxu0
    %2055 = vmatprep.mubr.f32.mxu0 %v1240
    %2056 = vmatmul.mubr.f32.gmra.mxu0 %v1137
    %v2057 = vpop.f32.mrf.mxu0
    %v2058 = vadd.f32 0.0, %v2057
    %v2059 = vpop.f32.mrf.mxu0
    %2060 = vmatprep.mubr.f32.mxu0 %v1243
    %2061 = vmatmul.mubr.f32.gmra.mxu0 %v1139
    %v2062 = vpop.f32.mrf.mxu0
    %v2063 = vadd.f32 0.0, %v2062
    %v2064 = vpop.f32.mrf.mxu0
    %2065 = vmatprep.mubr.f32.mxu0 %v1246
    %2066 = vmatmul.mubr.f32.gmra.mxu0 %v1141
    %v2067 = vpop.f32.mrf.mxu0
    %v2068 = vadd.f32 0.0, %v2067
    %v2069 = vpop.f32.mrf.mxu0
    %2070 = vmatprep.mubr.f32.mxu0 %v1249
    %2071 = vmatmul.mubr.f32.gmra.mxu0 %v1143
    %v2072 = vpop.f32.mrf.mxu0
    %v2073 = vadd.f32 0.0, %v2072
    %v2074 = vpop.f32.mrf.mxu0
    %2075 = vmatprep.mubr.f32.mxu0 %v1252
    %2076 = vmatmul.mubr.f32.gmra.mxu0 %v1145
    %v2077 = vpop.f32.mrf.mxu0
    %v2078 = vadd.f32 0.0, %v2077
    %v2079 = vpop.f32.mrf.mxu0
    %2080 = vmatprep.mubr.f32.mxu0 %v1255
    %2081 = vmatmul.mubr.f32.gmra.mxu0 %v1147
    %v2082 = vpop.f32.mrf.mxu0
    %v2083 = vadd.f32 0.0, %v2082
    %v2084 = vpop.f32.mrf.mxu0
    %2085 = vmatprep.mubr.f32.mxu0 %v1258
    %2086 = vmatmul.mubr.f32.gmra.mxu0 %v1149
    %v2087 = vpop.f32.mrf.mxu0
    %v2088 = vadd.f32 0.0, %v2087
    %v2089 = vpop.f32.mrf.mxu0
    %2090 = vmatprep.mubr.f32.mxu0 %v1261
    %2091 = vmatmul.mubr.f32.gmra.mxu0 %v1151
    %v2092 = vpop.f32.mrf.mxu0
    %v2093 = vadd.f32 0.0, %v2092
    %v2094 = vpop.f32.mrf.mxu0
    %2095 = vmatprep.mubr.f32.mxu0 %v1264
    %2096 = vmatmul.mubr.f32.gmra.mxu0 %v1153
    %v2097 = vpop.f32.mrf.mxu0
    %v2098 = vadd.f32 0.0, %v2097
    %v2099 = vpop.f32.mrf.mxu0
    %2100 = vmatprep.mubr.f32.mxu0 %v1267
    %2101 = vmatmul.mubr.f32.gmra.mxu0 %v1155
    %v2102 = vpop.f32.mrf.mxu0
    %v2103 = vadd.f32 0.0, %v2102
    %v2104 = vpop.f32.mrf.mxu0
    %2105 = vmatprep.mubr.f32.mxu0 %v1270
    %2106 = vmatmul.mubr.f32.gmra.mxu0 %v1157
    %v2107 = vpop.f32.mrf.mxu0
    %v2108 = vadd.f32 0.0, %v2107
    %v2109 = vpop.f32.mrf.mxu0
    %2110 = vdwg.mxu0
    %2111 = vmatprep.subr.mxu0 0.0
    %2112 = vmatpush1.msra.mxu0 %v1069
    %2113 = vmatprep.subr.mxu0 0.0
    %2114 = vmatpush1.msra.mxu0 %v1068
    %2115 = vmatprep.subr.mxu0 0.0
    %2116 = vmatpush1.msra.mxu0 %v1067
    %2117 = vmatprep.subr.mxu0 0.0
    %2118 = vmatpush1.msra.mxu0 %v1066
    %2119 = vmatprep.subr.mxu0 0.0
    %2120 = vmatpush1.msra.mxu0 %v1065
    %2121 = vmatprep.subr.mxu0 0.0
    %2122 = vmatpush1.msra.mxu0 %v1064
    %2123 = vmatprep.subr.mxu0 0.0
    %2124 = vmatpush1.msra.mxu0 %v1063
    %2125 = vmatprep.subr.mxu0 0.0
    %2126 = vmatpush1.msra.mxu0 %v1062
    %2127 = vmatprep.subr.mxu0 0.0
    %2128 = vmatpush1.msra.mxu0 %v1061
    %2129 = vmatprep.subr.mxu0 0.0
    %2130 = vmatpush1.msra.mxu0 %v1060
    %2131 = vmatprep.subr.mxu0 0.0
    %2132 = vmatpush1.msra.mxu0 %v1059
    %2133 = vmatprep.subr.mxu0 0.0
    %2134 = vmatpush1.msra.mxu0 %v1058
    %2135 = vmatprep.subr.mxu0 0.0
    %2136 = vmatpush1.msra.mxu0 %v1057
    %2137 = vmatprep.subr.mxu0 0.0
    %2138 = vmatpush1.msra.mxu0 %v1056
    %2139 = vmatprep.subr.mxu0 0.0
    %2140 = vmatpush1.msra.mxu0 %v1055
    %2141 = vmatprep.subr.mxu0 0.0
    %2142 = vmatpush1.msra.mxu0 %v1054
    %2143 = vmatprep.subr.mxu0 0.0
    %2144 = vmatpush2.msra.mxu0 0.0
    %2145 = vmatprep.subr.mxu0 0.0
    %2146 = vmatpush2.msra.mxu0 0.0
    %2147 = vmatprep.subr.mxu0 0.0
    %2148 = vmatpush2.msra.mxu0 0.0
    %2149 = vmatprep.subr.mxu0 0.0
    %2150 = vmatpush2.msra.mxu0 0.0
    %2151 = vmatprep.subr.mxu0 0.0
    %2152 = vmatpush2.msra.mxu0 0.0
    %2153 = vmatprep.subr.mxu0 0.0
    %2154 = vmatpush2.msra.mxu0 0.0
    %2155 = vmatprep.subr.mxu0 0.0
    %2156 = vmatpush2.msra.mxu0 0.0
    %2157 = vmatprep.subr.mxu0 0.0
    %2158 = vmatpush2.msra.mxu0 0.0
    %2159 = vmatprep.subr.mxu0 0.0
    %2160 = vmatpush2.msra.mxu0 0.0
    %2161 = vmatprep.subr.mxu0 0.0
    %2162 = vmatpush2.msra.mxu0 0.0
    %2163 = vmatprep.subr.mxu0 0.0
    %2164 = vmatpush2.msra.mxu0 0.0
    %2165 = vmatprep.subr.mxu0 0.0
    %2166 = vmatpush2.msra.mxu0 %v1074
    %2167 = vmatprep.subr.mxu0 0.0
    %2168 = vmatpush2.msra.mxu0 %v1073
    %2169 = vmatprep.subr.mxu0 0.0
    %2170 = vmatpush2.msra.mxu0 %v1072
    %2171 = vmatprep.subr.mxu0 0.0
    %2172 = vmatpush2.msra.mxu0 %v1071
    %2173 = vmatprep.subr.mxu0 0.0
    %2174 = vmatpush2.msra.mxu0 %v1070
    %2175 = vmatprep.mubr.f32.mxu0 %v1189
    %2176 = vmatmul.mubr.f32.gmra.mxu0 %v1103
    %v2177 = vpop.f32.mrf.mxu0
    %v2178 = vadd.f32 0.0, %v2177
    %v2179 = vpop.f32.mrf.mxu0
    %2180 = vmatprep.mubr.f32.mxu0 %v1192
    %2181 = vmatmul.mubr.f32.gmra.mxu0 %v1105
    %v2182 = vpop.f32.mrf.mxu0
    %v2183 = vadd.f32 0.0, %v2182
    %v2184 = vpop.f32.mrf.mxu0
    %2185 = vmatprep.mubr.f32.mxu0 %v1195
    %2186 = vmatmul.mubr.f32.gmra.mxu0 %v1107
    %v2187 = vpop.f32.mrf.mxu0
    %v2188 = vadd.f32 0.0, %v2187
    %v2189 = vpop.f32.mrf.mxu0
    %2190 = vmatprep.mubr.f32.mxu0 %v1198
    %2191 = vmatmul.mubr.f32.gmra.mxu0 %v1109
    %v2192 = vpop.f32.mrf.mxu0
    %v2193 = vadd.f32 0.0, %v2192
    %v2194 = vpop.f32.mrf.mxu0
    %2195 = vmatprep.mubr.f32.mxu0 %v1201
    %2196 = vmatmul.mubr.f32.gmra.mxu0 %v1111
    %v2197 = vpop.f32.mrf.mxu0
    %v2198 = vadd.f32 0.0, %v2197
    %v2199 = vpop.f32.mrf.mxu0
    %2200 = vmatprep.mubr.f32.mxu0 %v1204
    %2201 = vmatmul.mubr.f32.gmra.mxu0 %v1113
    %v2202 = vpop.f32.mrf.mxu0
    %v2203 = vadd.f32 0.0, %v2202
    %v2204 = vpop.f32.mrf.mxu0
    %2205 = vmatprep.mubr.f32.mxu0 %v1207
    %2206 = vmatmul.mubr.f32.gmra.mxu0 %v1115
    %v2207 = vpop.f32.mrf.mxu0
    %v2208 = vadd.f32 0.0, %v2207
    %v2209 = vpop.f32.mrf.mxu0
    %2210 = vmatprep.mubr.f32.mxu0 %v1210
    %2211 = vmatmul.mubr.f32.gmra.mxu0 %v1117
    %v2212 = vpop.f32.mrf.mxu0
    %v2213 = vadd.f32 0.0, %v2212
    %v2214 = vpop.f32.mrf.mxu0
    %2215 = vmatprep.mubr.f32.mxu0 %v1213
    %2216 = vmatmul.mubr.f32.gmra.mxu0 %v1119
    %v2217 = vpop.f32.mrf.mxu0
    %v2218 = vadd.f32 0.0, %v2217
    %v2219 = vpop.f32.mrf.mxu0
    %2220 = vmatprep.mubr.f32.mxu0 %v1216
    %2221 = vmatmul.mubr.f32.gmra.mxu0 %v1121
    %v2222 = vpop.f32.mrf.mxu0
    %v2223 = vadd.f32 0.0, %v2222
    %v2224 = vpop.f32.mrf.mxu0
    %2225 = vmatprep.mubr.f32.mxu0 %v1219
    %2226 = vmatmul.mubr.f32.gmra.mxu0 %v1123
    %v2227 = vpop.f32.mrf.mxu0
    %v2228 = vadd.f32 0.0, %v2227
    %v2229 = vpop.f32.mrf.mxu0
    %2230 = vmatprep.mubr.f32.mxu0 %v1222
    %2231 = vmatmul.mubr.f32.gmra.mxu0 %v1125
    %v2232 = vpop.f32.mrf.mxu0
    %v2233 = vadd.f32 0.0, %v2232
    %v2234 = vpop.f32.mrf.mxu0
    %2235 = vmatprep.mubr.f32.mxu0 %v1225
    %2236 = vmatmul.mubr.f32.gmra.mxu0 %v1127
    %v2237 = vpop.f32.mrf.mxu0
    %v2238 = vadd.f32 0.0, %v2237
    %v2239 = vpop.f32.mrf.mxu0
    %2240 = vmatprep.mubr.f32.mxu0 %v1228
    %2241 = vmatmul.mubr.f32.gmra.mxu0 %v1129
    %v2242 = vpop.f32.mrf.mxu0
    %v2243 = vadd.f32 0.0, %v2242
    %v2244 = vpop.f32.mrf.mxu0
    %2245 = vmatprep.mubr.f32.mxu0 %v1231
    %2246 = vmatmul.mubr.f32.gmra.mxu0 %v1131
    %v2247 = vpop.f32.mrf.mxu0
    %v2248 = vadd.f32 0.0, %v2247
    %v2249 = vpop.f32.mrf.mxu0
    %2250 = vmatprep.mubr.f32.mxu0 %v1234
    %2251 = vmatmul.mubr.f32.gmra.mxu0 %v1133
    %v2252 = vpop.f32.mrf.mxu0
    %v2253 = vadd.f32 0.0, %v2252
    %v2254 = vpop.f32.mrf.mxu0
    %2255 = vmatprep.mubr.f32.mxu0 %v1237
    %2256 = vmatmul.mubr.f32.gmra.mxu0 %v1135
    %v2257 = vpop.f32.mrf.mxu0
    %v2258 = vadd.f32 0.0, %v2257
    %v2259 = vpop.f32.mrf.mxu0
    %2260 = vmatprep.mubr.f32.mxu0 %v1240
    %2261 = vmatmul.mubr.f32.gmra.mxu0 %v1137
    %v2262 = vpop.f32.mrf.mxu0
    %v2263 = vadd.f32 0.0, %v2262
    %v2264 = vpop.f32.mrf.mxu0
    %2265 = vmatprep.mubr.f32.mxu0 %v1243
    %2266 = vmatmul.mubr.f32.gmra.mxu0 %v1139
    %v2267 = vpop.f32.mrf.mxu0
    %v2268 = vadd.f32 0.0, %v2267
    %v2269 = vpop.f32.mrf.mxu0
    %2270 = vmatprep.mubr.f32.mxu0 %v1246
    %2271 = vmatmul.mubr.f32.gmra.mxu0 %v1141
    %v2272 = vpop.f32.mrf.mxu0
    %v2273 = vadd.f32 0.0, %v2272
    %v2274 = vpop.f32.mrf.mxu0
    %2275 = vmatprep.mubr.f32.mxu0 %v1249
    %2276 = vmatmul.mubr.f32.gmra.mxu0 %v1143
    %v2277 = vpop.f32.mrf.mxu0
    %v2278 = vadd.f32 0.0, %v2277
    %v2279 = vpop.f32.mrf.mxu0
    %2280 = vmatprep.mubr.f32.mxu0 %v1252
    %2281 = vmatmul.mubr.f32.gmra.mxu0 %v1145
    %v2282 = vpop.f32.mrf.mxu0
    %v2283 = vadd.f32 0.0, %v2282
    %v2284 = vpop.f32.mrf.mxu0
    %2285 = vmatprep.mubr.f32.mxu0 %v1255
    %2286 = vmatmul.mubr.f32.gmra.mxu0 %v1147
    %v2287 = vpop.f32.mrf.mxu0
    %v2288 = vadd.f32 0.0, %v2287
    %v2289 = vpop.f32.mrf.mxu0
    %2290 = vmatprep.mubr.f32.mxu0 %v1258
    %2291 = vmatmul.mubr.f32.gmra.mxu0 %v1149
    %v2292 = vpop.f32.mrf.mxu0
    %v2293 = vadd.f32 0.0, %v2292
    %v2294 = vpop.f32.mrf.mxu0
    %2295 = vmatprep.mubr.f32.mxu0 %v1261
    %2296 = vmatmul.mubr.f32.gmra.mxu0 %v1151
    %v2297 = vpop.f32.mrf.mxu0
    %v2298 = vadd.f32 0.0, %v2297
    %v2299 = vpop.f32.mrf.mxu0
    %2300 = vmatprep.mubr.f32.mxu0 %v1264
    %2301 = vmatmul.mubr.f32.gmra.mxu0 %v1153
    %v2302 = vpop.f32.mrf.mxu0
    %v2303 = vadd.f32 0.0, %v2302
    %v2304 = vpop.f32.mrf.mxu0
    %2305 = vmatprep.mubr.f32.mxu0 %v1267
    %2306 = vmatmul.mubr.f32.gmra.mxu0 %v1155
    %v2307 = vpop.f32.mrf.mxu0
    %v2308 = vadd.f32 0.0, %v2307
    %v2309 = vpop.f32.mrf.mxu0
    %2310 = vmatprep.mubr.f32.mxu0 %v1270
    %2311 = vmatmul.mubr.f32.gmra.mxu0 %v1157
    %v2312 = vpop.f32.mrf.mxu0
    %v2313 = vadd.f32 0.0, %v2312
    %v2314 = vpop.f32.mrf.mxu0
    %2315 = vdwg.mxu0
    %v2316 = vmax.f32 %v1973, %v2178
    %v2317 = vmax.f32 %v1978, %v2183
    %v2318 = vmax.f32 %v1983, %v2188
    %v2319 = vmax.f32 %v1988, %v2193
    %v2320 = vmax.f32 %v1993, %v2198
    %v2321 = vmax.f32 %v1998, %v2203
    %v2322 = vmax.f32 %v2003, %v2208
    %v2323 = vmax.f32 %v2008, %v2213
    %v2324 = vmax.f32 %v2013, %v2218
    %v2325 = vmax.f32 %v2018, %v2223
    %v2326 = vmax.f32 %v2023, %v2228
    %v2327 = vmax.f32 %v2028, %v2233
    %v2328 = vmax.f32 %v2033, %v2238
    %v2329 = vmax.f32 %v2038, %v2243
    %v2330 = vmax.f32 %v2043, %v2248
    %v2331 = vmax.f32 %v2048, %v2253
    %v2332 = vmax.f32 %v2053, %v2258
    %v2333 = vmax.f32 %v2058, %v2263
    %v2334 = vmax.f32 %v2063, %v2268
    %v2335 = vmax.f32 %v2068, %v2273
    %v2336 = vmax.f32 %v2073, %v2278
    %v2337 = vmax.f32 %v2078, %v2283
    %v2338 = vmax.f32 %v2083, %v2288
    %v2339 = vmax.f32 %v2088, %v2293
    %v2340 = vmax.f32 %v2093, %v2298
    %v2341 = vmax.f32 %v2098, %v2303
    %v2342 = vmax.f32 %v2103, %v2308
    %v2343 = vmax.f32 %v2108, %v2313
    %v2344 = vadd.f32 %v2316, %v1713
    %v2345 = vadd.f32 %v2317, %v1718
    %v2346 = vadd.f32 %v2318, %v1723
    %v2347 = vadd.f32 %v2319, %v1728
    %v2348 = vadd.f32 %v2320, %v1733
    %v2349 = vadd.f32 %v2321, %v1738
    %v2350 = vadd.f32 %v2322, %v1743
    %v2351 = vadd.f32 %v2323, %v1748
    %v2352 = vadd.f32 %v2324, %v1753
    %v2353 = vadd.f32 %v2325, %v1758
    %v2354 = vadd.f32 %v2326, %v1763
    %v2355 = vadd.f32 %v2327, %v1768
    %v2356 = vadd.f32 %v2328, %v1773
    %v2357 = vadd.f32 %v2329, %v1778
    %v2358 = vadd.f32 %v2330, %v1783
    %v2359 = vadd.f32 %v2331, %v1788
    %v2360 = vadd.f32 %v2332, %v1793
    %v2361 = vadd.f32 %v2333, %v1798
    %v2362 = vadd.f32 %v2334, %v1803
    %v2363 = vadd.f32 %v2335, %v1808
    %v2364 = vadd.f32 %v2336, %v1813
    %v2365 = vadd.f32 %v2337, %v1818
    %v2366 = vadd.f32 %v2338, %v1823
    %v2367 = vadd.f32 %v2339, %v1828
    %v2368 = vadd.f32 %v2340, %v1833
    %v2369 = vadd.f32 %v2341, %v1838
    %v2370 = vadd.f32 %v2342, %v1843
    %v2371 = vadd.f32 %v2343, %v1848
    %v2372 = vmax.f32 %v2344, 0.0
    %v2373 = vmax.f32 %v2345, 0.0
    %v2374 = vmax.f32 %v2346, 0.0
    %v2375 = vmax.f32 %v2347, 0.0
    %v2376 = vmax.f32 %v2348, 0.0
    %v2377 = vmax.f32 %v2349, 0.0
    %v2378 = vmax.f32 %v2350, 0.0
    %v2379 = vmax.f32 %v2351, 0.0
    %v2380 = vmax.f32 %v2352, 0.0
    %v2381 = vmax.f32 %v2353, 0.0
    %v2382 = vmax.f32 %v2354, 0.0
    %v2383 = vmax.f32 %v2355, 0.0
    %v2384 = vmax.f32 %v2356, 0.0
    %v2385 = vmax.f32 %v2357, 0.0
    %v2386 = vmax.f32 %v2358, 0.0
    %v2387 = vmax.f32 %v2359, 0.0
    %v2388 = vmax.f32 %v2360, 0.0
    %v2389 = vmax.f32 %v2361, 0.0
    %v2390 = vmax.f32 %v2362, 0.0
    %v2391 = vmax.f32 %v2363, 0.0
    %v2392 = vmax.f32 %v2364, 0.0
    %v2393 = vmax.f32 %v2365, 0.0
    %v2394 = vmax.f32 %v2366, 0.0
    %v2395 = vmax.f32 %v2367, 0.0
    %v2396 = vmax.f32 %v2368, 0.0
    %v2397 = vmax.f32 %v2369, 0.0
    %v2398 = vmax.f32 %v2370, 0.0
    %v2399 = vmax.f32 %v2371, 0.0
    %2400 = vmatprep.subr.mxu0 0.0
    %2401 = vmatpush1.msra.mxu0 %v1076
    %2402 = vmatprep.subr.mxu0 0.0
    %2403 = vmatpush1.msra.mxu0 %v1075
    %2404 = vmatprep.subr.mxu0 0.0
    %2405 = vmatpush1.msra.mxu0 %v1074
    %2406 = vmatprep.subr.mxu0 0.0
    %2407 = vmatpush1.msra.mxu0 %v1073
    %2408 = vmatprep.subr.mxu0 0.0
    %2409 = vmatpush1.msra.mxu0 %v1072
    %2410 = vmatprep.subr.mxu0 0.0
    %2411 = vmatpush1.msra.mxu0 %v1071
    %2412 = vmatprep.subr.mxu0 0.0
    %2413 = vmatpush1.msra.mxu0 %v1070
    %2414 = vmatprep.subr.mxu0 0.0
    %2415 = vmatpush1.msra.mxu0 %v1069
    %2416 = vmatprep.subr.mxu0 0.0
    %2417 = vmatpush1.msra.mxu0 %v1068
    %2418 = vmatprep.subr.mxu0 0.0
    %2419 = vmatpush1.msra.mxu0 %v1067
    %2420 = vmatprep.subr.mxu0 0.0
    %2421 = vmatpush1.msra.mxu0 %v1066
    %2422 = vmatprep.subr.mxu0 0.0
    %2423 = vmatpush1.msra.mxu0 %v1065
    %2424 = vmatprep.subr.mxu0 0.0
    %2425 = vmatpush1.msra.mxu0 %v1064
    %2426 = vmatprep.subr.mxu0 0.0
    %2427 = vmatpush1.msra.mxu0 %v1063
    %2428 = vmatprep.subr.mxu0 0.0
    %2429 = vmatpush1.msra.mxu0 %v1062
    %2430 = vmatprep.subr.mxu0 0.0
    %2431 = vmatpush1.msra.mxu0 %v1061
    %2432 = vmatprep.subr.mxu0 0.0
    %2433 = vmatpush2.msra.mxu0 0.0
    %2434 = vmatprep.subr.mxu0 0.0
    %2435 = vmatpush2.msra.mxu0 0.0
    %2436 = vmatprep.subr.mxu0 0.0
    %2437 = vmatpush2.msra.mxu0 0.0
    %2438 = vmatprep.subr.mxu0 0.0
    %2439 = vmatpush2.msra.mxu0 0.0
    %2440 = vmatprep.subr.mxu0 0.0
    %2441 = vmatpush2.msra.mxu0 0.0
    %2442 = vmatprep.subr.mxu0 0.0
    %2443 = vmatpush2.msra.mxu0 0.0
    %2444 = vmatprep.subr.mxu0 0.0
    %2445 = vmatpush2.msra.mxu0 0.0
    %2446 = vmatprep.subr.mxu0 0.0
    %2447 = vmatpush2.msra.mxu0 0.0
    %2448 = vmatprep.subr.mxu0 0.0
    %2449 = vmatpush2.msra.mxu0 0.0
    %2450 = vmatprep.subr.mxu0 0.0
    %2451 = vmatpush2.msra.mxu0 0.0
    %2452 = vmatprep.subr.mxu0 0.0
    %2453 = vmatpush2.msra.mxu0 0.0
    %2454 = vmatprep.subr.mxu0 0.0
    %2455 = vmatpush2.msra.mxu0 %v1081
    %2456 = vmatprep.subr.mxu0 0.0
    %2457 = vmatpush2.msra.mxu0 %v1080
    %2458 = vmatprep.subr.mxu0 0.0
    %2459 = vmatpush2.msra.mxu0 %v1079
    %2460 = vmatprep.subr.mxu0 0.0
    %2461 = vmatpush2.msra.mxu0 %v1078
    %2462 = vmatprep.subr.mxu0 0.0
    %2463 = vmatpush2.msra.mxu0 %v1077
    %2464 = vmatprep.mubr.f32.mxu0 %v1189
    %2465 = vmatmul.mubr.f32.gmra.mxu0 %v1103
    %v2466 = vpop.f32.mrf.mxu0
    %v2467 = vadd.f32 0.0, %v2466
    %v2468 = vpop.f32.mrf.mxu0
    %2469 = vmatprep.mubr.f32.mxu0 %v1192
    %2470 = vmatmul.mubr.f32.gmra.mxu0 %v1105
    %v2471 = vpop.f32.mrf.mxu0
    %v2472 = vadd.f32 0.0, %v2471
    %v2473 = vpop.f32.mrf.mxu0
    %2474 = vmatprep.mubr.f32.mxu0 %v1195
    %2475 = vmatmul.mubr.f32.gmra.mxu0 %v1107
    %v2476 = vpop.f32.mrf.mxu0
    %v2477 = vadd.f32 0.0, %v2476
    %v2478 = vpop.f32.mrf.mxu0
    %2479 = vmatprep.mubr.f32.mxu0 %v1198
    %2480 = vmatmul.mubr.f32.gmra.mxu0 %v1109
    %v2481 = vpop.f32.mrf.mxu0
    %v2482 = vadd.f32 0.0, %v2481
    %v2483 = vpop.f32.mrf.mxu0
    %2484 = vmatprep.mubr.f32.mxu0 %v1201
    %2485 = vmatmul.mubr.f32.gmra.mxu0 %v1111
    %v2486 = vpop.f32.mrf.mxu0
    %v2487 = vadd.f32 0.0, %v2486
    %v2488 = vpop.f32.mrf.mxu0
    %2489 = vmatprep.mubr.f32.mxu0 %v1204
    %2490 = vmatmul.mubr.f32.gmra.mxu0 %v1113
    %v2491 = vpop.f32.mrf.mxu0
    %v2492 = vadd.f32 0.0, %v2491
    %v2493 = vpop.f32.mrf.mxu0
    %2494 = vmatprep.mubr.f32.mxu0 %v1207
    %2495 = vmatmul.mubr.f32.gmra.mxu0 %v1115
    %v2496 = vpop.f32.mrf.mxu0
    %v2497 = vadd.f32 0.0, %v2496
    %v2498 = vpop.f32.mrf.mxu0
    %2499 = vmatprep.mubr.f32.mxu0 %v1210
    %2500 = vmatmul.mubr.f32.gmra.mxu0 %v1117
    %v2501 = vpop.f32.mrf.mxu0
    %v2502 = vadd.f32 0.0, %v2501
    %v2503 = vpop.f32.mrf.mxu0
    %2504 = vmatprep.mubr.f32.mxu0 %v1213
    %2505 = vmatmul.mubr.f32.gmra.mxu0 %v1119
    %v2506 = vpop.f32.mrf.mxu0
    %v2507 = vadd.f32 0.0, %v2506
    %v2508 = vpop.f32.mrf.mxu0
    %2509 = vmatprep.mubr.f32.mxu0 %v1216
    %2510 = vmatmul.mubr.f32.gmra.mxu0 %v1121
    %v2511 = vpop.f32.mrf.mxu0
    %v2512 = vadd.f32 0.0, %v2511
    %v2513 = vpop.f32.mrf.mxu0
    %2514 = vmatprep.mubr.f32.mxu0 %v1219
    %2515 = vmatmul.mubr.f32.gmra.mxu0 %v1123
    %v2516 = vpop.f32.mrf.mxu0
    %v2517 = vadd.f32 0.0, %v2516
    %v2518 = vpop.f32.mrf.mxu0
    %2519 = vmatprep.mubr.f32.mxu0 %v1222
    %2520 = vmatmul.mubr.f32.gmra.mxu0 %v1125
    %v2521 = vpop.f32.mrf.mxu0
    %v2522 = vadd.f32 0.0, %v2521
    %v2523 = vpop.f32.mrf.mxu0
    %2524 = vmatprep.mubr.f32.mxu0 %v1225
    %2525 = vmatmul.mubr.f32.gmra.mxu0 %v1127
    %v2526 = vpop.f32.mrf.mxu0
    %v2527 = vadd.f32 0.0, %v2526
    %v2528 = vpop.f32.mrf.mxu0
    %2529 = vmatprep.mubr.f32.mxu0 %v1228
    %2530 = vmatmul.mubr.f32.gmra.mxu0 %v1129
    %v2531 = vpop.f32.mrf.mxu0
    %v2532 = vadd.f32 0.0, %v2531
    %v2533 = vpop.f32.mrf.mxu0
    %2534 = vmatprep.mubr.f32.mxu0 %v1231
    %2535 = vmatmul.mubr.f32.gmra.mxu0 %v1131
    %v2536 = vpop.f32.mrf.mxu0
    %v2537 = vadd.f32 0.0, %v2536
    %v2538 = vpop.f32.mrf.mxu0
    %2539 = vmatprep.mubr.f32.mxu0 %v1234
    %2540 = vmatmul.mubr.f32.gmra.mxu0 %v1133
    %v2541 = vpop.f32.mrf.mxu0
    %v2542 = vadd.f32 0.0, %v2541
    %v2543 = vpop.f32.mrf.mxu0
    %2544 = vmatprep.mubr.f32.mxu0 %v1237
    %2545 = vmatmul.mubr.f32.gmra.mxu0 %v1135
    %v2546 = vpop.f32.mrf.mxu0
    %v2547 = vadd.f32 0.0, %v2546
    %v2548 = vpop.f32.mrf.mxu0
    %2549 = vmatprep.mubr.f32.mxu0 %v1240
    %2550 = vmatmul.mubr.f32.gmra.mxu0 %v1137
    %v2551 = vpop.f32.mrf.mxu0
    %v2552 = vadd.f32 0.0, %v2551
    %v2553 = vpop.f32.mrf.mxu0
    %2554 = vmatprep.mubr.f32.mxu0 %v1243
    %2555 = vmatmul.mubr.f32.gmra.mxu0 %v1139
    %v2556 = vpop.f32.mrf.mxu0
    %v2557 = vadd.f32 0.0, %v2556
    %v2558 = vpop.f32.mrf.mxu0
    %2559 = vmatprep.mubr.f32.mxu0 %v1246
    %2560 = vmatmul.mubr.f32.gmra.mxu0 %v1141
    %v2561 = vpop.f32.mrf.mxu0
    %v2562 = vadd.f32 0.0, %v2561
    %v2563 = vpop.f32.mrf.mxu0
    %2564 = vmatprep.mubr.f32.mxu0 %v1249
    %2565 = vmatmul.mubr.f32.gmra.mxu0 %v1143
    %v2566 = vpop.f32.mrf.mxu0
    %v2567 = vadd.f32 0.0, %v2566
    %v2568 = vpop.f32.mrf.mxu0
    %2569 = vmatprep.mubr.f32.mxu0 %v1252
    %2570 = vmatmul.mubr.f32.gmra.mxu0 %v1145
    %v2571 = vpop.f32.mrf.mxu0
    %v2572 = vadd.f32 0.0, %v2571
    %v2573 = vpop.f32.mrf.mxu0
    %2574 = vmatprep.mubr.f32.mxu0 %v1255
    %2575 = vmatmul.mubr.f32.gmra.mxu0 %v1147
    %v2576 = vpop.f32.mrf.mxu0
    %v2577 = vadd.f32 0.0, %v2576
    %v2578 = vpop.f32.mrf.mxu0
    %2579 = vmatprep.mubr.f32.mxu0 %v1258
    %2580 = vmatmul.mubr.f32.gmra.mxu0 %v1149
    %v2581 = vpop.f32.mrf.mxu0
    %v2582 = vadd.f32 0.0, %v2581
    %v2583 = vpop.f32.mrf.mxu0
    %2584 = vmatprep.mubr.f32.mxu0 %v1261
    %2585 = vmatmul.mubr.f32.gmra.mxu0 %v1151
    %v2586 = vpop.f32.mrf.mxu0
    %v2587 = vadd.f32 0.0, %v2586
    %v2588 = vpop.f32.mrf.mxu0
    %2589 = vmatprep.mubr.f32.mxu0 %v1264
    %2590 = vmatmul.mubr.f32.gmra.mxu0 %v1153
    %v2591 = vpop.f32.mrf.mxu0
    %v2592 = vadd.f32 0.0, %v2591
    %v2593 = vpop.f32.mrf.mxu0
    %2594 = vmatprep.mubr.f32.mxu0 %v1267
    %2595 = vmatmul.mubr.f32.gmra.mxu0 %v1155
    %v2596 = vpop.f32.mrf.mxu0
    %v2597 = vadd.f32 0.0, %v2596
    %v2598 = vpop.f32.mrf.mxu0
    %2599 = vmatprep.mubr.f32.mxu0 %v1270
    %2600 = vmatmul.mubr.f32.gmra.mxu0 %v1157
    %v2601 = vpop.f32.mrf.mxu0
    %v2602 = vadd.f32 0.0, %v2601
    %v2603 = vpop.f32.mrf.mxu0
    %2604 = vdwg.mxu0
    %2605 = vmatprep.subr.mxu0 0.0
    %2606 = vmatpush1.msra.mxu0 %v1083
    %2607 = vmatprep.subr.mxu0 0.0
    %2608 = vmatpush1.msra.mxu0 %v1082
    %2609 = vmatprep.subr.mxu0 0.0
    %2610 = vmatpush1.msra.mxu0 %v1081
    %2611 = vmatprep.subr.mxu0 0.0
    %2612 = vmatpush1.msra.mxu0 %v1080
    %2613 = vmatprep.subr.mxu0 0.0
    %2614 = vmatpush1.msra.mxu0 %v1079
    %2615 = vmatprep.subr.mxu0 0.0
    %2616 = vmatpush1.msra.mxu0 %v1078
    %2617 = vmatprep.subr.mxu0 0.0
    %2618 = vmatpush1.msra.mxu0 %v1077
    %2619 = vmatprep.subr.mxu0 0.0
    %2620 = vmatpush1.msra.mxu0 %v1076
    %2621 = vmatprep.subr.mxu0 0.0
    %2622 = vmatpush1.msra.mxu0 %v1075
    %2623 = vmatprep.subr.mxu0 0.0
    %2624 = vmatpush1.msra.mxu0 %v1074
    %2625 = vmatprep.subr.mxu0 0.0
    %2626 = vmatpush1.msra.mxu0 %v1073
    %2627 = vmatprep.subr.mxu0 0.0
    %2628 = vmatpush1.msra.mxu0 %v1072
    %2629 = vmatprep.subr.mxu0 0.0
    %2630 = vmatpush1.msra.mxu0 %v1071
    %2631 = vmatprep.subr.mxu0 0.0
    %2632 = vmatpush1.msra.mxu0 %v1070
    %2633 = vmatprep.subr.mxu0 0.0
    %2634 = vmatpush1.msra.mxu0 %v1069
    %2635 = vmatprep.subr.mxu0 0.0
    %2636 = vmatpush1.msra.mxu0 %v1068
    %2637 = vmatprep.subr.mxu0 0.0
    %2638 = vmatpush2.msra.mxu0 0.0
    %2639 = vmatprep.subr.mxu0 0.0
    %2640 = vmatpush2.msra.mxu0 0.0
    %2641 = vmatprep.subr.mxu0 0.0
    %2642 = vmatpush2.msra.mxu0 0.0
    %2643 = vmatprep.subr.mxu0 0.0
    %2644 = vmatpush2.msra.mxu0 0.0
    %2645 = vmatprep.subr.mxu0 0.0
    %2646 = vmatpush2.msra.mxu0 0.0
    %2647 = vmatprep.subr.mxu0 0.0
    %2648 = vmatpush2.msra.mxu0 0.0
    %2649 = vmatprep.subr.mxu0 0.0
    %2650 = vmatpush2.msra.mxu0 0.0
    %2651 = vmatprep.subr.mxu0 0.0
    %2652 = vmatpush2.msra.mxu0 0.0
    %2653 = vmatprep.subr.mxu0 0.0
    %2654 = vmatpush2.msra.mxu0 0.0
    %2655 = vmatprep.subr.mxu0 0.0
    %2656 = vmatpush2.msra.mxu0 0.0
    %2657 = vmatprep.subr.mxu0 0.0
    %2658 = vmatpush2.msra.mxu0 0.0
    %2659 = vmatprep.subr.mxu0 0.0
    %2660 = vmatpush2.msra.mxu0 %v1088
    %2661 = vmatprep.subr.mxu0 0.0
    %2662 = vmatpush2.msra.mxu0 %v1087
    %2663 = vmatprep.subr.mxu0 0.0
    %2664 = vmatpush2.msra.mxu0 %v1086
    %2665 = vmatprep.subr.mxu0 0.0
    %2666 = vmatpush2.msra.mxu0 %v1085
    %2667 = vmatprep.subr.mxu0 0.0
    %2668 = vmatpush2.msra.mxu0 %v1084
    %2669 = vmatprep.mubr.f32.mxu0 %v1189
    %2670 = vmatmul.mubr.f32.gmra.mxu0 %v1103
    %v2671 = vpop.f32.mrf.mxu0
    %v2672 = vadd.f32 0.0, %v2671
    %v2673 = vpop.f32.mrf.mxu0
    %2674 = vmatprep.mubr.f32.mxu0 %v1192
    %2675 = vmatmul.mubr.f32.gmra.mxu0 %v1105
    %v2676 = vpop.f32.mrf.mxu0
    %v2677 = vadd.f32 0.0, %v2676
    %v2678 = vpop.f32.mrf.mxu0
    %2679 = vmatprep.mubr.f32.mxu0 %v1195
    %2680 = vmatmul.mubr.f32.gmra.mxu0 %v1107
    %v2681 = vpop.f32.mrf.mxu0
    %v2682 = vadd.f32 0.0, %v2681
    %v2683 = vpop.f32.mrf.mxu0
    %2684 = vmatprep.mubr.f32.mxu0 %v1198
    %2685 = vmatmul.mubr.f32.gmra.mxu0 %v1109
    %v2686 = vpop.f32.mrf.mxu0
    %v2687 = vadd.f32 0.0, %v2686
    %v2688 = vpop.f32.mrf.mxu0
    %2689 = vmatprep.mubr.f32.mxu0 %v1201
    %2690 = vmatmul.mubr.f32.gmra.mxu0 %v1111
    %v2691 = vpop.f32.mrf.mxu0
    %v2692 = vadd.f32 0.0, %v2691
    %v2693 = vpop.f32.mrf.mxu0
    %2694 = vmatprep.mubr.f32.mxu0 %v1204
    %2695 = vmatmul.mubr.f32.gmra.mxu0 %v1113
    %v2696 = vpop.f32.mrf.mxu0
    %v2697 = vadd.f32 0.0, %v2696
    %v2698 = vpop.f32.mrf.mxu0
    %2699 = vmatprep.mubr.f32.mxu0 %v1207
    %2700 = vmatmul.mubr.f32.gmra.mxu0 %v1115
    %v2701 = vpop.f32.mrf.mxu0
    %v2702 = vadd.f32 0.0, %v2701
    %v2703 = vpop.f32.mrf.mxu0
    %2704 = vmatprep.mubr.f32.mxu0 %v1210
    %2705 = vmatmul.mubr.f32.gmra.mxu0 %v1117
    %v2706 = vpop.f32.mrf.mxu0
    %v2707 = vadd.f32 0.0, %v2706
    %v2708 = vpop.f32.mrf.mxu0
    %2709 = vmatprep.mubr.f32.mxu0 %v1213
    %2710 = vmatmul.mubr.f32.gmra.mxu0 %v1119
    %v2711 = vpop.f32.mrf.mxu0
    %v2712 = vadd.f32 0.0, %v2711
    %v2713 = vpop.f32.mrf.mxu0
    %2714 = vmatprep.mubr.f32.mxu0 %v1216
    %2715 = vmatmul.mubr.f32.gmra.mxu0 %v1121
    %v2716 = vpop.f32.mrf.mxu0
    %v2717 = vadd.f32 0.0, %v2716
    %v2718 = vpop.f32.mrf.mxu0
    %2719 = vmatprep.mubr.f32.mxu0 %v1219
    %2720 = vmatmul.mubr.f32.gmra.mxu0 %v1123
    %v2721 = vpop.f32.mrf.mxu0
    %v2722 = vadd.f32 0.0, %v2721
    %v2723 = vpop.f32.mrf.mxu0
    %2724 = vmatprep.mubr.f32.mxu0 %v1222
    %2725 = vmatmul.mubr.f32.gmra.mxu0 %v1125
    %v2726 = vpop.f32.mrf.mxu0
    %v2727 = vadd.f32 0.0, %v2726
    %v2728 = vpop.f32.mrf.mxu0
    %2729 = vmatprep.mubr.f32.mxu0 %v1225
    %2730 = vmatmul.mubr.f32.gmra.mxu0 %v1127
    %v2731 = vpop.f32.mrf.mxu0
    %v2732 = vadd.f32 0.0, %v2731
    %v2733 = vpop.f32.mrf.mxu0
    %2734 = vmatprep.mubr.f32.mxu0 %v1228
    %2735 = vmatmul.mubr.f32.gmra.mxu0 %v1129
    %v2736 = vpop.f32.mrf.mxu0
    %v2737 = vadd.f32 0.0, %v2736
    %v2738 = vpop.f32.mrf.mxu0
    %2739 = vmatprep.mubr.f32.mxu0 %v1231
    %2740 = vmatmul.mubr.f32.gmra.mxu0 %v1131
    %v2741 = vpop.f32.mrf.mxu0
    %v2742 = vadd.f32 0.0, %v2741
    %v2743 = vpop.f32.mrf.mxu0
    %2744 = vmatprep.mubr.f32.mxu0 %v1234
    %2745 = vmatmul.mubr.f32.gmra.mxu0 %v1133
    %v2746 = vpop.f32.mrf.mxu0
    %v2747 = vadd.f32 0.0, %v2746
    %v2748 = vpop.f32.mrf.mxu0
    %2749 = vmatprep.mubr.f32.mxu0 %v1237
    %2750 = vmatmul.mubr.f32.gmra.mxu0 %v1135
    %v2751 = vpop.f32.mrf.mxu0
    %v2752 = vadd.f32 0.0, %v2751
    %v2753 = vpop.f32.mrf.mxu0
    %2754 = vmatprep.mubr.f32.mxu0 %v1240
    %2755 = vmatmul.mubr.f32.gmra.mxu0 %v1137
    %v2756 = vpop.f32.mrf.mxu0
    %v2757 = vadd.f32 0.0, %v2756
    %v2758 = vpop.f32.mrf.mxu0
    %2759 = vmatprep.mubr.f32.mxu0 %v1243
    %2760 = vmatmul.mubr.f32.gmra.mxu0 %v1139
    %v2761 = vpop.f32.mrf.mxu0
    %v2762 = vadd.f32 0.0, %v2761
    %v2763 = vpop.f32.mrf.mxu0
    %2764 = vmatprep.mubr.f32.mxu0 %v1246
    %2765 = vmatmul.mubr.f32.gmra.mxu0 %v1141
    %v2766 = vpop.f32.mrf.mxu0
    %v2767 = vadd.f32 0.0, %v2766
    %v2768 = vpop.f32.mrf.mxu0
    %2769 = vmatprep.mubr.f32.mxu0 %v1249
    %2770 = vmatmul.mubr.f32.gmra.mxu0 %v1143
    %v2771 = vpop.f32.mrf.mxu0
    %v2772 = vadd.f32 0.0, %v2771
    %v2773 = vpop.f32.mrf.mxu0
    %2774 = vmatprep.mubr.f32.mxu0 %v1252
    %2775 = vmatmul.mubr.f32.gmra.mxu0 %v1145
    %v2776 = vpop.f32.mrf.mxu0
    %v2777 = vadd.f32 0.0, %v2776
    %v2778 = vpop.f32.mrf.mxu0
    %2779 = vmatprep.mubr.f32.mxu0 %v1255
    %2780 = vmatmul.mubr.f32.gmra.mxu0 %v1147
    %v2781 = vpop.f32.mrf.mxu0
    %v2782 = vadd.f32 0.0, %v2781
    %v2783 = vpop.f32.mrf.mxu0
    %2784 = vmatprep.mubr.f32.mxu0 %v1258
    %2785 = vmatmul.mubr.f32.gmra.mxu0 %v1149
    %v2786 = vpop.f32.mrf.mxu0
    %v2787 = vadd.f32 0.0, %v2786
    %v2788 = vpop.f32.mrf.mxu0
    %2789 = vmatprep.mubr.f32.mxu0 %v1261
    %2790 = vmatmul.mubr.f32.gmra.mxu0 %v1151
    %v2791 = vpop.f32.mrf.mxu0
    %v2792 = vadd.f32 0.0, %v2791
    %v2793 = vpop.f32.mrf.mxu0
    %2794 = vmatprep.mubr.f32.mxu0 %v1264
    %2795 = vmatmul.mubr.f32.gmra.mxu0 %v1153
    %v2796 = vpop.f32.mrf.mxu0
    %v2797 = vadd.f32 0.0, %v2796
    %v2798 = vpop.f32.mrf.mxu0
    %2799 = vmatprep.mubr.f32.mxu0 %v1267
    %2800 = vmatmul.mubr.f32.gmra.mxu0 %v1155
    %v2801 = vpop.f32.mrf.mxu0
    %v2802 = vadd.f32 0.0, %v2801
    %v2803 = vpop.f32.mrf.mxu0
    %2804 = vmatprep.mubr.f32.mxu0 %v1270
    %2805 = vmatmul.mubr.f32.gmra.mxu0 %v1157
    %v2806 = vpop.f32.mrf.mxu0
    %v2807 = vadd.f32 0.0, %v2806
    %v2808 = vpop.f32.mrf.mxu0
    %2809 = vdwg.mxu0
    %v2810 = vmax.f32 %v2467, %v2672
    %v2811 = vmax.f32 %v2472, %v2677
    %v2812 = vmax.f32 %v2477, %v2682
    %v2813 = vmax.f32 %v2482, %v2687
    %v2814 = vmax.f32 %v2487, %v2692
    %v2815 = vmax.f32 %v2492, %v2697
    %v2816 = vmax.f32 %v2497, %v2702
    %v2817 = vmax.f32 %v2502, %v2707
    %v2818 = vmax.f32 %v2507, %v2712
    %v2819 = vmax.f32 %v2512, %v2717
    %v2820 = vmax.f32 %v2517, %v2722
    %v2821 = vmax.f32 %v2522, %v2727
    %v2822 = vmax.f32 %v2527, %v2732
    %v2823 = vmax.f32 %v2532, %v2737
    %v2824 = vmax.f32 %v2537, %v2742
    %v2825 = vmax.f32 %v2542, %v2747
    %v2826 = vmax.f32 %v2547, %v2752
    %v2827 = vmax.f32 %v2552, %v2757
    %v2828 = vmax.f32 %v2557, %v2762
    %v2829 = vmax.f32 %v2562, %v2767
    %v2830 = vmax.f32 %v2567, %v2772
    %v2831 = vmax.f32 %v2572, %v2777
    %v2832 = vmax.f32 %v2577, %v2782
    %v2833 = vmax.f32 %v2582, %v2787
    %v2834 = vmax.f32 %v2587, %v2792
    %v2835 = vmax.f32 %v2592, %v2797
    %v2836 = vmax.f32 %v2597, %v2802
    %v2837 = vmax.f32 %v2602, %v2807
    %v2838 = vadd.f32 %v2810, %v1713
    %v2839 = vadd.f32 %v2811, %v1718
    %v2840 = vadd.f32 %v2812, %v1723
    %v2841 = vadd.f32 %v2813, %v1728
    %v2842 = vadd.f32 %v2814, %v1733
    %v2843 = vadd.f32 %v2815, %v1738
    %v2844 = vadd.f32 %v2816, %v1743
    %v2845 = vadd.f32 %v2817, %v1748
    %v2846 = vadd.f32 %v2818, %v1753
    %v2847 = vadd.f32 %v2819, %v1758
    %v2848 = vadd.f32 %v2820, %v1763
    %v2849 = vadd.f32 %v2821, %v1768
    %v2850 = vadd.f32 %v2822, %v1773
    %v2851 = vadd.f32 %v2823, %v1778
    %v2852 = vadd.f32 %v2824, %v1783
    %v2853 = vadd.f32 %v2825, %v1788
    %v2854 = vadd.f32 %v2826, %v1793
    %v2855 = vadd.f32 %v2827, %v1798
    %v2856 = vadd.f32 %v2828, %v1803
    %v2857 = vadd.f32 %v2829, %v1808
    %v2858 = vadd.f32 %v2830, %v1813
    %v2859 = vadd.f32 %v2831, %v1818
    %v2860 = vadd.f32 %v2832, %v1823
    %v2861 = vadd.f32 %v2833, %v1828
    %v2862 = vadd.f32 %v2834, %v1833
    %v2863 = vadd.f32 %v2835, %v1838
    %v2864 = vadd.f32 %v2836, %v1843
    %v2865 = vadd.f32 %v2837, %v1848
    %v2866 = vmax.f32 %v2838, 0.0
    %v2867 = vmax.f32 %v2839, 0.0
    %v2868 = vmax.f32 %v2840, 0.0
    %v2869 = vmax.f32 %v2841, 0.0
    %v2870 = vmax.f32 %v2842, 0.0
    %v2871 = vmax.f32 %v2843, 0.0
    %v2872 = vmax.f32 %v2844, 0.0
    %v2873 = vmax.f32 %v2845, 0.0
    %v2874 = vmax.f32 %v2846, 0.0
    %v2875 = vmax.f32 %v2847, 0.0
    %v2876 = vmax.f32 %v2848, 0.0
    %v2877 = vmax.f32 %v2849, 0.0
    %v2878 = vmax.f32 %v2850, 0.0
    %v2879 = vmax.f32 %v2851, 0.0
    %v2880 = vmax.f32 %v2852, 0.0
    %v2881 = vmax.f32 %v2853, 0.0
    %v2882 = vmax.f32 %v2854, 0.0
    %v2883 = vmax.f32 %v2855, 0.0
    %v2884 = vmax.f32 %v2856, 0.0
    %v2885 = vmax.f32 %v2857, 0.0
    %v2886 = vmax.f32 %v2858, 0.0
    %v2887 = vmax.f32 %v2859, 0.0
    %v2888 = vmax.f32 %v2860, 0.0
    %v2889 = vmax.f32 %v2861, 0.0
    %v2890 = vmax.f32 %v2862, 0.0
    %v2891 = vmax.f32 %v2863, 0.0
    %v2892 = vmax.f32 %v2864, 0.0
    %v2893 = vmax.f32 %v2865, 0.0
    %2894 = vmatprep.subr.mxu0 0.0
    %2895 = vmatpush1.msra.mxu0 %v1090
    %2896 = vmatprep.subr.mxu0 0.0
    %2897 = vmatpush1.msra.mxu0 %v1089
    %2898 = vmatprep.subr.mxu0 0.0
    %2899 = vmatpush1.msra.mxu0 %v1088
    %2900 = vmatprep.subr.mxu0 0.0
    %2901 = vmatpush1.msra.mxu0 %v1087
    %2902 = vmatprep.subr.mxu0 0.0
    %2903 = vmatpush1.msra.mxu0 %v1086
    %2904 = vmatprep.subr.mxu0 0.0
    %2905 = vmatpush1.msra.mxu0 %v1085
    %2906 = vmatprep.subr.mxu0 0.0
    %2907 = vmatpush1.msra.mxu0 %v1084
    %2908 = vmatprep.subr.mxu0 0.0
    %2909 = vmatpush1.msra.mxu0 %v1083
    %2910 = vmatprep.subr.mxu0 0.0
    %2911 = vmatpush1.msra.mxu0 %v1082
    %2912 = vmatprep.subr.mxu0 0.0
    %2913 = vmatpush1.msra.mxu0 %v1081
    %2914 = vmatprep.subr.mxu0 0.0
    %2915 = vmatpush1.msra.mxu0 %v1080
    %2916 = vmatprep.subr.mxu0 0.0
    %2917 = vmatpush1.msra.mxu0 %v1079
    %2918 = vmatprep.subr.mxu0 0.0
    %2919 = vmatpush1.msra.mxu0 %v1078
    %2920 = vmatprep.subr.mxu0 0.0
    %2921 = vmatpush1.msra.mxu0 %v1077
    %2922 = vmatprep.subr.mxu0 0.0
    %2923 = vmatpush1.msra.mxu0 %v1076
    %2924 = vmatprep.subr.mxu0 0.0
    %2925 = vmatpush1.msra.mxu0 %v1075
    %2926 = vmatprep.subr.mxu0 0.0
    %2927 = vmatpush2.msra.mxu0 0.0
    %2928 = vmatprep.subr.mxu0 0.0
    %2929 = vmatpush2.msra.mxu0 0.0
    %2930 = vmatprep.subr.mxu0 0.0
    %2931 = vmatpush2.msra.mxu0 0.0
    %2932 = vmatprep.subr.mxu0 0.0
    %2933 = vmatpush2.msra.mxu0 0.0
    %2934 = vmatprep.subr.mxu0 0.0
    %2935 = vmatpush2.msra.mxu0 0.0
    %2936 = vmatprep.subr.mxu0 0.0
    %2937 = vmatpush2.msra.mxu0 0.0
    %2938 = vmatprep.subr.mxu0 0.0
    %2939 = vmatpush2.msra.mxu0 0.0
    %2940 = vmatprep.subr.mxu0 0.0
    %2941 = vmatpush2.msra.mxu0 0.0
    %2942 = vmatprep.subr.mxu0 0.0
    %2943 = vmatpush2.msra.mxu0 0.0
    %2944 = vmatprep.subr.mxu0 0.0
    %2945 = vmatpush2.msra.mxu0 0.0
    %2946 = vmatprep.subr.mxu0 0.0
    %2947 = vmatpush2.msra.mxu0 0.0
    %2948 = vmatprep.subr.mxu0 0.0
    %2949 = vmatpush2.msra.mxu0 %v1095
    %2950 = vmatprep.subr.mxu0 0.0
    %2951 = vmatpush2.msra.mxu0 %v1094
    %2952 = vmatprep.subr.mxu0 0.0
    %2953 = vmatpush2.msra.mxu0 %v1093
    %2954 = vmatprep.subr.mxu0 0.0
    %2955 = vmatpush2.msra.mxu0 %v1092
    %2956 = vmatprep.subr.mxu0 0.0
    %2957 = vmatpush2.msra.mxu0 %v1091
    %2958 = vmatprep.mubr.f32.mxu0 %v1189
    %2959 = vmatmul.mubr.f32.gmra.mxu0 %v1103
    %v2960 = vpop.f32.mrf.mxu0
    %v2961 = vadd.f32 0.0, %v2960
    %v2962 = vpop.f32.mrf.mxu0
    %2963 = vmatprep.mubr.f32.mxu0 %v1192
    %2964 = vmatmul.mubr.f32.gmra.mxu0 %v1105
    %v2965 = vpop.f32.mrf.mxu0
    %v2966 = vadd.f32 0.0, %v2965
    %v2967 = vpop.f32.mrf.mxu0
    %2968 = vmatprep.mubr.f32.mxu0 %v1195
    %2969 = vmatmul.mubr.f32.gmra.mxu0 %v1107
    %v2970 = vpop.f32.mrf.mxu0
    %v2971 = vadd.f32 0.0, %v2970
    %v2972 = vpop.f32.mrf.mxu0
    %2973 = vmatprep.mubr.f32.mxu0 %v1198
    %2974 = vmatmul.mubr.f32.gmra.mxu0 %v1109
    %v2975 = vpop.f32.mrf.mxu0
    %v2976 = vadd.f32 0.0, %v2975
    %v2977 = vpop.f32.mrf.mxu0
    %2978 = vmatprep.mubr.f32.mxu0 %v1201
    %2979 = vmatmul.mubr.f32.gmra.mxu0 %v1111
    %v2980 = vpop.f32.mrf.mxu0
    %v2981 = vadd.f32 0.0, %v2980
    %v2982 = vpop.f32.mrf.mxu0
    %2983 = vmatprep.mubr.f32.mxu0 %v1204
    %2984 = vmatmul.mubr.f32.gmra.mxu0 %v1113
    %v2985 = vpop.f32.mrf.mxu0
    %v2986 = vadd.f32 0.0, %v2985
    %v2987 = vpop.f32.mrf.mxu0
    %2988 = vmatprep.mubr.f32.mxu0 %v1207
    %2989 = vmatmul.mubr.f32.gmra.mxu0 %v1115
    %v2990 = vpop.f32.mrf.mxu0
    %v2991 = vadd.f32 0.0, %v2990
    %v2992 = vpop.f32.mrf.mxu0
    %2993 = vmatprep.mubr.f32.mxu0 %v1210
    %2994 = vmatmul.mubr.f32.gmra.mxu0 %v1117
    %v2995 = vpop.f32.mrf.mxu0
    %v2996 = vadd.f32 0.0, %v2995
    %v2997 = vpop.f32.mrf.mxu0
    %2998 = vmatprep.mubr.f32.mxu0 %v1213
    %2999 = vmatmul.mubr.f32.gmra.mxu0 %v1119
    %v3000 = vpop.f32.mrf.mxu0
    %v3001 = vadd.f32 0.0, %v3000
    %v3002 = vpop.f32.mrf.mxu0
    %3003 = vmatprep.mubr.f32.mxu0 %v1216
    %3004 = vmatmul.mubr.f32.gmra.mxu0 %v1121
    %v3005 = vpop.f32.mrf.mxu0
    %v3006 = vadd.f32 0.0, %v3005
    %v3007 = vpop.f32.mrf.mxu0
    %3008 = vmatprep.mubr.f32.mxu0 %v1219
    %3009 = vmatmul.mubr.f32.gmra.mxu0 %v1123
    %v3010 = vpop.f32.mrf.mxu0
    %v3011 = vadd.f32 0.0, %v3010
    %v3012 = vpop.f32.mrf.mxu0
    %3013 = vmatprep.mubr.f32.mxu0 %v1222
    %3014 = vmatmul.mubr.f32.gmra.mxu0 %v1125
    %v3015 = vpop.f32.mrf.mxu0
    %v3016 = vadd.f32 0.0, %v3015
    %v3017 = vpop.f32.mrf.mxu0
    %3018 = vmatprep.mubr.f32.mxu0 %v1225
    %3019 = vmatmul.mubr.f32.gmra.mxu0 %v1127
    %v3020 = vpop.f32.mrf.mxu0
    %v3021 = vadd.f32 0.0, %v3020
    %v3022 = vpop.f32.mrf.mxu0
    %3023 = vmatprep.mubr.f32.mxu0 %v1228
    %3024 = vmatmul.mubr.f32.gmra.mxu0 %v1129
    %v3025 = vpop.f32.mrf.mxu0
    %v3026 = vadd.f32 0.0, %v3025
    %v3027 = vpop.f32.mrf.mxu0
    %3028 = vmatprep.mubr.f32.mxu0 %v1231
    %3029 = vmatmul.mubr.f32.gmra.mxu0 %v1131
    %v3030 = vpop.f32.mrf.mxu0
    %v3031 = vadd.f32 0.0, %v3030
    %v3032 = vpop.f32.mrf.mxu0
    %3033 = vmatprep.mubr.f32.mxu0 %v1234
    %3034 = vmatmul.mubr.f32.gmra.mxu0 %v1133
    %v3035 = vpop.f32.mrf.mxu0
    %v3036 = vadd.f32 0.0, %v3035
    %v3037 = vpop.f32.mrf.mxu0
    %3038 = vmatprep.mubr.f32.mxu0 %v1237
    %3039 = vmatmul.mubr.f32.gmra.mxu0 %v1135
    %v3040 = vpop.f32.mrf.mxu0
    %v3041 = vadd.f32 0.0, %v3040
    %v3042 = vpop.f32.mrf.mxu0
    %3043 = vmatprep.mubr.f32.mxu0 %v1240
    %3044 = vmatmul.mubr.f32.gmra.mxu0 %v1137
    %v3045 = vpop.f32.mrf.mxu0
    %v3046 = vadd.f32 0.0, %v3045
    %v3047 = vpop.f32.mrf.mxu0
    %3048 = vmatprep.mubr.f32.mxu0 %v1243
    %3049 = vmatmul.mubr.f32.gmra.mxu0 %v1139
    %v3050 = vpop.f32.mrf.mxu0
    %v3051 = vadd.f32 0.0, %v3050
    %v3052 = vpop.f32.mrf.mxu0
    %3053 = vmatprep.mubr.f32.mxu0 %v1246
    %3054 = vmatmul.mubr.f32.gmra.mxu0 %v1141
    %v3055 = vpop.f32.mrf.mxu0
    %v3056 = vadd.f32 0.0, %v3055
    %v3057 = vpop.f32.mrf.mxu0
    %3058 = vmatprep.mubr.f32.mxu0 %v1249
    %3059 = vmatmul.mubr.f32.gmra.mxu0 %v1143
    %v3060 = vpop.f32.mrf.mxu0
    %v3061 = vadd.f32 0.0, %v3060
    %v3062 = vpop.f32.mrf.mxu0
    %3063 = vmatprep.mubr.f32.mxu0 %v1252
    %3064 = vmatmul.mubr.f32.gmra.mxu0 %v1145
    %v3065 = vpop.f32.mrf.mxu0
    %v3066 = vadd.f32 0.0, %v3065
    %v3067 = vpop.f32.mrf.mxu0
    %3068 = vmatprep.mubr.f32.mxu0 %v1255
    %3069 = vmatmul.mubr.f32.gmra.mxu0 %v1147
    %v3070 = vpop.f32.mrf.mxu0
    %v3071 = vadd.f32 0.0, %v3070
    %v3072 = vpop.f32.mrf.mxu0
    %3073 = vmatprep.mubr.f32.mxu0 %v1258
    %3074 = vmatmul.mubr.f32.gmra.mxu0 %v1149
    %v3075 = vpop.f32.mrf.mxu0
    %v3076 = vadd.f32 0.0, %v3075
    %v3077 = vpop.f32.mrf.mxu0
    %3078 = vmatprep.mubr.f32.mxu0 %v1261
    %3079 = vmatmul.mubr.f32.gmra.mxu0 %v1151
    %v3080 = vpop.f32.mrf.mxu0
    %v3081 = vadd.f32 0.0, %v3080
    %v3082 = vpop.f32.mrf.mxu0
    %3083 = vmatprep.mubr.f32.mxu0 %v1264
    %3084 = vmatmul.mubr.f32.gmra.mxu0 %v1153
    %v3085 = vpop.f32.mrf.mxu0
    %v3086 = vadd.f32 0.0, %v3085
    %v3087 = vpop.f32.mrf.mxu0
    %3088 = vmatprep.mubr.f32.mxu0 %v1267
    %3089 = vmatmul.mubr.f32.gmra.mxu0 %v1155
    %v3090 = vpop.f32.mrf.mxu0
    %v3091 = vadd.f32 0.0, %v3090
    %v3092 = vpop.f32.mrf.mxu0
    %3093 = vmatprep.mubr.f32.mxu0 %v1270
    %3094 = vmatmul.mubr.f32.gmra.mxu0 %v1157
    %v3095 = vpop.f32.mrf.mxu0
    %v3096 = vadd.f32 0.0, %v3095
    %v3097 = vpop.f32.mrf.mxu0
    %3098 = vdwg.mxu0
    %3099 = vmatprep.subr.mxu0 0.0
    %3100 = vmatpush1.msra.mxu0 %v1097
    %3101 = vmatprep.subr.mxu0 0.0
    %3102 = vmatpush1.msra.mxu0 %v1096
    %3103 = vmatprep.subr.mxu0 0.0
    %3104 = vmatpush1.msra.mxu0 %v1095
    %3105 = vmatprep.subr.mxu0 0.0
    %3106 = vmatpush1.msra.mxu0 %v1094
    %3107 = vmatprep.subr.mxu0 0.0
    %3108 = vmatpush1.msra.mxu0 %v1093
    %3109 = vmatprep.subr.mxu0 0.0
    %3110 = vmatpush1.msra.mxu0 %v1092
    %3111 = vmatprep.subr.mxu0 0.0
    %3112 = vmatpush1.msra.mxu0 %v1091
    %3113 = vmatprep.subr.mxu0 0.0
    %3114 = vmatpush1.msra.mxu0 %v1090
    %3115 = vmatprep.subr.mxu0 0.0
    %3116 = vmatpush1.msra.mxu0 %v1089
    %3117 = vmatprep.subr.mxu0 0.0
    %3118 = vmatpush1.msra.mxu0 %v1088
    %3119 = vmatprep.subr.mxu0 0.0
    %3120 = vmatpush1.msra.mxu0 %v1087
    %3121 = vmatprep.subr.mxu0 0.0
    %3122 = vmatpush1.msra.mxu0 %v1086
    %3123 = vmatprep.subr.mxu0 0.0
    %3124 = vmatpush1.msra.mxu0 %v1085
    %3125 = vmatprep.subr.mxu0 0.0
    %3126 = vmatpush1.msra.mxu0 %v1084
    %3127 = vmatprep.subr.mxu0 0.0
    %3128 = vmatpush1.msra.mxu0 %v1083
    %3129 = vmatprep.subr.mxu0 0.0
    %3130 = vmatpush1.msra.mxu0 %v1082
    %3131 = vmatprep.subr.mxu0 0.0
    %3132 = vmatpush2.msra.mxu0 0.0
    %3133 = vmatprep.subr.mxu0 0.0
    %3134 = vmatpush2.msra.mxu0 0.0
    %3135 = vmatprep.subr.mxu0 0.0
    %3136 = vmatpush2.msra.mxu0 0.0
    %3137 = vmatprep.subr.mxu0 0.0
    %3138 = vmatpush2.msra.mxu0 0.0
    %3139 = vmatprep.subr.mxu0 0.0
    %3140 = vmatpush2.msra.mxu0 0.0
    %3141 = vmatprep.subr.mxu0 0.0
    %3142 = vmatpush2.msra.mxu0 0.0
    %3143 = vmatprep.subr.mxu0 0.0
    %3144 = vmatpush2.msra.mxu0 0.0
    %3145 = vmatprep.subr.mxu0 0.0
    %3146 = vmatpush2.msra.mxu0 0.0
    %3147 = vmatprep.subr.mxu0 0.0
    %3148 = vmatpush2.msra.mxu0 0.0
    %3149 = vmatprep.subr.mxu0 0.0
    %3150 = vmatpush2.msra.mxu0 0.0
    %3151 = vmatprep.subr.mxu0 0.0
    %3152 = vmatpush2.msra.mxu0 0.0
    %3153 = vmatprep.subr.mxu0 0.0
    %3154 = vmatpush2.msra.mxu0 %v1102
    %3155 = vmatprep.subr.mxu0 0.0
    %3156 = vmatpush2.msra.mxu0 %v1101
    %3157 = vmatprep.subr.mxu0 0.0
    %3158 = vmatpush2.msra.mxu0 %v1100
    %3159 = vmatprep.subr.mxu0 0.0
    %3160 = vmatpush2.msra.mxu0 %v1099
    %3161 = vmatprep.subr.mxu0 0.0
    %3162 = vmatpush2.msra.mxu0 %v1098
    %3163 = vmatprep.mubr.f32.mxu0 %v1189
    %3164 = vmatmul.mubr.f32.gmra.mxu0 %v1103
    %v3165 = vpop.f32.mrf.mxu0
    %v3166 = vadd.f32 0.0, %v3165
    %v3167 = vpop.f32.mrf.mxu0
    %3168 = vmatprep.mubr.f32.mxu0 %v1192
    %3169 = vmatmul.mubr.f32.gmra.mxu0 %v1105
    %v3170 = vpop.f32.mrf.mxu0
    %v3171 = vadd.f32 0.0, %v3170
    %v3172 = vpop.f32.mrf.mxu0
    %3173 = vmatprep.mubr.f32.mxu0 %v1195
    %3174 = vmatmul.mubr.f32.gmra.mxu0 %v1107
    %v3175 = vpop.f32.mrf.mxu0
    %v3176 = vadd.f32 0.0, %v3175
    %v3177 = vpop.f32.mrf.mxu0
    %3178 = vmatprep.mubr.f32.mxu0 %v1198
    %3179 = vmatmul.mubr.f32.gmra.mxu0 %v1109
    %v3180 = vpop.f32.mrf.mxu0
    %v3181 = vadd.f32 0.0, %v3180
    %v3182 = vpop.f32.mrf.mxu0
    %3183 = vmatprep.mubr.f32.mxu0 %v1201
    %3184 = vmatmul.mubr.f32.gmra.mxu0 %v1111
    %v3185 = vpop.f32.mrf.mxu0
    %v3186 = vadd.f32 0.0, %v3185
    %v3187 = vpop.f32.mrf.mxu0
    %3188 = vmatprep.mubr.f32.mxu0 %v1204
    %3189 = vmatmul.mubr.f32.gmra.mxu0 %v1113
    %v3190 = vpop.f32.mrf.mxu0
    %v3191 = vadd.f32 0.0, %v3190
    %v3192 = vpop.f32.mrf.mxu0
    %3193 = vmatprep.mubr.f32.mxu0 %v1207
    %3194 = vmatmul.mubr.f32.gmra.mxu0 %v1115
    %v3195 = vpop.f32.mrf.mxu0
    %v3196 = vadd.f32 0.0, %v3195
    %v3197 = vpop.f32.mrf.mxu0
    %3198 = vmatprep.mubr.f32.mxu0 %v1210
    %3199 = vmatmul.mubr.f32.gmra.mxu0 %v1117
    %v3200 = vpop.f32.mrf.mxu0
    %v3201 = vadd.f32 0.0, %v3200
    %v3202 = vpop.f32.mrf.mxu0
    %3203 = vmatprep.mubr.f32.mxu0 %v1213
    %3204 = vmatmul.mubr.f32.gmra.mxu0 %v1119
    %v3205 = vpop.f32.mrf.mxu0
    %v3206 = vadd.f32 0.0, %v3205
    %v3207 = vpop.f32.mrf.mxu0
    %3208 = vmatprep.mubr.f32.mxu0 %v1216
    %3209 = vmatmul.mubr.f32.gmra.mxu0 %v1121
    %v3210 = vpop.f32.mrf.mxu0
    %v3211 = vadd.f32 0.0, %v3210
    %v3212 = vpop.f32.mrf.mxu0
    %3213 = vmatprep.mubr.f32.mxu0 %v1219
    %3214 = vmatmul.mubr.f32.gmra.mxu0 %v1123
    %v3215 = vpop.f32.mrf.mxu0
    %v3216 = vadd.f32 0.0, %v3215
    %v3217 = vpop.f32.mrf.mxu0
    %3218 = vmatprep.mubr.f32.mxu0 %v1222
    %3219 = vmatmul.mubr.f32.gmra.mxu0 %v1125
    %v3220 = vpop.f32.mrf.mxu0
    %v3221 = vadd.f32 0.0, %v3220
    %v3222 = vpop.f32.mrf.mxu0
    %3223 = vmatprep.mubr.f32.mxu0 %v1225
    %3224 = vmatmul.mubr.f32.gmra.mxu0 %v1127
    %v3225 = vpop.f32.mrf.mxu0
    %v3226 = vadd.f32 0.0, %v3225
    %v3227 = vpop.f32.mrf.mxu0
    %3228 = vmatprep.mubr.f32.mxu0 %v1228
    %3229 = vmatmul.mubr.f32.gmra.mxu0 %v1129
    %v3230 = vpop.f32.mrf.mxu0
    %v3231 = vadd.f32 0.0, %v3230
    %v3232 = vpop.f32.mrf.mxu0
    %3233 = vmatprep.mubr.f32.mxu0 %v1231
    %3234 = vmatmul.mubr.f32.gmra.mxu0 %v1131
    %v3235 = vpop.f32.mrf.mxu0
    %v3236 = vadd.f32 0.0, %v3235
    %v3237 = vpop.f32.mrf.mxu0
    %3238 = vmatprep.mubr.f32.mxu0 %v1234
    %3239 = vmatmul.mubr.f32.gmra.mxu0 %v1133
    %v3240 = vpop.f32.mrf.mxu0
    %v3241 = vadd.f32 0.0, %v3240
    %v3242 = vpop.f32.mrf.mxu0
    %3243 = vmatprep.mubr.f32.mxu0 %v1237
    %3244 = vmatmul.mubr.f32.gmra.mxu0 %v1135
    %v3245 = vpop.f32.mrf.mxu0
    %v3246 = vadd.f32 0.0, %v3245
    %v3247 = vpop.f32.mrf.mxu0
    %3248 = vmatprep.mubr.f32.mxu0 %v1240
    %3249 = vmatmul.mubr.f32.gmra.mxu0 %v1137
    %v3250 = vpop.f32.mrf.mxu0
    %v3251 = vadd.f32 0.0, %v3250
    %v3252 = vpop.f32.mrf.mxu0
    %3253 = vmatprep.mubr.f32.mxu0 %v1243
    %3254 = vmatmul.mubr.f32.gmra.mxu0 %v1139
    %v3255 = vpop.f32.mrf.mxu0
    %v3256 = vadd.f32 0.0, %v3255
    %v3257 = vpop.f32.mrf.mxu0
    %3258 = vmatprep.mubr.f32.mxu0 %v1246
    %3259 = vmatmul.mubr.f32.gmra.mxu0 %v1141
    %v3260 = vpop.f32.mrf.mxu0
    %v3261 = vadd.f32 0.0, %v3260
    %v3262 = vpop.f32.mrf.mxu0
    %3263 = vmatprep.mubr.f32.mxu0 %v1249
    %3264 = vmatmul.mubr.f32.gmra.mxu0 %v1143
    %v3265 = vpop.f32.mrf.mxu0
    %v3266 = vadd.f32 0.0, %v3265
    %v3267 = vpop.f32.mrf.mxu0
    %3268 = vmatprep.mubr.f32.mxu0 %v1252
    %3269 = vmatmul.mubr.f32.gmra.mxu0 %v1145
    %v3270 = vpop.f32.mrf.mxu0
    %v3271 = vadd.f32 0.0, %v3270
    %v3272 = vpop.f32.mrf.mxu0
    %3273 = vmatprep.mubr.f32.mxu0 %v1255
    %3274 = vmatmul.mubr.f32.gmra.mxu0 %v1147
    %v3275 = vpop.f32.mrf.mxu0
    %v3276 = vadd.f32 0.0, %v3275
    %v3277 = vpop.f32.mrf.mxu0
    %3278 = vmatprep.mubr.f32.mxu0 %v1258
    %3279 = vmatmul.mubr.f32.gmra.mxu0 %v1149
    %v3280 = vpop.f32.mrf.mxu0
    %v3281 = vadd.f32 0.0, %v3280
    %v3282 = vpop.f32.mrf.mxu0
    %3283 = vmatprep.mubr.f32.mxu0 %v1261
    %3284 = vmatmul.mubr.f32.gmra.mxu0 %v1151
    %v3285 = vpop.f32.mrf.mxu0
    %v3286 = vadd.f32 0.0, %v3285
    %v3287 = vpop.f32.mrf.mxu0
    %3288 = vmatprep.mubr.f32.mxu0 %v1264
    %3289 = vmatmul.mubr.f32.gmra.mxu0 %v1153
    %v3290 = vpop.f32.mrf.mxu0
    %v3291 = vadd.f32 0.0, %v3290
    %v3292 = vpop.f32.mrf.mxu0
    %3293 = vmatprep.mubr.f32.mxu0 %v1267
    %3294 = vmatmul.mubr.f32.gmra.mxu0 %v1155
    %v3295 = vpop.f32.mrf.mxu0
    %v3296 = vadd.f32 0.0, %v3295
    %v3297 = vpop.f32.mrf.mxu0
    %3298 = vmatprep.mubr.f32.mxu0 %v1270
    %3299 = vmatmul.mubr.f32.gmra.mxu0 %v1157
    %v3300 = vpop.f32.mrf.mxu0
    %v3301 = vadd.f32 0.0, %v3300
    %v3302 = vpop.f32.mrf.mxu0
    %3303 = vdwg.mxu0
    %v3304 = vmax.f32 %v2961, %v3166
    %v3305 = vmax.f32 %v2966, %v3171
    %v3306 = vmax.f32 %v2971, %v3176
    %v3307 = vmax.f32 %v2976, %v3181
    %v3308 = vmax.f32 %v2981, %v3186
    %v3309 = vmax.f32 %v2986, %v3191
    %v3310 = vmax.f32 %v2991, %v3196
    %v3311 = vmax.f32 %v2996, %v3201
    %v3312 = vmax.f32 %v3001, %v3206
    %v3313 = vmax.f32 %v3006, %v3211
    %v3314 = vmax.f32 %v3011, %v3216
    %v3315 = vmax.f32 %v3016, %v3221
    %v3316 = vmax.f32 %v3021, %v3226
    %v3317 = vmax.f32 %v3026, %v3231
    %v3318 = vmax.f32 %v3031, %v3236
    %v3319 = vmax.f32 %v3036, %v3241
    %v3320 = vmax.f32 %v3041, %v3246
    %v3321 = vmax.f32 %v3046, %v3251
    %v3322 = vmax.f32 %v3051, %v3256
    %v3323 = vmax.f32 %v3056, %v3261
    %v3324 = vmax.f32 %v3061, %v3266
    %v3325 = vmax.f32 %v3066, %v3271
    %v3326 = vmax.f32 %v3071, %v3276
    %v3327 = vmax.f32 %v3076, %v3281
    %v3328 = vmax.f32 %v3081, %v3286
    %v3329 = vmax.f32 %v3086, %v3291
    %v3330 = vmax.f32 %v3091, %v3296
    %v3331 = vmax.f32 %v3096, %v3301
    %v3332 = vadd.f32 %v3304, %v1713
    %v3333 = vadd.f32 %v3305, %v1718
    %v3334 = vadd.f32 %v3306, %v1723
    %v3335 = vadd.f32 %v3307, %v1728
    %v3336 = vadd.f32 %v3308, %v1733
    %v3337 = vadd.f32 %v3309, %v1738
    %v3338 = vadd.f32 %v3310, %v1743
    %v3339 = vadd.f32 %v3311, %v1748
    %v3340 = vadd.f32 %v3312, %v1753
    %v3341 = vadd.f32 %v3313, %v1758
    %v3342 = vadd.f32 %v3314, %v1763
    %v3343 = vadd.f32 %v3315, %v1768
    %v3344 = vadd.f32 %v3316, %v1773
    %v3345 = vadd.f32 %v3317, %v1778
    %v3346 = vadd.f32 %v3318, %v1783
    %v3347 = vadd.f32 %v3319, %v1788
    %v3348 = vadd.f32 %v3320, %v1793
    %v3349 = vadd.f32 %v3321, %v1798
    %v3350 = vadd.f32 %v3322, %v1803
    %v3351 = vadd.f32 %v3323, %v1808
    %v3352 = vadd.f32 %v3324, %v1813
    %v3353 = vadd.f32 %v3325, %v1818
    %v3354 = vadd.f32 %v3326, %v1823
    %v3355 = vadd.f32 %v3327, %v1828
    %v3356 = vadd.f32 %v3328, %v1833
    %v3357 = vadd.f32 %v3329, %v1838
    %v3358 = vadd.f32 %v3330, %v1843
    %v3359 = vadd.f32 %v3331, %v1848
    %v3360 = vmax.f32 %v3332, 0.0
    %v3361 = vmax.f32 %v3333, 0.0
    %v3362 = vmax.f32 %v3334, 0.0
    %v3363 = vmax.f32 %v3335, 0.0
    %v3364 = vmax.f32 %v3336, 0.0
    %v3365 = vmax.f32 %v3337, 0.0
    %v3366 = vmax.f32 %v3338, 0.0
    %v3367 = vmax.f32 %v3339, 0.0
    %v3368 = vmax.f32 %v3340, 0.0
    %v3369 = vmax.f32 %v3341, 0.0
    %v3370 = vmax.f32 %v3342, 0.0
    %v3371 = vmax.f32 %v3343, 0.0
    %v3372 = vmax.f32 %v3344, 0.0
    %v3373 = vmax.f32 %v3345, 0.0
    %v3374 = vmax.f32 %v3346, 0.0
    %v3375 = vmax.f32 %v3347, 0.0
    %v3376 = vmax.f32 %v3348, 0.0
    %v3377 = vmax.f32 %v3349, 0.0
    %v3378 = vmax.f32 %v3350, 0.0
    %v3379 = vmax.f32 %v3351, 0.0
    %v3380 = vmax.f32 %v3352, 0.0
    %v3381 = vmax.f32 %v3353, 0.0
    %v3382 = vmax.f32 %v3354, 0.0
    %v3383 = vmax.f32 %v3355, 0.0
    %v3384 = vmax.f32 %v3356, 0.0
    %v3385 = vmax.f32 %v3357, 0.0
    %v3386 = vmax.f32 %v3358, 0.0
    %v3387 = vmax.f32 %v3359, 0.0
    %v3388 = vld [vmem:[%s5] sm:$0xff]
    %v3389 = vld [vmem:[%s5 + $0x8] sm:$0xff]
    %v3390 = vld [vmem:[%s5 + $0x10] sm:$0xff]
    %v3391 = vld [vmem:[%s5 + $0x18] sm:$0xff]
    %v3392 = vld [vmem:[%s5 + $0x20] sm:$0xff]
    %v3393 = vld [vmem:[%s5 + $0x28] sm:$0xff]
    %v3394 = vld [vmem:[%s5 + $0x30] sm:$0xff]
    %v3395 = vld [vmem:[%s5 + $0x38] sm:$0xff]
    %v3396 = vld [vmem:[%s5 + $0x40] sm:$0xff]
    %v3397 = vld [vmem:[%s5 + $0x48] sm:$0xf]
    %v3398 = vld [vmem:[%s5 + $0x50] sm:$0xf]
    %v3399 = vld [vmem:[%s5 + $0x58] sm:$0xf]
    %v3400 = vld [vmem:[%s5 + $0x60] sm:$0xff]
    %v3401 = vld [vmem:[%s5 + $0x68] sm:$0xff]
    %v3402 = vld [vmem:[%s5 + $0x70] sm:$0xff]
    %v3403 = vld [vmem:[%s5 + $0x78] sm:$0xff]
    %v3404 = vld [vmem:[%s5 + $0x80] sm:$0xff]
    %v3405 = vld [vmem:[%s5 + $0x88] sm:$0xff]
    %v3406 = vld [vmem:[%s5 + $0x90] sm:$0xff]
    %v3407 = vld [vmem:[%s5 + $0x98] sm:$0xff]
    %v3408 = vld [vmem:[%s5 + $0xa0] sm:$0xff]
    %v3409 = vld [vmem:[%s5 + $0xa8] sm:$0xf]
    %v3410 = vld [vmem:[%s5 + $0xb0] sm:$0xf]
    %v3411 = vld [vmem:[%s5 + $0xb8] sm:$0xf]
    %v3412 = vld [vmem:[%s6] sm:$0xff]
    %v3413 = vld [vmem:[%s6 + $0x8] sm:$0xff]
    %v3414 = vld [vmem:[%s6 + $0x10] sm:$0xff]
    %v3415 = vld [vmem:[%s6 + $0x18] sm:$0xf]
    %vm3416 = vcmask 654336
    %v3418 = vsel %vm3416, %v3390, 0
    %v3421 = vsel %vm3416, %v3393, 0
    %v3424 = vsel %vm3416, %v3396, 0
    %v3427 = vsel %vm3416, %v3399, 0
    %3429 = vmatprep.subr.mxu0 0.0
    %3430 = vmatpush1.msra.mxu0 %v1900
    %3431 = vmatprep.subr.mxu0 0.0
    %3432 = vmatpush1.msra.mxu0 %v1899
    %3433 = vmatprep.subr.mxu0 0.0
    %3434 = vmatpush1.msra.mxu0 0.0
    %3435 = vmatprep.subr.mxu0 0.0
    %3436 = vmatpush1.msra.mxu0 0.0
    %3437 = vmatprep.subr.mxu0 0.0
    %3438 = vmatpush1.msra.mxu0 0.0
    %3439 = vmatprep.subr.mxu0 0.0
    %3440 = vmatpush1.msra.mxu0 0.0
    %3441 = vmatprep.subr.mxu0 0.0
    %3442 = vmatpush1.msra.mxu0 0.0
    %3443 = vmatprep.subr.mxu0 0.0
    %3444 = vmatpush1.msra.mxu0 0.0
    %3445 = vmatprep.subr.mxu0 0.0
    %3446 = vmatpush1.msra.mxu0 0.0
    %3447 = vmatprep.subr.mxu0 0.0
    %3448 = vmatpush1.msra.mxu0 0.0
    %3449 = vmatprep.subr.mxu0 0.0
    %3450 = vmatpush1.msra.mxu0 0.0
    %3451 = vmatprep.subr.mxu0 0.0
    %3452 = vmatpush1.msra.mxu0 0.0
    %3453 = vmatprep.subr.mxu0 0.0
    %3454 = vmatpush1.msra.mxu0 0.0
    %3455 = vmatprep.subr.mxu0 0.0
    %3456 = vmatpush1.msra.mxu0 0.0
    %3457 = vmatprep.subr.mxu0 0.0
    %3458 = vmatpush1.msra.mxu0 0.0
    %3459 = vmatprep.subr.mxu0 0.0
    %3460 = vmatpush1.msra.mxu0 0.0
    %3461 = vmatprep.subr.mxu0 0.0
    %3462 = vmatpush2.msra.mxu0 %v2396
    %3463 = vmatprep.subr.mxu0 0.0
    %3464 = vmatpush2.msra.mxu0 %v2395
    %3465 = vmatprep.subr.mxu0 0.0
    %3466 = vmatpush2.msra.mxu0 %v2394
    %3467 = vmatprep.subr.mxu0 0.0
    %3468 = vmatpush2.msra.mxu0 %v2393
    %3469 = vmatprep.subr.mxu0 0.0
    %3470 = vmatpush2.msra.mxu0 %v1884
    %3471 = vmatprep.subr.mxu0 0.0
    %3472 = vmatpush2.msra.mxu0 %v1883
    %3473 = vmatprep.subr.mxu0 0.0
    %3474 = vmatpush2.msra.mxu0 %v1882
    %3475 = vmatprep.subr.mxu0 0.0
    %3476 = vmatpush2.msra.mxu0 %v1881
    %3477 = vmatprep.subr.mxu0 0.0
    %3478 = vmatpush2.msra.mxu0 %v1880
    %3479 = vmatprep.subr.mxu0 0.0
    %3480 = vmatpush2.msra.mxu0 %v1879
    %3481 = vmatprep.subr.mxu0 0.0
    %3482 = vmatpush2.msra.mxu0 %v1878
    %3483 = vmatprep.subr.mxu0 0.0
    %3484 = vmatpush2.msra.mxu0 %v1905
    %3485 = vmatprep.subr.mxu0 0.0
    %3486 = vmatpush2.msra.mxu0 %v1904
    %3487 = vmatprep.subr.mxu0 0.0
    %3488 = vmatpush2.msra.mxu0 %v1903
    %3489 = vmatprep.subr.mxu0 0.0
    %3490 = vmatpush2.msra.mxu0 %v1902
    %3491 = vmatprep.subr.mxu0 0.0
    %3492 = vmatpush2.msra.mxu0 %v1901
    %3493 = vmatprep.mubr.f32.mxu0 %v3389
    %3494 = vmatmul.mubr.f32.gmra.mxu0 %v3388
    %v3495 = vpop.f32.mrf.mxu0
    %v3496 = vadd.f32 0.0, %v3495
    %v3497 = vpop.f32.mrf.mxu0
    %3498 = vmatprep.mubr.f32.mxu0 %v3392
    %3499 = vmatmul.mubr.f32.gmra.mxu0 %v3391
    %v3500 = vpop.f32.mrf.mxu0
    %v3501 = vadd.f32 0.0, %v3500
    %v3502 = vpop.f32.mrf.mxu0
    %3503 = vmatprep.mubr.f32.mxu0 %v3395
    %3504 = vmatmul.mubr.f32.gmra.mxu0 %v3394
    %v3505 = vpop.f32.mrf.mxu0
    %v3506 = vadd.f32 0.0, %v3505
    %v3507 = vpop.f32.mrf.mxu0
    %3508 = vmatprep.mubr.f32.mxu0 %v3398
    %3509 = vmatmul.mubr.f32.gmra.mxu0 %v3397
    %v3510 = vpop.f32.mrf.mxu0
    %v3511 = vadd.f32 0.0, %v3510
    %v3512 = vpop.f32.mrf.mxu0
    %3513 = vdwg.mxu0
    %3514 = vmatprep.subr.mxu0 0.0
    %3515 = vmatpush1.msra.mxu0 0.0
    %3516 = vmatprep.subr.mxu0 0.0
    %3517 = vmatpush1.msra.mxu0 0.0
    %3518 = vmatprep.subr.mxu0 0.0
    %3519 = vmatpush1.msra.mxu0 0.0
    %3520 = vmatprep.subr.mxu0 0.0
    %3521 = vmatpush1.msra.mxu0 0.0
    %3522 = vmatprep.subr.mxu0 0.0
    %3523 = vmatpush1.msra.mxu0 0.0
    %3524 = vmatprep.subr.mxu0 0.0
    %3525 = vmatpush1.msra.mxu0 0.0
    %3526 = vmatprep.subr.mxu0 0.0
    %3527 = vmatpush1.msra.mxu0 %v2378
    %3528 = vmatprep.subr.mxu0 0.0
    %3529 = vmatpush1.msra.mxu0 %v2377
    %3530 = vmatprep.subr.mxu0 0.0
    %3531 = vmatpush1.msra.mxu0 %v2376
    %3532 = vmatprep.subr.mxu0 0.0
    %3533 = vmatpush1.msra.mxu0 %v2375
    %3534 = vmatprep.subr.mxu0 0.0
    %3535 = vmatpush1.msra.mxu0 %v2374
    %3536 = vmatprep.subr.mxu0 0.0
    %3537 = vmatpush1.msra.mxu0 %v2373
    %3538 = vmatprep.subr.mxu0 0.0
    %3539 = vmatpush1.msra.mxu0 %v2372
    %3540 = vmatprep.subr.mxu0 0.0
    %3541 = vmatpush1.msra.mxu0 %v2399
    %3542 = vmatprep.subr.mxu0 0.0
    %3543 = vmatpush1.msra.mxu0 %v2398
    %3544 = vmatprep.subr.mxu0 0.0
    %3545 = vmatpush1.msra.mxu0 %v2397
    %3546 = vmatprep.subr.mxu0 0.0
    %3547 = vmatpush2.msra.mxu0 0.0
    %3548 = vmatprep.subr.mxu0 0.0
    %3549 = vmatpush2.msra.mxu0 0.0
    %3550 = vmatprep.subr.mxu0 0.0
    %3551 = vmatpush2.msra.mxu0 0.0
    %3552 = vmatprep.subr.mxu0 0.0
    %3553 = vmatpush2.msra.mxu0 0.0
    %3554 = vmatprep.subr.mxu0 0.0
    %3555 = vmatpush2.msra.mxu0 0.0
    %3556 = vmatprep.subr.mxu0 0.0
    %3557 = vmatpush2.msra.mxu0 0.0
    %3558 = vmatprep.subr.mxu0 0.0
    %3559 = vmatpush2.msra.mxu0 0.0
    %3560 = vmatprep.subr.mxu0 0.0
    %3561 = vmatpush2.msra.mxu0 0.0
    %3562 = vmatprep.subr.mxu0 0.0
    %3563 = vmatpush2.msra.mxu0 0.0
    %3564 = vmatprep.subr.mxu0 0.0
    %3565 = vmatpush2.msra.mxu0 0.0
    %3566 = vmatprep.subr.mxu0 0.0
    %3567 = vmatpush2.msra.mxu0 0.0
    %3568 = vmatprep.subr.mxu0 0.0
    %3569 = vmatpush2.msra.mxu0 0.0
    %3570 = vmatprep.subr.mxu0 0.0
    %3571 = vmatpush2.msra.mxu0 0.0
    %3572 = vmatprep.subr.mxu0 0.0
    %3573 = vmatpush2.msra.mxu0 0.0
    %3574 = vmatprep.subr.mxu0 0.0
    %3575 = vmatpush2.msra.mxu0 0.0
    %3576 = vmatprep.subr.mxu0 0.0
    %3577 = vmatpush2.msra.mxu0 0.0
    %3578 = vmatprep.mubr.f32.mxu0 0.0
    %3579 = vmatmul.mubr.f32.gmra.mxu0 %v3418
    %v3580 = vpop.f32.mrf.mxu0
    %v3581 = vadd.f32 %v3496, %v3580
    %v3582 = vpop.f32.mrf.mxu0
    %3583 = vmatprep.mubr.f32.mxu0 0.0
    %3584 = vmatmul.mubr.f32.gmra.mxu0 %v3421
    %v3585 = vpop.f32.mrf.mxu0
    %v3586 = vadd.f32 %v3501, %v3585
    %v3587 = vpop.f32.mrf.mxu0
    %3588 = vmatprep.mubr.f32.mxu0 0.0
    %3589 = vmatmul.mubr.f32.gmra.mxu0 %v3424
    %v3590 = vpop.f32.mrf.mxu0
    %v3591 = vadd.f32 %v3506, %v3590
    %v3592 = vpop.f32.mrf.mxu0
    %3593 = vmatprep.mubr.f32.mxu0 0.0
    %3594 = vmatmul.mubr.f32.gmra.mxu0 %v3427
    %v3595 = vpop.f32.mrf.mxu0
    %v3596 = vadd.f32 %v3511, %v3595
    %v3597 = vpop.f32.mrf.mxu0
    %3598 = vdwg.mxu0
    %v3600 = vsel %vm3416, %v3402, 0
    %v3603 = vsel %vm3416, %v3405, 0
    %v3606 = vsel %vm3416, %v3408, 0
    %v3609 = vsel %vm3416, %v3411, 0
    %3611 = vmatprep.subr.mxu0 0.0
    %3612 = vmatpush1.msra.mxu0 %v1886
    %3613 = vmatprep.subr.mxu0 0.0
    %3614 = vmatpush1.msra.mxu0 %v1885
    %3615 = vmatprep.subr.mxu0 0.0
    %3616 = vmatpush1.msra.mxu0 0.0
    %3617 = vmatprep.subr.mxu0 0.0
    %3618 = vmatpush1.msra.mxu0 0.0
    %3619 = vmatprep.subr.mxu0 0.0
    %3620 = vmatpush1.msra.mxu0 0.0
    %3621 = vmatprep.subr.mxu0 0.0
    %3622 = vmatpush1.msra.mxu0 0.0
    %3623 = vmatprep.subr.mxu0 0.0
    %3624 = vmatpush1.msra.mxu0 0.0
    %3625 = vmatprep.subr.mxu0 0.0
    %3626 = vmatpush1.msra.mxu0 0.0
    %3627 = vmatprep.subr.mxu0 0.0
    %3628 = vmatpush1.msra.mxu0 0.0
    %3629 = vmatprep.subr.mxu0 0.0
    %3630 = vmatpush1.msra.mxu0 0.0
    %3631 = vmatprep.subr.mxu0 0.0
    %3632 = vmatpush1.msra.mxu0 0.0
    %3633 = vmatprep.subr.mxu0 0.0
    %3634 = vmatpush1.msra.mxu0 0.0
    %3635 = vmatprep.subr.mxu0 0.0
    %3636 = vmatpush1.msra.mxu0 0.0
    %3637 = vmatprep.subr.mxu0 0.0
    %3638 = vmatpush1.msra.mxu0 0.0
    %3639 = vmatprep.subr.mxu0 0.0
    %3640 = vmatpush1.msra.mxu0 0.0
    %3641 = vmatprep.subr.mxu0 0.0
    %3642 = vmatpush1.msra.mxu0 0.0
    %3643 = vmatprep.subr.mxu0 0.0
    %3644 = vmatpush2.msra.mxu0 %v2382
    %3645 = vmatprep.subr.mxu0 0.0
    %3646 = vmatpush2.msra.mxu0 %v2381
    %3647 = vmatprep.subr.mxu0 0.0
    %3648 = vmatpush2.msra.mxu0 %v2380
    %3649 = vmatprep.subr.mxu0 0.0
    %3650 = vmatpush2.msra.mxu0 %v2379
    %3651 = vmatprep.subr.mxu0 0.0
    %3652 = vmatpush2.msra.mxu0 %v1898
    %3653 = vmatprep.subr.mxu0 0.0
    %3654 = vmatpush2.msra.mxu0 %v1897
    %3655 = vmatprep.subr.mxu0 0.0
    %3656 = vmatpush2.msra.mxu0 %v1896
    %3657 = vmatprep.subr.mxu0 0.0
    %3658 = vmatpush2.msra.mxu0 %v1895
    %3659 = vmatprep.subr.mxu0 0.0
    %3660 = vmatpush2.msra.mxu0 %v1894
    %3661 = vmatprep.subr.mxu0 0.0
    %3662 = vmatpush2.msra.mxu0 %v1893
    %3663 = vmatprep.subr.mxu0 0.0
    %3664 = vmatpush2.msra.mxu0 %v1892
    %3665 = vmatprep.subr.mxu0 0.0
    %3666 = vmatpush2.msra.mxu0 %v1891
    %3667 = vmatprep.subr.mxu0 0.0
    %3668 = vmatpush2.msra.mxu0 %v1890
    %3669 = vmatprep.subr.mxu0 0.0
    %3670 = vmatpush2.msra.mxu0 %v1889
    %3671 = vmatprep.subr.mxu0 0.0
    %3672 = vmatpush2.msra.mxu0 %v1888
    %3673 = vmatprep.subr.mxu0 0.0
    %3674 = vmatpush2.msra.mxu0 %v1887
    %3675 = vmatprep.mubr.f32.mxu0 %v3401
    %3676 = vmatmul.mubr.f32.gmra.mxu0 %v3400
    %v3677 = vpop.f32.mrf.mxu0
    %v3678 = vadd.f32 0.0, %v3677
    %v3679 = vpop.f32.mrf.mxu0
    %3680 = vmatprep.mubr.f32.mxu0 %v3404
    %3681 = vmatmul.mubr.f32.gmra.mxu0 %v3403
    %v3682 = vpop.f32.mrf.mxu0
    %v3683 = vadd.f32 0.0, %v3682
    %v3684 = vpop.f32.mrf.mxu0
    %3685 = vmatprep.mubr.f32.mxu0 %v3407
    %3686 = vmatmul.mubr.f32.gmra.mxu0 %v3406
    %v3687 = vpop.f32.mrf.mxu0
    %v3688 = vadd.f32 0.0, %v3687
    %v3689 = vpop.f32.mrf.mxu0
    %3690 = vmatprep.mubr.f32.mxu0 %v3410
    %3691 = vmatmul.mubr.f32.gmra.mxu0 %v3409
    %v3692 = vpop.f32.mrf.mxu0
    %v3693 = vadd.f32 0.0, %v3692
    %v3694 = vpop.f32.mrf.mxu0
    %3695 = vdwg.mxu0
    %3696 = vmatprep.subr.mxu0 0.0
    %3697 = vmatpush1.msra.mxu0 0.0
    %3698 = vmatprep.subr.mxu0 0.0
    %3699 = vmatpush1.msra.mxu0 0.0
    %3700 = vmatprep.subr.mxu0 0.0
    %3701 = vmatpush1.msra.mxu0 0.0
    %3702 = vmatprep.subr.mxu0 0.0
    %3703 = vmatpush1.msra.mxu0 0.0
    %3704 = vmatprep.subr.mxu0 0.0
    %3705 = vmatpush1.msra.mxu0 0.0
    %3706 = vmatprep.subr.mxu0 0.0
    %3707 = vmatpush1.msra.mxu0 0.0
    %3708 = vmatprep.subr.mxu0 0.0
    %3709 = vmatpush1.msra.mxu0 %v2392
    %3710 = vmatprep.subr.mxu0 0.0
    %3711 = vmatpush1.msra.mxu0 %v2391
    %3712 = vmatprep.subr.mxu0 0.0
    %3713 = vmatpush1.msra.mxu0 %v2390
    %3714 = vmatprep.subr.mxu0 0.0
    %3715 = vmatpush1.msra.mxu0 %v2389
    %3716 = vmatprep.subr.mxu0 0.0
    %3717 = vmatpush1.msra.mxu0 %v2388
    %3718 = vmatprep.subr.mxu0 0.0
    %3719 = vmatpush1.msra.mxu0 %v2387
    %3720 = vmatprep.subr.mxu0 0.0
    %3721 = vmatpush1.msra.mxu0 %v2386
    %3722 = vmatprep.subr.mxu0 0.0
    %3723 = vmatpush1.msra.mxu0 %v2385
    %3724 = vmatprep.subr.mxu0 0.0
    %3725 = vmatpush1.msra.mxu0 %v2384
    %3726 = vmatprep.subr.mxu0 0.0
    %3727 = vmatpush1.msra.mxu0 %v2383
    %3728 = vmatprep.subr.mxu0 0.0
    %3729 = vmatpush2.msra.mxu0 0.0
    %3730 = vmatprep.subr.mxu0 0.0
    %3731 = vmatpush2.msra.mxu0 0.0
    %3732 = vmatprep.subr.mxu0 0.0
    %3733 = vmatpush2.msra.mxu0 0.0
    %3734 = vmatprep.subr.mxu0 0.0
    %3735 = vmatpush2.msra.mxu0 0.0
    %3736 = vmatprep.subr.mxu0 0.0
    %3737 = vmatpush2.msra.mxu0 0.0
    %3738 = vmatprep.subr.mxu0 0.0
    %3739 = vmatpush2.msra.mxu0 0.0
    %3740 = vmatprep.subr.mxu0 0.0
    %3741 = vmatpush2.msra.mxu0 0.0
    %3742 = vmatprep.subr.mxu0 0.0
    %3743 = vmatpush2.msra.mxu0 0.0
    %3744 = vmatprep.subr.mxu0 0.0
    %3745 = vmatpush2.msra.mxu0 0.0
    %3746 = vmatprep.subr.mxu0 0.0
    %3747 = vmatpush2.msra.mxu0 0.0
    %3748 = vmatprep.subr.mxu0 0.0
    %3749 = vmatpush2.msra.mxu0 0.0
    %3750 = vmatprep.subr.mxu0 0.0
    %3751 = vmatpush2.msra.mxu0 0.0
    %3752 = vmatprep.subr.mxu0 0.0
    %3753 = vmatpush2.msra.mxu0 0.0
    %3754 = vmatprep.subr.mxu0 0.0
    %3755 = vmatpush2.msra.mxu0 0.0
    %3756 = vmatprep.subr.mxu0 0.0
    %3757 = vmatpush2.msra.mxu0 0.0
    %3758 = vmatprep.subr.mxu0 0.0
    %3759 = vmatpush2.msra.mxu0 0.0
    %3760 = vmatprep.mubr.f32.mxu0 0.0
    %3761 = vmatmul.mubr.f32.gmra.mxu0 %v3600
    %v3762 = vpop.f32.mrf.mxu0
    %v3763 = vadd.f32 %v3678, %v3762
    %v3764 = vpop.f32.mrf.mxu0
    %3765 = vmatprep.mubr.f32.mxu0 0.0
    %3766 = vmatmul.mubr.f32.gmra.mxu0 %v3603
    %v3767 = vpop.f32.mrf.mxu0
    %v3768 = vadd.f32 %v3683, %v3767
    %v3769 = vpop.f32.mrf.mxu0
    %3770 = vmatprep.mubr.f32.mxu0 0.0
    %3771 = vmatmul.mubr.f32.gmra.mxu0 %v3606
    %v3772 = vpop.f32.mrf.mxu0
    %v3773 = vadd.f32 %v3688, %v3772
    %v3774 = vpop.f32.mrf.mxu0
    %3775 = vmatprep.mubr.f32.mxu0 0.0
    %3776 = vmatmul.mubr.f32.gmra.mxu0 %v3609
    %v3777 = vpop.f32.mrf.mxu0
    %v3778 = vadd.f32 %v3693, %v3777
    %v3779 = vpop.f32.mrf.mxu0
    %3780 = vdwg.mxu0
    %v3781 = vmax.f32 %v3581, %v3763
    %v3782 = vmax.f32 %v3586, %v3768
    %v3783 = vmax.f32 %v3591, %v3773
    %v3784 = vmax.f32 %v3596, %v3778
    %3785 = vmatprep.subr.mxu0 0.0
    %3786 = vmatpush1.msra.mxu0 %v2888
    %3787 = vmatprep.subr.mxu0 0.0
    %3788 = vmatpush1.msra.mxu0 %v2887
    %3789 = vmatprep.subr.mxu0 0.0
    %3790 = vmatpush1.msra.mxu0 %v2378
    %3791 = vmatprep.subr.mxu0 0.0
    %3792 = vmatpush1.msra.mxu0 %v2377
    %3793 = vmatprep.subr.mxu0 0.0
    %3794 = vmatpush1.msra.mxu0 %v2376
    %3795 = vmatprep.subr.mxu0 0.0
    %3796 = vmatpush1.msra.mxu0 %v2375
    %3797 = vmatprep.subr.mxu0 0.0
    %3798 = vmatpush1.msra.mxu0 %v2374
    %3799 = vmatprep.subr.mxu0 0.0
    %3800 = vmatpush1.msra.mxu0 %v2373
    %3801 = vmatprep.subr.mxu0 0.0
    %3802 = vmatpush1.msra.mxu0 %v2372
    %3803 = vmatprep.subr.mxu0 0.0
    %3804 = vmatpush1.msra.mxu0 %v2399
    %3805 = vmatprep.subr.mxu0 0.0
    %3806 = vmatpush1.msra.mxu0 %v2398
    %3807 = vmatprep.subr.mxu0 0.0
    %3808 = vmatpush1.msra.mxu0 %v2397
    %3809 = vmatprep.subr.mxu0 0.0
    %3810 = vmatpush1.msra.mxu0 %v2396
    %3811 = vmatprep.subr.mxu0 0.0
    %3812 = vmatpush1.msra.mxu0 %v2395
    %3813 = vmatprep.subr.mxu0 0.0
    %3814 = vmatpush1.msra.mxu0 %v2394
    %3815 = vmatprep.subr.mxu0 0.0
    %3816 = vmatpush1.msra.mxu0 %v2393
    %3817 = vmatprep.subr.mxu0 0.0
    %3818 = vmatpush2.msra.mxu0 %v3384
    %3819 = vmatprep.subr.mxu0 0.0
    %3820 = vmatpush2.msra.mxu0 %v3383
    %3821 = vmatprep.subr.mxu0 0.0
    %3822 = vmatpush2.msra.mxu0 %v3382
    %3823 = vmatprep.subr.mxu0 0.0
    %3824 = vmatpush2.msra.mxu0 %v3381
    %3825 = vmatprep.subr.mxu0 0.0
    %3826 = vmatpush2.msra.mxu0 %v2872
    %3827 = vmatprep.subr.mxu0 0.0
    %3828 = vmatpush2.msra.mxu0 %v2871
    %3829 = vmatprep.subr.mxu0 0.0
    %3830 = vmatpush2.msra.mxu0 %v2870
    %3831 = vmatprep.subr.mxu0 0.0
    %3832 = vmatpush2.msra.mxu0 %v2869
    %3833 = vmatprep.subr.mxu0 0.0
    %3834 = vmatpush2.msra.mxu0 %v2868
    %3835 = vmatprep.subr.mxu0 0.0
    %3836 = vmatpush2.msra.mxu0 %v2867
    %3837 = vmatprep.subr.mxu0 0.0
    %3838 = vmatpush2.msra.mxu0 %v2866
    %3839 = vmatprep.subr.mxu0 0.0
    %3840 = vmatpush2.msra.mxu0 %v2893
    %3841 = vmatprep.subr.mxu0 0.0
    %3842 = vmatpush2.msra.mxu0 %v2892
    %3843 = vmatprep.subr.mxu0 0.0
    %3844 = vmatpush2.msra.mxu0 %v2891
    %3845 = vmatprep.subr.mxu0 0.0
    %3846 = vmatpush2.msra.mxu0 %v2890
    %3847 = vmatprep.subr.mxu0 0.0
    %3848 = vmatpush2.msra.mxu0 %v2889
    %3849 = vmatprep.mubr.f32.mxu0 %v3389
    %3850 = vmatmul.mubr.f32.gmra.mxu0 %v3388
    %v3851 = vpop.f32.mrf.mxu0
    %v3852 = vadd.f32 0.0, %v3851
    %v3853 = vpop.f32.mrf.mxu0
    %3854 = vmatprep.mubr.f32.mxu0 %v3392
    %3855 = vmatmul.mubr.f32.gmra.mxu0 %v3391
    %v3856 = vpop.f32.mrf.mxu0
    %v3857 = vadd.f32 0.0, %v3856
    %v3858 = vpop.f32.mrf.mxu0
    %3859 = vmatprep.mubr.f32.mxu0 %v3395
    %3860 = vmatmul.mubr.f32.gmra.mxu0 %v3394
    %v3861 = vpop.f32.mrf.mxu0
    %v3862 = vadd.f32 0.0, %v3861
    %v3863 = vpop.f32.mrf.mxu0
    %3864 = vmatprep.mubr.f32.mxu0 %v3398
    %3865 = vmatmul.mubr.f32.gmra.mxu0 %v3397
    %v3866 = vpop.f32.mrf.mxu0
    %v3867 = vadd.f32 0.0, %v3866
    %v3868 = vpop.f32.mrf.mxu0
    %3869 = vdwg.mxu0
    %3870 = vmatprep.subr.mxu0 0.0
    %3871 = vmatpush1.msra.mxu0 0.0
    %3872 = vmatprep.subr.mxu0 0.0
    %3873 = vmatpush1.msra.mxu0 0.0
    %3874 = vmatprep.subr.mxu0 0.0
    %3875 = vmatpush1.msra.mxu0 0.0
    %3876 = vmatprep.subr.mxu0 0.0
    %3877 = vmatpush1.msra.mxu0 0.0
    %3878 = vmatprep.subr.mxu0 0.0
    %3879 = vmatpush1.msra.mxu0 0.0
    %3880 = vmatprep.subr.mxu0 0.0
    %3881 = vmatpush1.msra.mxu0 0.0
    %3882 = vmatprep.subr.mxu0 0.0
    %3883 = vmatpush1.msra.mxu0 %v3366
    %3884 = vmatprep.subr.mxu0 0.0
    %3885 = vmatpush1.msra.mxu0 %v3365
    %3886 = vmatprep.subr.mxu0 0.0
    %3887 = vmatpush1.msra.mxu0 %v3364
    %3888 = vmatprep.subr.mxu0 0.0
    %3889 = vmatpush1.msra.mxu0 %v3363
    %3890 = vmatprep.subr.mxu0 0.0
    %3891 = vmatpush1.msra.mxu0 %v3362
    %3892 = vmatprep.subr.mxu0 0.0
    %3893 = vmatpush1.msra.mxu0 %v3361
    %3894 = vmatprep.subr.mxu0 0.0
    %3895 = vmatpush1.msra.mxu0 %v3360
    %3896 = vmatprep.subr.mxu0 0.0
    %3897 = vmatpush1.msra.mxu0 %v3387
    %3898 = vmatprep.subr.mxu0 0.0
    %3899 = vmatpush1.msra.mxu0 %v3386
    %3900 = vmatprep.subr.mxu0 0.0
    %3901 = vmatpush1.msra.mxu0 %v3385
    %3902 = vmatprep.subr.mxu0 0.0
    %3903 = vmatpush2.msra.mxu0 0.0
    %3904 = vmatprep.subr.mxu0 0.0
    %3905 = vmatpush2.msra.mxu0 0.0
    %3906 = vmatprep.subr.mxu0 0.0
    %3907 = vmatpush2.msra.mxu0 0.0
    %3908 = vmatprep.subr.mxu0 0.0
    %3909 = vmatpush2.msra.mxu0 0.0
    %3910 = vmatprep.subr.mxu0 0.0
    %3911 = vmatpush2.msra.mxu0 0.0
    %3912 = vmatprep.subr.mxu0 0.0
    %3913 = vmatpush2.msra.mxu0 0.0
    %3914 = vmatprep.subr.mxu0 0.0
    %3915 = vmatpush2.msra.mxu0 0.0
    %3916 = vmatprep.subr.mxu0 0.0
    %3917 = vmatpush2.msra.mxu0 0.0
    %3918 = vmatprep.subr.mxu0 0.0
    %3919 = vmatpush2.msra.mxu0 0.0
    %3920 = vmatprep.subr.mxu0 0.0
    %3921 = vmatpush2.msra.mxu0 0.0
    %3922 = vmatprep.subr.mxu0 0.0
    %3923 = vmatpush2.msra.mxu0 0.0
    %3924 = vmatprep.subr.mxu0 0.0
    %3925 = vmatpush2.msra.mxu0 0.0
    %3926 = vmatprep.subr.mxu0 0.0
    %3927 = vmatpush2.msra.mxu0 0.0
    %3928 = vmatprep.subr.mxu0 0.0
    %3929 = vmatpush2.msra.mxu0 0.0
    %3930 = vmatprep.subr.mxu0 0.0
    %3931 = vmatpush2.msra.mxu0 0.0
    %3932 = vmatprep.subr.mxu0 0.0
    %3933 = vmatpush2.msra.mxu0 0.0
    %3934 = vmatprep.mubr.f32.mxu0 0.0
    %3935 = vmatmul.mubr.f32.gmra.mxu0 %v3418
    %v3936 = vpop.f32.mrf.mxu0
    %v3937 = vadd.f32 %v3852, %v3936
    %v3938 = vpop.f32.mrf.mxu0
    %3939 = vmatprep.mubr.f32.mxu0 0.0
    %3940 = vmatmul.mubr.f32.gmra.mxu0 %v3421
    %v3941 = vpop.f32.mrf.mxu0
    %v3942 = vadd.f32 %v3857, %v3941
    %v3943 = vpop.f32.mrf.mxu0
    %3944 = vmatprep.mubr.f32.mxu0 0.0
    %3945 = vmatmul.mubr.f32.gmra.mxu0 %v3424
    %v3946 = vpop.f32.mrf.mxu0
    %v3947 = vadd.f32 %v3862, %v3946
    %v3948 = vpop.f32.mrf.mxu0
    %3949 = vmatprep.mubr.f32.mxu0 0.0
    %3950 = vmatmul.mubr.f32.gmra.mxu0 %v3427
    %v3951 = vpop.f32.mrf.mxu0
    %v3952 = vadd.f32 %v3867, %v3951
    %v3953 = vpop.f32.mrf.mxu0
    %3954 = vdwg.mxu0
    %v3955 = vmax.f32 %v3781, %v3937
    %v3956 = vmax.f32 %v3782, %v3942
    %v3957 = vmax.f32 %v3783, %v3947
    %v3958 = vmax.f32 %v3784, %v3952
    %3959 = vmatprep.subr.mxu0 0.0
    %3960 = vmatpush1.msra.mxu0 %v2874
    %3961 = vmatprep.subr.mxu0 0.0
    %3962 = vmatpush1.msra.mxu0 %v2873
    %3963 = vmatprep.subr.mxu0 0.0
    %3964 = vmatpush1.msra.mxu0 %v2392
    %3965 = vmatprep.subr.mxu0 0.0
    %3966 = vmatpush1.msra.mxu0 %v2391
    %3967 = vmatprep.subr.mxu0 0.0
    %3968 = vmatpush1.msra.mxu0 %v2390
    %3969 = vmatprep.subr.mxu0 0.0
    %3970 = vmatpush1.msra.mxu0 %v2389
    %3971 = vmatprep.subr.mxu0 0.0
    %3972 = vmatpush1.msra.mxu0 %v2388
    %3973 = vmatprep.subr.mxu0 0.0
    %3974 = vmatpush1.msra.mxu0 %v2387
    %3975 = vmatprep.subr.mxu0 0.0
    %3976 = vmatpush1.msra.mxu0 %v2386
    %3977 = vmatprep.subr.mxu0 0.0
    %3978 = vmatpush1.msra.mxu0 %v2385
    %3979 = vmatprep.subr.mxu0 0.0
    %3980 = vmatpush1.msra.mxu0 %v2384
    %3981 = vmatprep.subr.mxu0 0.0
    %3982 = vmatpush1.msra.mxu0 %v2383
    %3983 = vmatprep.subr.mxu0 0.0
    %3984 = vmatpush1.msra.mxu0 %v2382
    %3985 = vmatprep.subr.mxu0 0.0
    %3986 = vmatpush1.msra.mxu0 %v2381
    %3987 = vmatprep.subr.mxu0 0.0
    %3988 = vmatpush1.msra.mxu0 %v2380
    %3989 = vmatprep.subr.mxu0 0.0
    %3990 = vmatpush1.msra.mxu0 %v2379
    %3991 = vmatprep.subr.mxu0 0.0
    %3992 = vmatpush2.msra.mxu0 %v3370
    %3993 = vmatprep.subr.mxu0 0.0
    %3994 = vmatpush2.msra.mxu0 %v3369
    %3995 = vmatprep.subr.mxu0 0.0
    %3996 = vmatpush2.msra.mxu0 %v3368
    %3997 = vmatprep.subr.mxu0 0.0
    %3998 = vmatpush2.msra.mxu0 %v3367
    %3999 = vmatprep.subr.mxu0 0.0
    %4000 = vmatpush2.msra.mxu0 %v2886
    %4001 = vmatprep.subr.mxu0 0.0
    %4002 = vmatpush2.msra.mxu0 %v2885
    %4003 = vmatprep.subr.mxu0 0.0
    %4004 = vmatpush2.msra.mxu0 %v2884
    %4005 = vmatprep.subr.mxu0 0.0
    %4006 = vmatpush2.msra.mxu0 %v2883
    %4007 = vmatprep.subr.mxu0 0.0
    %4008 = vmatpush2.msra.mxu0 %v2882
    %4009 = vmatprep.subr.mxu0 0.0
    %4010 = vmatpush2.msra.mxu0 %v2881
    %4011 = vmatprep.subr.mxu0 0.0
    %4012 = vmatpush2.msra.mxu0 %v2880
    %4013 = vmatprep.subr.mxu0 0.0
    %4014 = vmatpush2.msra.mxu0 %v2879
    %4015 = vmatprep.subr.mxu0 0.0
    %4016 = vmatpush2.msra.mxu0 %v2878
    %4017 = vmatprep.subr.mxu0 0.0
    %4018 = vmatpush2.msra.mxu0 %v2877
    %4019 = vmatprep.subr.mxu0 0.0
    %4020 = vmatpush2.msra.mxu0 %v2876
    %4021 = vmatprep.subr.mxu0 0.0
    %4022 = vmatpush2.msra.mxu0 %v2875
    %4023 = vmatprep.mubr.f32.mxu0 %v3401
    %4024 = vmatmul.mubr.f32.gmra.mxu0 %v3400
    %v4025 = vpop.f32.mrf.mxu0
    %v4026 = vadd.f32 0.0, %v4025
    %v4027 = vpop.f32.mrf.mxu0
    %4028 = vmatprep.mubr.f32.mxu0 %v3404
    %4029 = vmatmul.mubr.f32.gmra.mxu0 %v3403
    %v4030 = vpop.f32.mrf.mxu0
    %v4031 = vadd.f32 0.0, %v4030
    %v4032 = vpop.f32.mrf.mxu0
    %4033 = vmatprep.mubr.f32.mxu0 %v3407
    %4034 = vmatmul.mubr.f32.gmra.mxu0 %v3406
    %v4035 = vpop.f32.mrf.mxu0
    %v4036 = vadd.f32 0.0, %v4035
    %v4037 = vpop.f32.mrf.mxu0
    %4038 = vmatprep.mubr.f32.mxu0 %v3410
    %4039 = vmatmul.mubr.f32.gmra.mxu0 %v3409
    %v4040 = vpop.f32.mrf.mxu0
    %v4041 = vadd.f32 0.0, %v4040
    %v4042 = vpop.f32.mrf.mxu0
    %4043 = vdwg.mxu0
    %4044 = vmatprep.subr.mxu0 0.0
    %4045 = vmatpush1.msra.mxu0 0.0
    %4046 = vmatprep.subr.mxu0 0.0
    %4047 = vmatpush1.msra.mxu0 0.0
    %4048 = vmatprep.subr.mxu0 0.0
    %4049 = vmatpush1.msra.mxu0 0.0
    %4050 = vmatprep.subr.mxu0 0.0
    %4051 = vmatpush1.msra.mxu0 0.0
    %4052 = vmatprep.subr.mxu0 0.0
    %4053 = vmatpush1.msra.mxu0 0.0
    %4054 = vmatprep.subr.mxu0 0.0
    %4055 = vmatpush1.msra.mxu0 0.0
    %4056 = vmatprep.subr.mxu0 0.0
    %4057 = vmatpush1.msra.mxu0 %v3380
    %4058 = vmatprep.subr.mxu0 0.0
    %4059 = vmatpush1.msra.mxu0 %v3379
    %4060 = vmatprep.subr.mxu0 0.0
    %4061 = vmatpush1.msra.mxu0 %v3378
    %4062 = vmatprep.subr.mxu0 0.0
    %4063 = vmatpush1.msra.mxu0 %v3377
    %4064 = vmatprep.subr.mxu0 0.0
    %4065 = vmatpush1.msra.mxu0 %v3376
    %4066 = vmatprep.subr.mxu0 0.0
    %4067 = vmatpush1.msra.mxu0 %v3375
    %4068 = vmatprep.subr.mxu0 0.0
    %4069 = vmatpush1.msra.mxu0 %v3374
    %4070 = vmatprep.subr.mxu0 0.0
    %4071 = vmatpush1.msra.mxu0 %v3373
    %4072 = vmatprep.subr.mxu0 0.0
    %4073 = vmatpush1.msra.mxu0 %v3372
    %4074 = vmatprep.subr.mxu0 0.0
    %4075 = vmatpush1.msra.mxu0 %v3371
    %4076 = vmatprep.subr.mxu0 0.0
    %4077 = vmatpush2.msra.mxu0 0.0
    %4078 = vmatprep.subr.mxu0 0.0
    %4079 = vmatpush2.msra.mxu0 0.0
    %4080 = vmatprep.subr.mxu0 0.0
    %4081 = vmatpush2.msra.mxu0 0.0
    %4082 = vmatprep.subr.mxu0 0.0
    %4083 = vmatpush2.msra.mxu0 0.0
    %4084 = vmatprep.subr.mxu0 0.0
    %4085 = vmatpush2.msra.mxu0 0.0
    %4086 = vmatprep.subr.mxu0 0.0
    %4087 = vmatpush2.msra.mxu0 0.0
    %4088 = vmatprep.subr.mxu0 0.0
    %4089 = vmatpush2.msra.mxu0 0.0
    %4090 = vmatprep.subr.mxu0 0.0
    %4091 = vmatpush2.msra.mxu0 0.0
    %4092 = vmatprep.subr.mxu0 0.0
    %4093 = vmatpush2.msra.mxu0 0.0
    %4094 = vmatprep.subr.mxu0 0.0
    %4095 = vmatpush2.msra.mxu0 0.0
    %4096 = vmatprep.subr.mxu0 0.0
    %4097 = vmatpush2.msra.mxu0 0.0
    %4098 = vmatprep.subr.mxu0 0.0
    %4099 = vmatpush2.msra.mxu0 0.0
    %4100 = vmatprep.subr.mxu0 0.0
    %4101 = vmatpush2.msra.mxu0 0.0
    %4102 = vmatprep.subr.mxu0 0.0
    %4103 = vmatpush2.msra.mxu0 0.0
    %4104 = vmatprep.subr.mxu0 0.0
    %4105 = vmatpush2.msra.mxu0 0.0
    %4106 = vmatprep.subr.mxu0 0.0
    %4107 = vmatpush2.msra.mxu0 0.0
    %4108 = vmatprep.mubr.f32.mxu0 0.0
    %4109 = vmatmul.mubr.f32.gmra.mxu0 %v3600
    %v4110 = vpop.f32.mrf.mxu0
    %v4111 = vadd.f32 %v4026, %v4110
    %v4112 = vpop.f32.mrf.mxu0
    %4113 = vmatprep.mubr.f32.mxu0 0.0
    %4114 = vmatmul.mubr.f32.gmra.mxu0 %v3603
    %v4115 = vpop.f32.mrf.mxu0
    %v4116 = vadd.f32 %v4031, %v4115
    %v4117 = vpop.f32.mrf.mxu0
    %4118 = vmatprep.mubr.f32.mxu0 0.0
    %4119 = vmatmul.mubr.f32.gmra.mxu0 %v3606
    %v4120 = vpop.f32.mrf.mxu0
    %v4121 = vadd.f32 %v4036, %v4120
    %v4122 = vpop.f32.mrf.mxu0
    %4123 = vmatprep.mubr.f32.mxu0 0.0
    %4124 = vmatmul.mubr.f32.gmra.mxu0 %v3609
    %v4125 = vpop.f32.mrf.mxu0
    %v4126 = vadd.f32 %v4041, %v4125
    %v4127 = vpop.f32.mrf.mxu0
    %4128 = vdwg.mxu0
    %v4129 = vmax.f32 %v3955, %v4111
    %v4130 = vmax.f32 %v3956, %v4116
    %v4131 = vmax.f32 %v3957, %v4121
    %v4132 = vmax.f32 %v3958, %v4126
    %4134 = vset.pattern.permute.xlu0 0
    %4135 = vperm.xlu0 %4134, %v3412
    %v4136 = vpop.permute.xlu0 %4135
    %4139 = vset.pattern.permute.xlu0 0
    %4140 = vperm.xlu0 %4139, %v3413
    %v4141 = vpop.permute.xlu0 %4140
    %4144 = vset.pattern.permute.xlu0 0
    %4145 = vperm.xlu0 %4144, %v3414
    %v4146 = vpop.permute.xlu0 %4145
    %4149 = vset.pattern.permute.xlu0 0
    %4150 = vperm.xlu0 %4149, %v3415
    %v4151 = vpop.permute.xlu0 %4150
    %v4153 = vadd.f32 %v4129, %v4136
    %v4154 = vadd.f32 %v4130, %v4141
    %v4155 = vadd.f32 %v4131, %v4146
    %v4156 = vadd.f32 %v4132, %v4151
    %v4157 = vmax.f32 %v4153, 0.0
    %v4158 = vmax.f32 %v4154, 0.0
    %v4159 = vmax.f32 %v4155, 0.0
    %v4160 = vmax.f32 %v4156, 0.0
    %v4161 = vld [vmem:[%s7] sm:$0xff]
    %v4162 = vld [vmem:[%s7 + $0x8] sm:$0x7f]
    %v4163 = vld [vmem:[%s8] sm:$0xff]
    %v4164 = vld [vmem:[%s8 + $0x8] sm:$0x7f]
    %v4165 = vld [vmem:[%s14] sm:$0xff]
    %v4166 = vld [vmem:[%s14 + $0x8] sm:$0xff]
    %v4167 = vld [vmem:[%s14 + $0x10] sm:$0xff]
    %v4168 = vld [vmem:[%s14 + $0x18] sm:$0xff]
    %v4169 = vld [vmem:[%s14 + $0x20] sm:$0xff]
    %v4170 = vld [vmem:[%s14 + $0x28] sm:$0xff]
    %v4171 = vld [vmem:[%s14 + $0x30] sm:$0x3]
    %vm4172 = vcmask 408576
    %v4174 = vsel %vm4172, %v4163, 0
    %v4177 = vsel %vm4172, %v4164, 0
    %vm4179 = vcmask 1041408
    %v4181 = vsel %vm4179, %v4171, 0
    %4183 = vmatprep.subr.mxu0 0.0
    %4184 = vmatpush1.msra.mxu0 0.0
    %4185 = vmatprep.subr.mxu0 0.0
    %4186 = vmatpush1.msra.mxu0 0.0
    %4187 = vmatprep.subr.mxu0 0.0
    %4188 = vmatpush1.msra.mxu0 0.0
    %4189 = vmatprep.subr.mxu0 0.0
    %4190 = vmatpush1.msra.mxu0 0.0
    %4191 = vmatprep.subr.mxu0 0.0
    %4192 = vmatpush1.msra.mxu0 0.0
    %4193 = vmatprep.subr.mxu0 0.0
    %4194 = vmatpush1.msra.mxu0 0.0
    %4195 = vmatprep.subr.mxu0 0.0
    %4196 = vmatpush1.msra.mxu0 0.0
    %4197 = vmatprep.subr.mxu0 0.0
    %4198 = vmatpush1.msra.mxu0 0.0
    %4199 = vmatprep.subr.mxu0 0.0
    %4200 = vmatpush1.msra.mxu0 0.0
    %4201 = vmatprep.subr.mxu0 0.0
    %4202 = vmatpush1.msra.mxu0 %v4181
    %4203 = vmatprep.subr.mxu0 0.0
    %4204 = vmatpush1.msra.mxu0 %v4170
    %4205 = vmatprep.subr.mxu0 0.0
    %4206 = vmatpush1.msra.mxu0 %v4169
    %4207 = vmatprep.subr.mxu0 0.0
    %4208 = vmatpush1.msra.mxu0 %v4168
    %4209 = vmatprep.subr.mxu0 0.0
    %4210 = vmatpush1.msra.mxu0 %v4167
    %4211 = vmatprep.subr.mxu0 0.0
    %4212 = vmatpush1.msra.mxu0 %v4166
    %4213 = vmatprep.subr.mxu0 0.0
    %4214 = vmatpush1.msra.mxu0 %v4165
    %4215 = vmatprep.subr.mxu0 0.0
    %4216 = vmatpush2.msra.mxu0 0.0
    %4217 = vmatprep.subr.mxu0 0.0
    %4218 = vmatpush2.msra.mxu0 0.0
    %4219 = vmatprep.subr.mxu0 0.0
    %4220 = vmatpush2.msra.mxu0 0.0
    %4221 = vmatprep.subr.mxu0 0.0
    %4222 = vmatpush2.msra.mxu0 0.0
    %4223 = vmatprep.subr.mxu0 0.0
    %4224 = vmatpush2.msra.mxu0 0.0
    %4225 = vmatprep.subr.mxu0 0.0
    %4226 = vmatpush2.msra.mxu0 0.0
    %4227 = vmatprep.subr.mxu0 0.0
    %4228 = vmatpush2.msra.mxu0 0.0
    %4229 = vmatprep.subr.mxu0 0.0
    %4230 = vmatpush2.msra.mxu0 0.0
    %4231 = vmatprep.subr.mxu0 0.0
    %4232 = vmatpush2.msra.mxu0 0.0
    %4233 = vmatprep.subr.mxu0 0.0
    %4234 = vmatpush2.msra.mxu0 0.0
    %4235 = vmatprep.subr.mxu0 0.0
    %4236 = vmatpush2.msra.mxu0 0.0
    %4237 = vmatprep.subr.mxu0 0.0
    %4238 = vmatpush2.msra.mxu0 0.0
    %4239 = vmatprep.subr.mxu0 0.0
    %4240 = vmatpush2.msra.mxu0 0.0
    %4241 = vmatprep.subr.mxu0 0.0
    %4242 = vmatpush2.msra.mxu0 0.0
    %4243 = vmatprep.subr.mxu0 0.0
    %4244 = vmatpush2.msra.mxu0 0.0
    %4245 = vmatprep.subr.mxu0 0.0
    %4246 = vmatpush2.msra.mxu0 0.0
    %4247 = vmatprep.mubr.f32.mxu0 0.0
    %4248 = vmatmul.mubr.f32.gmra.mxu0 %v4174
    %v4249 = vpop.f32.mrf.mxu0
    %v4250 = vadd.f32 0.0, %v4249
    %v4251 = vpop.f32.mrf.mxu0
    %4252 = vmatprep.mubr.f32.mxu0 0.0
    %4253 = vmatmul.mubr.f32.gmra.mxu0 %v4177
    %v4254 = vpop.f32.mrf.mxu0
    %v4255 = vadd.f32 0.0, %v4254
    %v4256 = vpop.f32.mrf.mxu0
    %4257 = vdwg.mxu0
    %vm4258 = vcmask 228352
    %v4260 = vsel %vm4258, %v4161, 0
    %v4263 = vsel %vm4258, %v4162, 0
    %vm4265 = vcmask 1043456
    %v4267 = vsel %vm4265, %v4160, 0
    %4269 = vmatprep.subr.mxu0 0.0
    %4270 = vmatpush1.msra.mxu0 0.0
    %4271 = vmatprep.subr.mxu0 0.0
    %4272 = vmatpush1.msra.mxu0 0.0
    %4273 = vmatprep.subr.mxu0 0.0
    %4274 = vmatpush1.msra.mxu0 0.0
    %4275 = vmatprep.subr.mxu0 0.0
    %4276 = vmatpush1.msra.mxu0 0.0
    %4277 = vmatprep.subr.mxu0 0.0
    %4278 = vmatpush1.msra.mxu0 0.0
    %4279 = vmatprep.subr.mxu0 0.0
    %4280 = vmatpush1.msra.mxu0 0.0
    %4281 = vmatprep.subr.mxu0 0.0
    %4282 = vmatpush1.msra.mxu0 0.0
    %4283 = vmatprep.subr.mxu0 0.0
    %4284 = vmatpush1.msra.mxu0 0.0
    %4285 = vmatprep.subr.mxu0 0.0
    %4286 = vmatpush1.msra.mxu0 0.0
    %4287 = vmatprep.subr.mxu0 0.0
    %4288 = vmatpush1.msra.mxu0 0.0
    %4289 = vmatprep.subr.mxu0 0.0
    %4290 = vmatpush1.msra.mxu0 0.0
    %4291 = vmatprep.subr.mxu0 0.0
    %4292 = vmatpush1.msra.mxu0 0.0
    %4293 = vmatprep.subr.mxu0 0.0
    %4294 = vmatpush1.msra.mxu0 %v4267
    %4295 = vmatprep.subr.mxu0 0.0
    %4296 = vmatpush1.msra.mxu0 %v4159
    %4297 = vmatprep.subr.mxu0 0.0
    %4298 = vmatpush1.msra.mxu0 %v4158
    %4299 = vmatprep.subr.mxu0 0.0
    %4300 = vmatpush1.msra.mxu0 %v4157
    %4301 = vmatprep.subr.mxu0 0.0
    %4302 = vmatpush2.msra.mxu0 0.0
    %4303 = vmatprep.subr.mxu0 0.0
    %4304 = vmatpush2.msra.mxu0 0.0
    %4305 = vmatprep.subr.mxu0 0.0
    %4306 = vmatpush2.msra.mxu0 0.0
    %4307 = vmatprep.subr.mxu0 0.0
    %4308 = vmatpush2.msra.mxu0 0.0
    %4309 = vmatprep.subr.mxu0 0.0
    %4310 = vmatpush2.msra.mxu0 0.0
    %4311 = vmatprep.subr.mxu0 0.0
    %4312 = vmatpush2.msra.mxu0 0.0
    %4313 = vmatprep.subr.mxu0 0.0
    %4314 = vmatpush2.msra.mxu0 0.0
    %4315 = vmatprep.subr.mxu0 0.0
    %4316 = vmatpush2.msra.mxu0 0.0
    %4317 = vmatprep.subr.mxu0 0.0
    %4318 = vmatpush2.msra.mxu0 0.0
    %4319 = vmatprep.subr.mxu0 0.0
    %4320 = vmatpush2.msra.mxu0 0.0
    %4321 = vmatprep.subr.mxu0 0.0
    %4322 = vmatpush2.msra.mxu0 0.0
    %4323 = vmatprep.subr.mxu0 0.0
    %4324 = vmatpush2.msra.mxu0 0.0
    %4325 = vmatprep.subr.mxu0 0.0
    %4326 = vmatpush2.msra.mxu0 0.0
    %4327 = vmatprep.subr.mxu0 0.0
    %4328 = vmatpush2.msra.mxu0 0.0
    %4329 = vmatprep.subr.mxu0 0.0
    %4330 = vmatpush2.msra.mxu0 0.0
    %4331 = vmatprep.subr.mxu0 0.0
    %4332 = vmatpush2.msra.mxu0 0.0
    %4333 = vmatprep.mubr.f32.mxu0 0.0
    %4334 = vmatmul.mubr.f32.gmra.mxu0 %v4260
    %v4335 = vpop.f32.mrf.mxu0
    %v4336 = vadd.f32 %v4250, %v4335
    %v4337 = vpop.f32.mrf.mxu0
    %4338 = vmatprep.mubr.f32.mxu0 0.0
    %4339 = vmatmul.mubr.f32.gmra.mxu0 %v4263
    %v4340 = vpop.f32.mrf.mxu0
    %v4341 = vadd.f32 %v4255, %v4340
    %v4342 = vpop.f32.mrf.mxu0
    %4343 = vdwg.mxu0
    %v4344 = vld [vmem:[%s9] sm:$0xff]
    %v4345 = vld [vmem:[%s9 + $0x8] sm:$0x7f]
    %4347 = vset.pattern.permute.xlu0 0
    %4348 = vperm.xlu0 %4347, %v4344
    %v4349 = vpop.permute.xlu0 %4348
    %4352 = vset.pattern.permute.xlu0 0
    %4353 = vperm.xlu0 %4352, %v4345
    %v4354 = vpop.permute.xlu0 %4353
    %v4356 = vadd.f32 %v4336, %v4349
    %v4357 = vadd.f32 %v4341, %v4354
    %v4358 = vmax.f32 %v4356, 0.0
    %v4359 = vmax.f32 %v4357, 0.0
    %v4360 = vld [vmem:[%s10] sm:$0xff]
    %v4361 = vld [vmem:[%s10 + $0x8] sm:$0xff]
    %v4362 = vld [vmem:[%s10 + $0x10] sm:$0xf]
    %v4363 = vld [vmem:[%s11] sm:$0xff]
    %v4364 = vld [vmem:[%s11 + $0x8] sm:$0xff]
    %v4365 = vld [vmem:[%s11 + $0x10] sm:$0xf]
    %4367 = vset.pattern.permute.xlu0 0
    %4368 = vperm.xlu0 %4367, %v4363
    %v4369 = vpop.permute.xlu0 %4368
    %4372 = vset.pattern.permute.xlu0 0
    %4373 = vperm.xlu0 %4372, %v4364
    %v4374 = vpop.permute.xlu0 %4373
    %4377 = vset.pattern.permute.xlu0 0
    %4378 = vperm.xlu0 %4377, %v4365
    %v4379 = vpop.permute.xlu0 %4378
    %vm4381 = vcmask 121856
    %v4383 = vsel %vm4381, %v4360, 0
    %v4386 = vsel %vm4381, %v4361, 0
    %v4389 = vsel %vm4381, %v4362, 0
    %vm4391 = vcmask 1046528
    %v4393 = vsel %vm4391, %v4359, 0
    %4395 = vmatprep.subr.mxu0 0.0
    %4396 = vmatpush1.msra.mxu0 0.0
    %4397 = vmatprep.subr.mxu0 0.0
    %4398 = vmatpush1.msra.mxu0 0.0
    %4399 = vmatprep.subr.mxu0 0.0
    %4400 = vmatpush1.msra.mxu0 0.0
    %4401 = vmatprep.subr.mxu0 0.0
    %4402 = vmatpush1.msra.mxu0 0.0
    %4403 = vmatprep.subr.mxu0 0.0
    %4404 = vmatpush1.msra.mxu0 0.0
    %4405 = vmatprep.subr.mxu0 0.0
    %4406 = vmatpush1.msra.mxu0 0.0
    %4407 = vmatprep.subr.mxu0 0.0
    %4408 = vmatpush1.msra.mxu0 0.0
    %4409 = vmatprep.subr.mxu0 0.0
    %4410 = vmatpush1.msra.mxu0 0.0
    %4411 = vmatprep.subr.mxu0 0.0
    %4412 = vmatpush1.msra.mxu0 0.0
    %4413 = vmatprep.subr.mxu0 0.0
    %4414 = vmatpush1.msra.mxu0 0.0
    %4415 = vmatprep.subr.mxu0 0.0
    %4416 = vmatpush1.msra.mxu0 0.0
    %4417 = vmatprep.subr.mxu0 0.0
    %4418 = vmatpush1.msra.mxu0 0.0
    %4419 = vmatprep.subr.mxu0 0.0
    %4420 = vmatpush1.msra.mxu0 0.0
    %4421 = vmatprep.subr.mxu0 0.0
    %4422 = vmatpush1.msra.mxu0 0.0
    %4423 = vmatprep.subr.mxu0 0.0
    %4424 = vmatpush1.msra.mxu0 %v4393
    %4425 = vmatprep.subr.mxu0 0.0
    %4426 = vmatpush1.msra.mxu0 %v4358
    %4427 = vmatprep.subr.mxu0 0.0
    %4428 = vmatpush2.msra.mxu0 0.0
    %4429 = vmatprep.subr.mxu0 0.0
    %4430 = vmatpush2.msra.mxu0 0.0
    %4431 = vmatprep.subr.mxu0 0.0
    %4432 = vmatpush2.msra.mxu0 0.0
    %4433 = vmatprep.subr.mxu0 0.0
    %4434 = vmatpush2.msra.mxu0 0.0
    %4435 = vmatprep.subr.mxu0 0.0
    %4436 = vmatpush2.msra.mxu0 0.0
    %4437 = vmatprep.subr.mxu0 0.0
    %4438 = vmatpush2.msra.mxu0 0.0
    %4439 = vmatprep.subr.mxu0 0.0
    %4440 = vmatpush2.msra.mxu0 0.0
    %4441 = vmatprep.subr.mxu0 0.0
    %4442 = vmatpush2.msra.mxu0 0.0
    %4443 = vmatprep.subr.mxu0 0.0
    %4444 = vmatpush2.msra.mxu0 0.0
    %4445 = vmatprep.subr.mxu0 0.0
    %4446 = vmatpush2.msra.mxu0 0.0
    %4447 = vmatprep.subr.mxu0 0.0
    %4448 = vmatpush2.msra.mxu0 0.0
    %4449 = vmatprep.subr.mxu0 0.0
    %4450 = vmatpush2.msra.mxu0 0.0
    %4451 = vmatprep.subr.mxu0 0.0
    %4452 = vmatpush2.msra.mxu0 0.0
    %4453 = vmatprep.subr.mxu0 0.0
    %4454 = vmatpush2.msra.mxu0 0.0
    %4455 = vmatprep.subr.mxu0 0.0
    %4456 = vmatpush2.msra.mxu0 0.0
    %4457 = vmatprep.subr.mxu0 0.0
    %4458 = vmatpush2.msra.mxu0 0.0
    %4459 = vmatprep.mubr.f32.mxu0 0.0
    %4460 = vmatmul.mubr.f32.gmra.mxu0 %v4383
    %v4461 = vpop.f32.mrf.mxu0
    %v4462 = vadd.f32 %v4369, %v4461
    %v4463 = vpop.f32.mrf.mxu0
    %4464 = vmatprep.mubr.f32.mxu0 0.0
    %4465 = vmatmul.mubr.f32.gmra.mxu0 %v4386
    %v4466 = vpop.f32.mrf.mxu0
    %v4467 = vadd.f32 %v4374, %v4466
    %v4468 = vpop.f32.mrf.mxu0
    %4469 = vmatprep.mubr.f32.mxu0 0.0
    %4470 = vmatmul.mubr.f32.gmra.mxu0 %v4389
    %v4471 = vpop.f32.mrf.mxu0
    %v4472 = vadd.f32 %v4379, %v4471
    %v4473 = vpop.f32.mrf.mxu0
    %4474 = vdwg.mxu0
    %v4475 = vmax.f32 %v4462, 0.0
    %v4476 = vmax.f32 %v4467, 0.0
    %v4477 = vmax.f32 %v4472, 0.0
    %v4478 = vld [vmem:[%s12] sm:$0xff]
    %v4479 = vld [vmem:[%s12 + $0x8] sm:$0xff]
    %v4480 = vld [vmem:[%s12 + $0x10] sm:$0xf]
    %4482 = vset.pattern.permute.xlu0 0
    %4483 = vperm.xlu0 %4482, %v4478
    %v4484 = vpop.permute.xlu0 %4483
    %4487 = vset.pattern.permute.xlu0 0
    %4488 = vperm.xlu0 %4487, %v4479
    %v4489 = vpop.permute.xlu0 %4488
    %4492 = vset.pattern.permute.xlu0 0
    %4493 = vperm.xlu0 %4492, %v4480
    %v4494 = vpop.permute.xlu0 %4493
    %v4496 = vmul.f32 %v4475, %v4484
    %v4497 = vmul.f32 %v4476, %v4489
    %v4498 = vmul.f32 %v4477, %v4494
    %v4499 = vadd.f32 %v4496, %v4497
    %v4500 = vsel %vm4265, %v4498, 0.0
    %v4501 = vadd.f32 %v4499, %v4500
    %v4502 = vrot.slane %v4501, 4
    %v4503 = vadd.f32 %v4501, %v4502
    %v4504 = vrot.slane %v4503, 2
    %v4505 = vadd.f32 %v4503, %v4504
    %v4506 = vrot.slane %v4505, 1
    %v4507 = vadd.f32 %v4505, %v4506
    %v4508 = vld [vmem:[#allocation2] sm:$0x1]
    %4510 = vset.pattern.permute.xlu0 0
    %4511 = vperm.xlu0 %4510, %v4508
    %v4512 = vpop.permute.xlu0 %4511
    %v4514 = vlaneseq
    %v4515 = vshrl.u32 %v4514, 7
    %v4516 = vsub.s32 0, %v4515
    %v4517 = vrot.slane %v4512, %v4516
    %v4518 = vadd.f32 %v4507, %v4517
    %v4519 = vxor.u32 %v4518, 2147483648
    %v4520 = vmul.f32 %v4519, 1.442695
    %v4521 = vpow.pop %v4520
    %v4522 = vadd.f32 %v4521, 1.0
    %v4523 = vrcp.pop %v4522
    %v4524 = vmul.f32 1.0, %v4523
    %4525 = vst [vmem:[#allocation3] sm:$0x1] %v4524
    // Predicated region
    $region62: #{tpu_custom_call.1} parent=1 // pred_check
      _
    $region63: #{tpu_custom_call.1} parent=1 // pred_check_branch
      %4527 = sbr.rel (0) target = $region65
    $region64: #{tpu_custom_call.1} parent=1 // pred_region
      %s4529 = ssub.s32 16, 16
      %4530 = vsyncadd [#allocation4], %s4529
      %s4532 = sshll.u32 [#allocation3], 4
      %s4533 = int_to_ptr.vmem [resolvable:$true] %s4532
      %4535 = dma.vmem_to_hbm [thread:$0]  %s4533, 16, %s15, [#allocation4]
    $region65: #{tpu_custom_call.1} parent=1 // pred_fallthru
      _
    // Predicated region
    $region66: #{tpu_custom_call.1} parent=1 // pred_check
      _
    $region67: #{tpu_custom_call.1} parent=1 // pred_check_branch
      %4537 = sbr.rel (0) target = $region69
    $region68: #{tpu_custom_call.1} parent=1 // pred_region
      %4538 = dma.done [#allocation4], 16
    $region69: #{tpu_custom_call.1} parent=1 // pred_fallthru
      _
    %4539 = vsyncpa [#allocation4], 1

</llo_original>
